<compile_context>
chip_gen: v6e
topology: v6e:2x2x1
jax: 0.10.0
libtpu: 0.0.40
codegen_flags: <defaults>
</compile_context>

<pallas_src>
import math

import jax
import jax.numpy as jnp
from jax.experimental import pallas as pl
from jax.experimental.pallas import tpu as pltpu  # noqa: F401  (TPU backend)


# ----------------------------------------------------------------------------
# Model configuration
# ----------------------------------------------------------------------------
B = 2           # batch
N_STIM = 2      # number of stimuli (forward asserts == 2)
S_DIM = 32      # stimulus feature dim
T = 8           # token sequence length
VOCAB = 50
D_MODEL = 32
N_HEAD = 2
D_HEAD = D_MODEL // N_HEAD
D_FFN = 64
VIS_DIM = 16
CTX_DIM = 16
CLS_HID = 32
FUSED_DIM = VIS_DIM + CTX_DIM + D_MODEL
LN_EPS = 1e-5


# ----------------------------------------------------------------------------
# Fused forward kernel (everything in VMEM, single launch)
# ----------------------------------------------------------------------------
def _layernorm(x, g, b, eps=LN_EPS):
    mean = jnp.mean(x, axis=-1, keepdims=True)
    xc = x - mean
    var = jnp.mean(xc * xc, axis=-1, keepdims=True)
    return xc * jax.lax.rsqrt(var + eps) * g + b


def _fused_forward_kernel(
    x_ref,          # (B*T, D_MODEL)  embedded tokens, batch-major rows (b*T + t)
    stim_ref,       # (N_STIM, B, S_DIM)
    stim_w1_ref, stim_b1_ref, stim_w2_ref, stim_b2_ref,
    ctx_w_ref, ctx_b_ref,
    wqkv_ref, bqkv_ref, wo_ref, bo_ref,
    ln1_g_ref, ln1_b_ref,
    ffn_w1_ref, ffn_b1_ref, ffn_w2_ref, ffn_b2_ref,
    ln2_g_ref, ln2_b_ref,
    cls_w1_ref, cls_b1_ref, cls_w2_ref, cls_b2_ref,
    o_ref,          # (B, N_STIM)
):
    f32 = jnp.float32

    # ---------------- stimulus + context encoders ----------------
    vis = []   # vis[i]: (B, VIS_DIM)
    ctx = []   # ctx[i]: (B, CTX_DIM)
    for i in range(N_STIM):
        s = stim_ref[i]                                              # (B, S_DIM)
        h = jnp.dot(s, stim_w1_ref[...], preferred_element_type=f32) + stim_b1_ref[...]
        h = jnp.maximum(h, 0.0)
        v = jnp.dot(h, stim_w2_ref[...], preferred_element_type=f32) + stim_b2_ref[...]
        c = jnp.dot(v, ctx_w_ref[...], preferred_element_type=f32) + ctx_b_ref[...]
        c = jnp.maximum(c, 0.0)
        vis.append(v)
        ctx.append(c)

    # ---------------- transformer encoder layer (post-norm) ----------------
    x = x_ref[...]                                                   # (B*T, D)
    # fused QKV projection: one (B*T, D) @ (D, 3D) matmul
    qkv = jnp.dot(x, wqkv_ref[...], preferred_element_type=f32) + bqkv_ref[...]

    wo = wo_ref[...]
    scale = 1.0 / math.sqrt(D_HEAD)
    attn_blocks = []
    for b in range(B):                              # static unroll (B=2)
        qkv_b = qkv[b * T:(b + 1) * T, :]           # (T, 3D) -- 8-aligned row slice
        proj_b = jnp.zeros((T, D_MODEL), f32)
        for h in range(N_HEAD):                     # static unroll (H=2)
            lo = h * D_HEAD
            hi = (h + 1) * D_HEAD
            q = qkv_b[:, lo:hi]                                      # (T, Dh)
            k = qkv_b[:, D_MODEL + lo:D_MODEL + hi]
            v = qkv_b[:, 2 * D_MODEL + lo:2 * D_MODEL + hi]
            s = jax.lax.dot_general(q, k, (((1,), (1,)), ((), ())),
                                    preferred_element_type=f32) * scale   # (T, T)
            m = jnp.max(s, axis=-1, keepdims=True)
            p = jnp.exp(s - m)
            p = p / jnp.sum(p, axis=-1, keepdims=True)
            o_h = jnp.dot(p, v, preferred_element_type=f32)          # (T, Dh)
            # output projection folded per head: concat(heads) @ wo == sum_h o_h @ wo[h]
            proj_b = proj_b + jnp.dot(o_h, wo[lo:hi, :],
                                      preferred_element_type=f32)
        attn_blocks.append(proj_b)
    attn = jnp.concatenate(attn_blocks, axis=0) + bo_ref[...]        # (B*T, D)

    h1 = _layernorm(x + attn, ln1_g_ref[...], ln1_b_ref[...])
    ff = jnp.dot(h1, ffn_w1_ref[...], preferred_element_type=f32) + ffn_b1_ref[...]
    ff = jnp.maximum(ff, 0.0)
    ff = jnp.dot(ff, ffn_w2_ref[...], preferred_element_type=f32) + ffn_b2_ref[...]
    h2 = _layernorm(h1 + ff, ln2_g_ref[...], ln2_b_ref[...])         # (B*T, D)

    # max over time per batch (== lang_feat.max(0)[0])
    lang = jnp.concatenate(
        [jnp.max(h2[b * T:(b + 1) * T, :], axis=0, keepdims=True) for b in range(B)],
        axis=0)                                                       # (B, D)

    # ---------------- classifier head, both stimuli ----------------
    # cat([vf, cf, lang]) @ W1 realized as partial matmuls on row-slices of W1
    w1 = cls_w1_ref[...]
    w1_vf = w1[0:VIS_DIM, :]
    w1_cf = w1[VIS_DIM:VIS_DIM + CTX_DIM, :]
    w1_lg = w1[VIS_DIM + CTX_DIM:FUSED_DIM, :]
    lang_part = jnp.dot(lang, w1_lg, preferred_element_type=f32)      # shared (B, CLS_HID)
    b1 = cls_b1_ref[...]
    w2 = cls_w2_ref[...]
    b2 = cls_b2_ref[...]

    ctx_swapped = [ctx[1], ctx[0]]                  # context of the *other* stimulus
    for i in range(N_STIM):
        hcls = (jnp.dot(vis[i], w1_vf, preferred_element_type=f32)
                + jnp.dot(ctx_swapped[i], w1_cf, preferred_element_type=f32)
                + lang_part + b1)
        hcls = jnp.maximum(hcls, 0.0)
        logit = jnp.dot(hcls, w2, preferred_element_type=f32) + b2    # (B, 1)
        o_ref[:, i:i + 1] = logit.astype(o_ref.dtype)


# ----------------------------------------------------------------------------
# Deterministic parameter init (same structure / values as reference impl)
# ----------------------------------------------------------------------------
def init_params(key):
    def dense(k, shape):
        return jax.random.normal(k, shape, jnp.float32) * 0.1

    keys = jax.random.split(key, 24)
    p = {
        # stimulus encoder: MLP S_DIM -> 64 -> VIS_DIM
        "stim_w1": dense(keys[0], (S_DIM, 64)), "stim_b1": jnp.zeros((64,), jnp.float32),
        "stim_w2": dense(keys[1], (64, VIS_DIM)), "stim_b2": jnp.zeros((VIS_DIM,), jnp.float32),
        # context encoder: Linear + ReLU VIS_DIM -> CTX_DIM
        "ctx_w": dense(keys[2], (VIS_DIM, CTX_DIM)), "ctx_b": jnp.zeros((CTX_DIM,), jnp.float32),
        # language encoder: embedding + 1 transformer encoder layer (post-norm)
        "emb": dense(keys[3], (VOCAB, D_MODEL)),
        "wq": dense(keys[4], (D_MODEL, D_MODEL)), "bq": jnp.zeros((D_MODEL,), jnp.float32),
        "wk": dense(keys[5], (D_MODEL, D_MODEL)), "bk": jnp.zeros((D_MODEL,), jnp.float32),
        "wv": dense(keys[6], (D_MODEL, D_MODEL)), "bv": jnp.zeros((D_MODEL,), jnp.float32),
        "wo": dense(keys[7], (D_MODEL, D_MODEL)), "bo": jnp.zeros((D_MODEL,), jnp.float32),
        "ln1_g": jnp.ones((D_MODEL,), jnp.float32), "ln1_b": jnp.zeros((D_MODEL,), jnp.float32),
        "ffn_w1": dense(keys[8], (D_MODEL, D_FFN)), "ffn_b1": jnp.zeros((D_FFN,), jnp.float32),
        "ffn_w2": dense(keys[9], (D_FFN, D_MODEL)), "ffn_b2": jnp.zeros((D_MODEL,), jnp.float32),
        "ln2_g": jnp.ones((D_MODEL,), jnp.float32), "ln2_b": jnp.zeros((D_MODEL,), jnp.float32),
        # classifier head: MLP FUSED_DIM -> CLS_HID -> 1
        "cls_w1": dense(keys[10], (FUSED_DIM, CLS_HID)), "cls_b1": jnp.zeros((CLS_HID,), jnp.float32),
        "cls_w2": dense(keys[11], (CLS_HID, 1)), "cls_b2": jnp.zeros((1,), jnp.float32),
    }
    return p


# ----------------------------------------------------------------------------
# ContextAwareListener.transformer_based_forward (single fused pallas_call)
# ----------------------------------------------------------------------------
def context_aware_listener_forward(p, tokens, stimuli):
    n_stimuli = stimuli.shape[1]
    assert n_stimuli == 2

    # embedding lookup (gather) stays as XLA glue; batch-major rows (b*T + t).
    # TODO(synk): the gather itself is not expressed in Pallas (dynamic per-row
    # indices); everything downstream runs inside the fused kernel.
    x = jnp.take(p["emb"], tokens, axis=0).reshape(B * T, D_MODEL)

    # fused QKV weight / bias (single matmul inside the kernel)
    wqkv = jnp.concatenate([p["wq"], p["wk"], p["wv"]], axis=1)      # (D, 3D)
    bqkv = jnp.concatenate([p["bq"], p["bk"], p["bv"]], axis=0)      # (3D,)

    stim = stimuli.transpose(1, 0, 2)                                # (N_STIM, B, S_DIM)

    def r2(v):                                                       # 1-D -> (1, N)
        return v.reshape(1, -1)

    operands = [
        x, stim,
        p["stim_w1"], r2(p["stim_b1"]), p["stim_w2"], r2(p["stim_b2"]),
        p["ctx_w"], r2(p["ctx_b"]),
        wqkv, r2(bqkv), p["wo"], r2(p["bo"]),
        r2(p["ln1_g"]), r2(p["ln1_b"]),
        p["ffn_w1"], r2(p["ffn_b1"]), p["ffn_w2"], r2(p["ffn_b2"]),
        r2(p["ln2_g"]), r2(p["ln2_b"]),
        p["cls_w1"], r2(p["cls_b1"]), p["cls_w2"], r2(p["cls_b2"]),
    ]

    def full_spec(a):
        if a.ndim == 3:
            return pl.BlockSpec(a.shape, lambda i: (0, 0, 0))
        return pl.BlockSpec(a.shape, lambda i: (0, 0))

    return pl.pallas_call(
        _fused_forward_kernel,
        out_shape=jax.ShapeDtypeStruct((B, N_STIM), jnp.float32),
        grid=(1,),
        in_specs=[full_spec(a) for a in operands],
        out_specs=pl.BlockSpec((B, N_STIM), lambda i: (0, 0)),
    )(*operands)


# ----------------------------------------------------------------------------
if __name__ == "__main__":
    key = jax.random.PRNGKey(0)
    k_param, k_tok, k_stim = jax.random.split(key, 3)

    params = init_params(k_param)
    tokens = jax.random.randint(k_tok, (B, T), 0, VOCAB, dtype=jnp.int32)
    stimuli = jax.random.normal(k_stim, (B, N_STIM, S_DIM), dtype=jnp.float32)

    fwd = jax.jit(context_aware_listener_forward)
    out = fwd(params, tokens, stimuli)
    jax.block_until_ready(out)

    assert out.shape == (B, 2), out.shape
    assert out.dtype == jnp.float32
    assert bool(jnp.all(jnp.isfinite(out)))
    print("KERNEL_OK")
</pallas_src>

<mosaic_0001>
module attributes {stable_mosaic.version = 11 : i64} {
  func.func @_fused_forward_kernel(%arg0: i32, %arg1: memref<16x32xf32, #tpu.memory_space<vmem>>, %arg2: memref<2x2x32xf32, #tpu.memory_space<vmem>>, %arg3: memref<32x64xf32, #tpu.memory_space<vmem>>, %arg4: memref<1x64xf32, #tpu.memory_space<vmem>>, %arg5: memref<64x16xf32, #tpu.memory_space<vmem>>, %arg6: memref<1x16xf32, #tpu.memory_space<vmem>>, %arg7: memref<16x16xf32, #tpu.memory_space<vmem>>, %arg8: memref<1x16xf32, #tpu.memory_space<vmem>>, %arg9: memref<32x96xf32, #tpu.memory_space<vmem>>, %arg10: memref<1x96xf32, #tpu.memory_space<vmem>>, %arg11: memref<32x32xf32, #tpu.memory_space<vmem>>, %arg12: memref<1x32xf32, #tpu.memory_space<vmem>>, %arg13: memref<1x32xf32, #tpu.memory_space<vmem>>, %arg14: memref<1x32xf32, #tpu.memory_space<vmem>>, %arg15: memref<32x64xf32, #tpu.memory_space<vmem>>, %arg16: memref<1x64xf32, #tpu.memory_space<vmem>>, %arg17: memref<64x32xf32, #tpu.memory_space<vmem>>, %arg18: memref<1x32xf32, #tpu.memory_space<vmem>>, %arg19: memref<1x32xf32, #tpu.memory_space<vmem>>, %arg20: memref<1x32xf32, #tpu.memory_space<vmem>>, %arg21: memref<64x32xf32, #tpu.memory_space<vmem>>, %arg22: memref<1x32xf32, #tpu.memory_space<vmem>>, %arg23: memref<32x1xf32, #tpu.memory_space<vmem>>, %arg24: memref<1x1xf32, #tpu.memory_space<vmem>>, %arg25: memref<2x2xf32, #tpu.memory_space<vmem>>) attributes {dimension_semantics = [#tpu.dimension_semantics<arbitrary>], iteration_bounds = array<i64: 1>, scalar_prefetch = 0 : i64, scratch_operands = 0 : i64, tpu.core_type = #tpu.core_type<tc>, window_params = [{pipeline_mode = #tpu.pipeline_mode<synchronous>, transform_indices = @transform_0, window_bounds = array<i64: 16, 32>}, {pipeline_mode = #tpu.pipeline_mode<synchronous>, transform_indices = @transform_1, window_bounds = array<i64: 2, 2, 32>}, {pipeline_mode = #tpu.pipeline_mode<synchronous>, transform_indices = @transform_2, window_bounds = array<i64: 32, 64>}, {pipeline_mode = #tpu.pipeline_mode<synchronous>, transform_indices = @transform_3, window_bounds = array<i64: 1, 64>}, {pipeline_mode = #tpu.pipeline_mode<synchronous>, transform_indices = @transform_4, window_bounds = array<i64: 64, 16>}, {pipeline_mode = #tpu.pipeline_mode<synchronous>, transform_indices = @transform_5, window_bounds = array<i64: 1, 16>}, {pipeline_mode = #tpu.pipeline_mode<synchronous>, transform_indices = @transform_6, window_bounds = array<i64: 16, 16>}, {pipeline_mode = #tpu.pipeline_mode<synchronous>, transform_indices = @transform_7, window_bounds = array<i64: 1, 16>}, {pipeline_mode = #tpu.pipeline_mode<synchronous>, transform_indices = @transform_8, window_bounds = array<i64: 32, 96>}, {pipeline_mode = #tpu.pipeline_mode<synchronous>, transform_indices = @transform_9, window_bounds = array<i64: 1, 96>}, {pipeline_mode = #tpu.pipeline_mode<synchronous>, transform_indices = @transform_10, window_bounds = array<i64: 32, 32>}, {pipeline_mode = #tpu.pipeline_mode<synchronous>, transform_indices = @transform_11, window_bounds = array<i64: 1, 32>}, {pipeline_mode = #tpu.pipeline_mode<synchronous>, transform_indices = @transform_12, window_bounds = array<i64: 1, 32>}, {pipeline_mode = #tpu.pipeline_mode<synchronous>, transform_indices = @transform_13, window_bounds = array<i64: 1, 32>}, {pipeline_mode = #tpu.pipeline_mode<synchronous>, transform_indices = @transform_14, window_bounds = array<i64: 32, 64>}, {pipeline_mode = #tpu.pipeline_mode<synchronous>, transform_indices = @transform_15, window_bounds = array<i64: 1, 64>}, {pipeline_mode = #tpu.pipeline_mode<synchronous>, transform_indices = @transform_16, window_bounds = array<i64: 64, 32>}, {pipeline_mode = #tpu.pipeline_mode<synchronous>, transform_indices = @transform_17, window_bounds = array<i64: 1, 32>}, {pipeline_mode = #tpu.pipeline_mode<synchronous>, transform_indices = @transform_18, window_bounds = array<i64: 1, 32>}, {pipeline_mode = #tpu.pipeline_mode<synchronous>, transform_indices = @transform_19, window_bounds = array<i64: 1, 32>}, {pipeline_mode = #tpu.pipeline_mode<synchronous>, transform_indices = @transform_20, window_bounds = array<i64: 64, 32>}, {pipeline_mode = #tpu.pipeline_mode<synchronous>, transform_indices = @transform_21, window_bounds = array<i64: 1, 32>}, {pipeline_mode = #tpu.pipeline_mode<synchronous>, transform_indices = @transform_22, window_bounds = array<i64: 32, 1>}, {pipeline_mode = #tpu.pipeline_mode<synchronous>, transform_indices = @transform_23, window_bounds = array<i64: 1, 1>}, {pipeline_mode = #tpu.pipeline_mode<synchronous>, transform_indices = @transform_24, window_bounds = array<i64: 2, 2>}]} {
    %c0 = arith.constant 0 : index
    %c0_0 = arith.constant 0 : index
    %c0_1 = arith.constant 0 : index
    %0 = vector.load %arg2[%c0, %c0_0, %c0_1] : memref<2x2x32xf32, #tpu.memory_space<vmem>>, vector<1x2x32xf32>
    %1 = vector.shape_cast %0 : vector<1x2x32xf32> to vector<2x32xf32>
    %c0_2 = arith.constant 0 : index
    %c0_3 = arith.constant 0 : index
    %2 = vector.load %arg3[%c0_2, %c0_3] : memref<32x64xf32, #tpu.memory_space<vmem>>, vector<32x64xf32>
    %cst = arith.constant dense<0.000000e+00> : vector<2x64xf32>
    %3 = tpu.matmul %1, %2, %cst {dimension_numbers = #tpu.dot_dimension_numbers<[1], [0], [0], [1], [0, 0, 1, 1], [], []>} : vector<2x32xf32>, vector<32x64xf32>, vector<2x64xf32> -> vector<2x64xf32>
    %c0_4 = arith.constant 0 : index
    %c0_5 = arith.constant 0 : index
    %4 = vector.load %arg4[%c0_4, %c0_5] : memref<1x64xf32, #tpu.memory_space<vmem>>, vector<1x64xf32>
    %5 = vector.broadcast %4 : vector<1x64xf32> to vector<2x64xf32>
    %6 = arith.addf %3, %5 : vector<2x64xf32>
    %cst_6 = arith.constant 0.000000e+00 : f32
    %7 = vector.broadcast %cst_6 : f32 to vector<2x64xf32>
    %8 = arith.maximumf %6, %7 : vector<2x64xf32>
    %c0_7 = arith.constant 0 : index
    %c0_8 = arith.constant 0 : index
    %9 = vector.load %arg5[%c0_7, %c0_8] : memref<64x16xf32, #tpu.memory_space<vmem>>, vector<64x16xf32>
    %cst_9 = arith.constant dense<0.000000e+00> : vector<2x16xf32>
    %10 = tpu.matmul %8, %9, %cst_9 {dimension_numbers = #tpu.dot_dimension_numbers<[1], [0], [0], [1], [0, 0, 1, 1], [], []>} : vector<2x64xf32>, vector<64x16xf32>, vector<2x16xf32> -> vector<2x16xf32>
    %c0_10 = arith.constant 0 : index
    %c0_11 = arith.constant 0 : index
    %11 = vector.load %arg6[%c0_10, %c0_11] : memref<1x16xf32, #tpu.memory_space<vmem>>, vector<1x16xf32>
    %12 = vector.broadcast %11 : vector<1x16xf32> to vector<2x16xf32>
    %13 = arith.addf %10, %12 : vector<2x16xf32>
    %c0_12 = arith.constant 0 : index
    %c0_13 = arith.constant 0 : index
    %14 = vector.load %arg7[%c0_12, %c0_13] : memref<16x16xf32, #tpu.memory_space<vmem>>, vector<16x16xf32>
    %cst_14 = arith.constant dense<0.000000e+00> : vector<2x16xf32>
    %15 = tpu.matmul %13, %14, %cst_14 {dimension_numbers = #tpu.dot_dimension_numbers<[1], [0], [0], [1], [0, 0, 1, 1], [], []>} : vector<2x16xf32>, vector<16x16xf32>, vector<2x16xf32> -> vector<2x16xf32>
    %c0_15 = arith.constant 0 : index
    %c0_16 = arith.constant 0 : index
    %16 = vector.load %arg8[%c0_15, %c0_16] : memref<1x16xf32, #tpu.memory_space<vmem>>, vector<1x16xf32>
    %17 = vector.broadcast %16 : vector<1x16xf32> to vector<2x16xf32>
    %18 = arith.addf %15, %17 : vector<2x16xf32>
    %cst_17 = arith.constant 0.000000e+00 : f32
    %19 = vector.broadcast %cst_17 : f32 to vector<2x16xf32>
    %20 = arith.maximumf %18, %19 : vector<2x16xf32>
    %c1 = arith.constant 1 : index
    %c0_18 = arith.constant 0 : index
    %c0_19 = arith.constant 0 : index
    %21 = vector.load %arg2[%c1, %c0_18, %c0_19] : memref<2x2x32xf32, #tpu.memory_space<vmem>>, vector<1x2x32xf32>
    %22 = vector.shape_cast %21 : vector<1x2x32xf32> to vector<2x32xf32>
    %c0_20 = arith.constant 0 : index
    %c0_21 = arith.constant 0 : index
    %23 = vector.load %arg3[%c0_20, %c0_21] : memref<32x64xf32, #tpu.memory_space<vmem>>, vector<32x64xf32>
    %cst_22 = arith.constant dense<0.000000e+00> : vector<2x64xf32>
    %24 = tpu.matmul %22, %23, %cst_22 {dimension_numbers = #tpu.dot_dimension_numbers<[1], [0], [0], [1], [0, 0, 1, 1], [], []>} : vector<2x32xf32>, vector<32x64xf32>, vector<2x64xf32> -> vector<2x64xf32>
    %c0_23 = arith.constant 0 : index
    %c0_24 = arith.constant 0 : index
    %25 = vector.load %arg4[%c0_23, %c0_24] : memref<1x64xf32, #tpu.memory_space<vmem>>, vector<1x64xf32>
    %26 = vector.broadcast %25 : vector<1x64xf32> to vector<2x64xf32>
    %27 = arith.addf %24, %26 : vector<2x64xf32>
    %cst_25 = arith.constant 0.000000e+00 : f32
    %28 = vector.broadcast %cst_25 : f32 to vector<2x64xf32>
    %29 = arith.maximumf %27, %28 : vector<2x64xf32>
    %c0_26 = arith.constant 0 : index
    %c0_27 = arith.constant 0 : index
    %30 = vector.load %arg5[%c0_26, %c0_27] : memref<64x16xf32, #tpu.memory_space<vmem>>, vector<64x16xf32>
    %cst_28 = arith.constant dense<0.000000e+00> : vector<2x16xf32>
    %31 = tpu.matmul %29, %30, %cst_28 {dimension_numbers = #tpu.dot_dimension_numbers<[1], [0], [0], [1], [0, 0, 1, 1], [], []>} : vector<2x64xf32>, vector<64x16xf32>, vector<2x16xf32> -> vector<2x16xf32>
    %c0_29 = arith.constant 0 : index
    %c0_30 = arith.constant 0 : index
    %32 = vector.load %arg6[%c0_29, %c0_30] : memref<1x16xf32, #tpu.memory_space<vmem>>, vector<1x16xf32>
    %33 = vector.broadcast %32 : vector<1x16xf32> to vector<2x16xf32>
    %34 = arith.addf %31, %33 : vector<2x16xf32>
    %c0_31 = arith.constant 0 : index
    %c0_32 = arith.constant 0 : index
    %35 = vector.load %arg7[%c0_31, %c0_32] : memref<16x16xf32, #tpu.memory_space<vmem>>, vector<16x16xf32>
    %cst_33 = arith.constant dense<0.000000e+00> : vector<2x16xf32>
    %36 = tpu.matmul %34, %35, %cst_33 {dimension_numbers = #tpu.dot_dimension_numbers<[1], [0], [0], [1], [0, 0, 1, 1], [], []>} : vector<2x16xf32>, vector<16x16xf32>, vector<2x16xf32> -> vector<2x16xf32>
    %c0_34 = arith.constant 0 : index
    %c0_35 = arith.constant 0 : index
    %37 = vector.load %arg8[%c0_34, %c0_35] : memref<1x16xf32, #tpu.memory_space<vmem>>, vector<1x16xf32>
    %38 = vector.broadcast %37 : vector<1x16xf32> to vector<2x16xf32>
    %39 = arith.addf %36, %38 : vector<2x16xf32>
    %cst_36 = arith.constant 0.000000e+00 : f32
    %40 = vector.broadcast %cst_36 : f32 to vector<2x16xf32>
    %41 = arith.maximumf %39, %40 : vector<2x16xf32>
    %c0_37 = arith.constant 0 : index
    %c0_38 = arith.constant 0 : index
    %42 = vector.load %arg1[%c0_37, %c0_38] : memref<16x32xf32, #tpu.memory_space<vmem>>, vector<16x32xf32>
    %c0_39 = arith.constant 0 : index
    %c0_40 = arith.constant 0 : index
    %43 = vector.load %arg9[%c0_39, %c0_40] : memref<32x96xf32, #tpu.memory_space<vmem>>, vector<32x96xf32>
    %cst_41 = arith.constant dense<0.000000e+00> : vector<16x96xf32>
    %44 = tpu.matmul %42, %43, %cst_41 {dimension_numbers = #tpu.dot_dimension_numbers<[1], [0], [0], [1], [0, 0, 1, 1], [], []>} : vector<16x32xf32>, vector<32x96xf32>, vector<16x96xf32> -> vector<16x96xf32>
    %c0_42 = arith.constant 0 : index
    %c0_43 = arith.constant 0 : index
    %45 = vector.load %arg10[%c0_42, %c0_43] : memref<1x96xf32, #tpu.memory_space<vmem>>, vector<1x96xf32>
    %46 = vector.broadcast %45 : vector<1x96xf32> to vector<16x96xf32>
    %47 = arith.addf %44, %46 : vector<16x96xf32>
    %c0_44 = arith.constant 0 : index
    %c0_45 = arith.constant 0 : index
    %48 = vector.load %arg11[%c0_44, %c0_45] : memref<32x32xf32, #tpu.memory_space<vmem>>, vector<32x32xf32>
    %49 = vector.extract_strided_slice %47 {offsets = [0, 0], sizes = [8, 96], strides = [1, 1]} : vector<16x96xf32> to vector<8x96xf32>
    %cst_46 = arith.constant 0.000000e+00 : f32
    %50 = vector.broadcast %cst_46 : f32 to vector<8x32xf32>
    %51 = vector.extract_strided_slice %49 {offsets = [0, 0], sizes = [8, 16], strides = [1, 1]} : vector<8x96xf32> to vector<8x16xf32>
    %52 = vector.extract_strided_slice %49 {offsets = [0, 32], sizes = [8, 16], strides = [1, 1]} : vector<8x96xf32> to vector<8x16xf32>
    %53 = vector.extract_strided_slice %49 {offsets = [0, 64], sizes = [8, 16], strides = [1, 1]} : vector<8x96xf32> to vector<8x16xf32>
    %cst_47 = arith.constant dense<0.000000e+00> : vector<8x8xf32>
    %54 = tpu.matmul %51, %52, %cst_47 {dimension_numbers = #tpu.dot_dimension_numbers<[1], [1], [0], [0], [0, 0, 1, 0], [], []>} : vector<8x16xf32>, vector<8x16xf32>, vector<8x8xf32> -> vector<8x8xf32>
    %cst_48 = arith.constant 2.500000e-01 : f32
    %55 = vector.broadcast %cst_48 : f32 to vector<8x8xf32>
    %56 = arith.mulf %54, %55 : vector<8x8xf32>
    %cst_49 = arith.constant dense<0xFF800000> : vector<8xf32>
    %57 = vector.multi_reduction <maximumf>, %56, %cst_49 [1] : vector<8x8xf32> to vector<8xf32>
    %58 = vector.shape_cast %57 : vector<8xf32> to vector<8x1xf32>
    %59 = vector.broadcast %58 : vector<8x1xf32> to vector<8x8xf32>
    %60 = arith.subf %56, %59 : vector<8x8xf32>
    %61 = math.exp %60 : vector<8x8xf32>
    %cst_50 = arith.constant dense<0.000000e+00> : vector<8xf32>
    %62 = vector.multi_reduction <add>, %61, %cst_50 [1] : vector<8x8xf32> to vector<8xf32>
    %63 = vector.shape_cast %62 : vector<8xf32> to vector<8x1xf32>
    %64 = vector.broadcast %63 : vector<8x1xf32> to vector<8x8xf32>
    %65 = arith.divf %61, %64 : vector<8x8xf32>
    %cst_51 = arith.constant dense<0.000000e+00> : vector<8x16xf32>
    %66 = tpu.matmul %65, %53, %cst_51 {dimension_numbers = #tpu.dot_dimension_numbers<[1], [0], [0], [1], [0, 0, 1, 1], [], []>} : vector<8x8xf32>, vector<8x16xf32>, vector<8x16xf32> -> vector<8x16xf32>
    %67 = vector.extract_strided_slice %48 {offsets = [0, 0], sizes = [16, 32], strides = [1, 1]} : vector<32x32xf32> to vector<16x32xf32>
    %cst_52 = arith.constant dense<0.000000e+00> : vector<8x32xf32>
    %68 = tpu.matmul %66, %67, %cst_52 {dimension_numbers = #tpu.dot_dimension_numbers<[1], [0], [0], [1], [0, 0, 1, 1], [], []>} : vector<8x16xf32>, vector<16x32xf32>, vector<8x32xf32> -> vector<8x32xf32>
    %69 = arith.addf %50, %68 : vector<8x32xf32>
    %70 = vector.extract_strided_slice %49 {offsets = [0, 16], sizes = [8, 16], strides = [1, 1]} : vector<8x96xf32> to vector<8x16xf32>
    %71 = vector.extract_strided_slice %49 {offsets = [0, 48], sizes = [8, 16], strides = [1, 1]} : vector<8x96xf32> to vector<8x16xf32>
    %72 = vector.extract_strided_slice %49 {offsets = [0, 80], sizes = [8, 16], strides = [1, 1]} : vector<8x96xf32> to vector<8x16xf32>
    %cst_53 = arith.constant dense<0.000000e+00> : vector<8x8xf32>
    %73 = tpu.matmul %70, %71, %cst_53 {dimension_numbers = #tpu.dot_dimension_numbers<[1], [1], [0], [0], [0, 0, 1, 0], [], []>} : vector<8x16xf32>, vector<8x16xf32>, vector<8x8xf32> -> vector<8x8xf32>
    %cst_54 = arith.constant 2.500000e-01 : f32
    %74 = vector.broadcast %cst_54 : f32 to vector<8x8xf32>
    %75 = arith.mulf %73, %74 : vector<8x8xf32>
    %cst_55 = arith.constant dense<0xFF800000> : vector<8xf32>
    %76 = vector.multi_reduction <maximumf>, %75, %cst_55 [1] : vector<8x8xf32> to vector<8xf32>
    %77 = vector.shape_cast %76 : vector<8xf32> to vector<8x1xf32>
    %78 = vector.broadcast %77 : vector<8x1xf32> to vector<8x8xf32>
    %79 = arith.subf %75, %78 : vector<8x8xf32>
    %80 = math.exp %79 : vector<8x8xf32>
    %cst_56 = arith.constant dense<0.000000e+00> : vector<8xf32>
    %81 = vector.multi_reduction <add>, %80, %cst_56 [1] : vector<8x8xf32> to vector<8xf32>
    %82 = vector.shape_cast %81 : vector<8xf32> to vector<8x1xf32>
    %83 = vector.broadcast %82 : vector<8x1xf32> to vector<8x8xf32>
    %84 = arith.divf %80, %83 : vector<8x8xf32>
    %cst_57 = arith.constant dense<0.000000e+00> : vector<8x16xf32>
    %85 = tpu.matmul %84, %72, %cst_57 {dimension_numbers = #tpu.dot_dimension_numbers<[1], [0], [0], [1], [0, 0, 1, 1], [], []>} : vector<8x8xf32>, vector<8x16xf32>, vector<8x16xf32> -> vector<8x16xf32>
    %86 = vector.extract_strided_slice %48 {offsets = [16, 0], sizes = [16, 32], strides = [1, 1]} : vector<32x32xf32> to vector<16x32xf32>
    %cst_58 = arith.constant dense<0.000000e+00> : vector<8x32xf32>
    %87 = tpu.matmul %85, %86, %cst_58 {dimension_numbers = #tpu.dot_dimension_numbers<[1], [0], [0], [1], [0, 0, 1, 1], [], []>} : vector<8x16xf32>, vector<16x32xf32>, vector<8x32xf32> -> vector<8x32xf32>
    %88 = arith.addf %69, %87 : vector<8x32xf32>
    %89 = vector.extract_strided_slice %47 {offsets = [8, 0], sizes = [8, 96], strides = [1, 1]} : vector<16x96xf32> to vector<8x96xf32>
    %cst_59 = arith.constant 0.000000e+00 : f32
    %90 = vector.broadcast %cst_59 : f32 to vector<8x32xf32>
    %91 = vector.extract_strided_slice %89 {offsets = [0, 0], sizes = [8, 16], strides = [1, 1]} : vector<8x96xf32> to vector<8x16xf32>
    %92 = vector.extract_strided_slice %89 {offsets = [0, 32], sizes = [8, 16], strides = [1, 1]} : vector<8x96xf32> to vector<8x16xf32>
    %93 = vector.extract_strided_slice %89 {offsets = [0, 64], sizes = [8, 16], strides = [1, 1]} : vector<8x96xf32> to vector<8x16xf32>
    %cst_60 = arith.constant dense<0.000000e+00> : vector<8x8xf32>
    %94 = tpu.matmul %91, %92, %cst_60 {dimension_numbers = #tpu.dot_dimension_numbers<[1], [1], [0], [0], [0, 0, 1, 0], [], []>} : vector<8x16xf32>, vector<8x16xf32>, vector<8x8xf32> -> vector<8x8xf32>
    %cst_61 = arith.constant 2.500000e-01 : f32
    %95 = vector.broadcast %cst_61 : f32 to vector<8x8xf32>
    %96 = arith.mulf %94, %95 : vector<8x8xf32>
    %cst_62 = arith.constant dense<0xFF800000> : vector<8xf32>
    %97 = vector.multi_reduction <maximumf>, %96, %cst_62 [1] : vector<8x8xf32> to vector<8xf32>
    %98 = vector.shape_cast %97 : vector<8xf32> to vector<8x1xf32>
    %99 = vector.broadcast %98 : vector<8x1xf32> to vector<8x8xf32>
    %100 = arith.subf %96, %99 : vector<8x8xf32>
    %101 = math.exp %100 : vector<8x8xf32>
    %cst_63 = arith.constant dense<0.000000e+00> : vector<8xf32>
    %102 = vector.multi_reduction <add>, %101, %cst_63 [1] : vector<8x8xf32> to vector<8xf32>
    %103 = vector.shape_cast %102 : vector<8xf32> to vector<8x1xf32>
    %104 = vector.broadcast %103 : vector<8x1xf32> to vector<8x8xf32>
    %105 = arith.divf %101, %104 : vector<8x8xf32>
    %cst_64 = arith.constant dense<0.000000e+00> : vector<8x16xf32>
    %106 = tpu.matmul %105, %93, %cst_64 {dimension_numbers = #tpu.dot_dimension_numbers<[1], [0], [0], [1], [0, 0, 1, 1], [], []>} : vector<8x8xf32>, vector<8x16xf32>, vector<8x16xf32> -> vector<8x16xf32>
    %107 = vector.extract_strided_slice %48 {offsets = [0, 0], sizes = [16, 32], strides = [1, 1]} : vector<32x32xf32> to vector<16x32xf32>
    %cst_65 = arith.constant dense<0.000000e+00> : vector<8x32xf32>
    %108 = tpu.matmul %106, %107, %cst_65 {dimension_numbers = #tpu.dot_dimension_numbers<[1], [0], [0], [1], [0, 0, 1, 1], [], []>} : vector<8x16xf32>, vector<16x32xf32>, vector<8x32xf32> -> vector<8x32xf32>
    %109 = arith.addf %90, %108 : vector<8x32xf32>
    %110 = vector.extract_strided_slice %89 {offsets = [0, 16], sizes = [8, 16], strides = [1, 1]} : vector<8x96xf32> to vector<8x16xf32>
    %111 = vector.extract_strided_slice %89 {offsets = [0, 48], sizes = [8, 16], strides = [1, 1]} : vector<8x96xf32> to vector<8x16xf32>
    %112 = vector.extract_strided_slice %89 {offsets = [0, 80], sizes = [8, 16], strides = [1, 1]} : vector<8x96xf32> to vector<8x16xf32>
    %cst_66 = arith.constant dense<0.000000e+00> : vector<8x8xf32>
    %113 = tpu.matmul %110, %111, %cst_66 {dimension_numbers = #tpu.dot_dimension_numbers<[1], [1], [0], [0], [0, 0, 1, 0], [], []>} : vector<8x16xf32>, vector<8x16xf32>, vector<8x8xf32> -> vector<8x8xf32>
    %cst_67 = arith.constant 2.500000e-01 : f32
    %114 = vector.broadcast %cst_67 : f32 to vector<8x8xf32>
    %115 = arith.mulf %113, %114 : vector<8x8xf32>
    %cst_68 = arith.constant dense<0xFF800000> : vector<8xf32>
    %116 = vector.multi_reduction <maximumf>, %115, %cst_68 [1] : vector<8x8xf32> to vector<8xf32>
    %117 = vector.shape_cast %116 : vector<8xf32> to vector<8x1xf32>
    %118 = vector.broadcast %117 : vector<8x1xf32> to vector<8x8xf32>
    %119 = arith.subf %115, %118 : vector<8x8xf32>
    %120 = math.exp %119 : vector<8x8xf32>
    %cst_69 = arith.constant dense<0.000000e+00> : vector<8xf32>
    %121 = vector.multi_reduction <add>, %120, %cst_69 [1] : vector<8x8xf32> to vector<8xf32>
    %122 = vector.shape_cast %121 : vector<8xf32> to vector<8x1xf32>
    %123 = vector.broadcast %122 : vector<8x1xf32> to vector<8x8xf32>
    %124 = arith.divf %120, %123 : vector<8x8xf32>
    %cst_70 = arith.constant dense<0.000000e+00> : vector<8x16xf32>
    %125 = tpu.matmul %124, %112, %cst_70 {dimension_numbers = #tpu.dot_dimension_numbers<[1], [0], [0], [1], [0, 0, 1, 1], [], []>} : vector<8x8xf32>, vector<8x16xf32>, vector<8x16xf32> -> vector<8x16xf32>
    %126 = vector.extract_strided_slice %48 {offsets = [16, 0], sizes = [16, 32], strides = [1, 1]} : vector<32x32xf32> to vector<16x32xf32>
    %cst_71 = arith.constant dense<0.000000e+00> : vector<8x32xf32>
    %127 = tpu.matmul %125, %126, %cst_71 {dimension_numbers = #tpu.dot_dimension_numbers<[1], [0], [0], [1], [0, 0, 1, 1], [], []>} : vector<8x16xf32>, vector<16x32xf32>, vector<8x32xf32> -> vector<8x32xf32>
    %128 = arith.addf %109, %127 : vector<8x32xf32>
    %129 = tpu.concatenate %88, %128 in 0 : vector<8x32xf32>, vector<8x32xf32> -> vector<16x32xf32>
    %c0_72 = arith.constant 0 : index
    %c0_73 = arith.constant 0 : index
    %130 = vector.load %arg12[%c0_72, %c0_73] : memref<1x32xf32, #tpu.memory_space<vmem>>, vector<1x32xf32>
    %131 = vector.broadcast %130 : vector<1x32xf32> to vector<16x32xf32>
    %132 = arith.addf %129, %131 : vector<16x32xf32>
    %133 = arith.addf %42, %132 : vector<16x32xf32>
    %c0_74 = arith.constant 0 : index
    %c0_75 = arith.constant 0 : index
    %134 = vector.load %arg13[%c0_74, %c0_75] : memref<1x32xf32, #tpu.memory_space<vmem>>, vector<1x32xf32>
    %c0_76 = arith.constant 0 : index
    %c0_77 = arith.constant 0 : index
    %135 = vector.load %arg14[%c0_76, %c0_77] : memref<1x32xf32, #tpu.memory_space<vmem>>, vector<1x32xf32>
    %cst_78 = arith.constant dense<0.000000e+00> : vector<16xf32>
    %136 = vector.multi_reduction <add>, %133, %cst_78 [1] : vector<16x32xf32> to vector<16xf32>
    %137 = vector.shape_cast %136 : vector<16xf32> to vector<16x1xf32>
    %cst_79 = arith.constant 3.200000e+01 : f32
    %138 = vector.broadcast %cst_79 : f32 to vector<16x1xf32>
    %139 = arith.divf %137, %138 : vector<16x1xf32>
    %140 = vector.broadcast %139 : vector<16x1xf32> to vector<16x32xf32>
    %141 = arith.subf %133, %140 : vector<16x32xf32>
    %142 = arith.mulf %141, %141 : vector<16x32xf32>
    %cst_80 = arith.constant dense<0.000000e+00> : vector<16xf32>
    %143 = vector.multi_reduction <add>, %142, %cst_80 [1] : vector<16x32xf32> to vector<16xf32>
    %144 = vector.shape_cast %143 : vector<16xf32> to vector<16x1xf32>
    %cst_81 = arith.constant 3.200000e+01 : f32
    %145 = vector.broadcast %cst_81 : f32 to vector<16x1xf32>
    %146 = arith.divf %144, %145 : vector<16x1xf32>
    %cst_82 = arith.constant 9.99999974E-6 : f32
    %147 = vector.broadcast %cst_82 : f32 to vector<16x1xf32>
    %148 = arith.addf %146, %147 : vector<16x1xf32>
    %149 = math.rsqrt %148 : vector<16x1xf32>
    %150 = vector.broadcast %149 : vector<16x1xf32> to vector<16x32xf32>
    %151 = arith.mulf %141, %150 : vector<16x32xf32>
    %152 = vector.broadcast %134 : vector<1x32xf32> to vector<16x32xf32>
    %153 = arith.mulf %151, %152 : vector<16x32xf32>
    %154 = vector.broadcast %135 : vector<1x32xf32> to vector<16x32xf32>
    %155 = arith.addf %153, %154 : vector<16x32xf32>
    %c0_83 = arith.constant 0 : index
    %c0_84 = arith.constant 0 : index
    %156 = vector.load %arg15[%c0_83, %c0_84] : memref<32x64xf32, #tpu.memory_space<vmem>>, vector<32x64xf32>
    %cst_85 = arith.constant dense<0.000000e+00> : vector<16x64xf32>
    %157 = tpu.matmul %155, %156, %cst_85 {dimension_numbers = #tpu.dot_dimension_numbers<[1], [0], [0], [1], [0, 0, 1, 1], [], []>} : vector<16x32xf32>, vector<32x64xf32>, vector<16x64xf32> -> vector<16x64xf32>
    %c0_86 = arith.constant 0 : index
    %c0_87 = arith.constant 0 : index
    %158 = vector.load %arg16[%c0_86, %c0_87] : memref<1x64xf32, #tpu.memory_space<vmem>>, vector<1x64xf32>
    %159 = vector.broadcast %158 : vector<1x64xf32> to vector<16x64xf32>
    %160 = arith.addf %157, %159 : vector<16x64xf32>
    %cst_88 = arith.constant 0.000000e+00 : f32
    %161 = vector.broadcast %cst_88 : f32 to vector<16x64xf32>
    %162 = arith.maximumf %160, %161 : vector<16x64xf32>
    %c0_89 = arith.constant 0 : index
    %c0_90 = arith.constant 0 : index
    %163 = vector.load %arg17[%c0_89, %c0_90] : memref<64x32xf32, #tpu.memory_space<vmem>>, vector<64x32xf32>
    %cst_91 = arith.constant dense<0.000000e+00> : vector<16x32xf32>
    %164 = tpu.matmul %162, %163, %cst_91 {dimension_numbers = #tpu.dot_dimension_numbers<[1], [0], [0], [1], [0, 0, 1, 1], [], []>} : vector<16x64xf32>, vector<64x32xf32>, vector<16x32xf32> -> vector<16x32xf32>
    %c0_92 = arith.constant 0 : index
    %c0_93 = arith.constant 0 : index
    %165 = vector.load %arg18[%c0_92, %c0_93] : memref<1x32xf32, #tpu.memory_space<vmem>>, vector<1x32xf32>
    %166 = vector.broadcast %165 : vector<1x32xf32> to vector<16x32xf32>
    %167 = arith.addf %164, %166 : vector<16x32xf32>
    %168 = arith.addf %155, %167 : vector<16x32xf32>
    %c0_94 = arith.constant 0 : index
    %c0_95 = arith.constant 0 : index
    %169 = vector.load %arg19[%c0_94, %c0_95] : memref<1x32xf32, #tpu.memory_space<vmem>>, vector<1x32xf32>
    %c0_96 = arith.constant 0 : index
    %c0_97 = arith.constant 0 : index
    %170 = vector.load %arg20[%c0_96, %c0_97] : memref<1x32xf32, #tpu.memory_space<vmem>>, vector<1x32xf32>
    %cst_98 = arith.constant dense<0.000000e+00> : vector<16xf32>
    %171 = vector.multi_reduction <add>, %168, %cst_98 [1] : vector<16x32xf32> to vector<16xf32>
    %172 = vector.shape_cast %171 : vector<16xf32> to vector<16x1xf32>
    %cst_99 = arith.constant 3.200000e+01 : f32
    %173 = vector.broadcast %cst_99 : f32 to vector<16x1xf32>
    %174 = arith.divf %172, %173 : vector<16x1xf32>
    %175 = vector.broadcast %174 : vector<16x1xf32> to vector<16x32xf32>
    %176 = arith.subf %168, %175 : vector<16x32xf32>
    %177 = arith.mulf %176, %176 : vector<16x32xf32>
    %cst_100 = arith.constant dense<0.000000e+00> : vector<16xf32>
    %178 = vector.multi_reduction <add>, %177, %cst_100 [1] : vector<16x32xf32> to vector<16xf32>
    %179 = vector.shape_cast %178 : vector<16xf32> to vector<16x1xf32>
    %cst_101 = arith.constant 3.200000e+01 : f32
    %180 = vector.broadcast %cst_101 : f32 to vector<16x1xf32>
    %181 = arith.divf %179, %180 : vector<16x1xf32>
    %cst_102 = arith.constant 9.99999974E-6 : f32
    %182 = vector.broadcast %cst_102 : f32 to vector<16x1xf32>
    %183 = arith.addf %181, %182 : vector<16x1xf32>
    %184 = math.rsqrt %183 : vector<16x1xf32>
    %185 = vector.broadcast %184 : vector<16x1xf32> to vector<16x32xf32>
    %186 = arith.mulf %176, %185 : vector<16x32xf32>
    %187 = vector.broadcast %169 : vector<1x32xf32> to vector<16x32xf32>
    %188 = arith.mulf %186, %187 : vector<16x32xf32>
    %189 = vector.broadcast %170 : vector<1x32xf32> to vector<16x32xf32>
    %190 = arith.addf %188, %189 : vector<16x32xf32>
    %191 = vector.extract_strided_slice %190 {offsets = [0, 0], sizes = [8, 32], strides = [1, 1]} : vector<16x32xf32> to vector<8x32xf32>
    %cst_103 = arith.constant dense<0xFF800000> : vector<32xf32>
    %192 = vector.multi_reduction <maximumf>, %191, %cst_103 [0] : vector<8x32xf32> to vector<32xf32>
    %193 = vector.shape_cast %192 : vector<32xf32> to vector<1x32xf32>
    %194 = vector.extract_strided_slice %190 {offsets = [8, 0], sizes = [8, 32], strides = [1, 1]} : vector<16x32xf32> to vector<8x32xf32>
    %cst_104 = arith.constant dense<0xFF800000> : vector<32xf32>
    %195 = vector.multi_reduction <maximumf>, %194, %cst_104 [0] : vector<8x32xf32> to vector<32xf32>
    %196 = vector.shape_cast %195 : vector<32xf32> to vector<1x32xf32>
    %197 = tpu.concatenate %193, %196 in 0 : vector<1x32xf32>, vector<1x32xf32> -> vector<2x32xf32>
    %c0_105 = arith.constant 0 : index
    %c0_106 = arith.constant 0 : index
    %198 = vector.load %arg21[%c0_105, %c0_106] : memref<64x32xf32, #tpu.memory_space<vmem>>, vector<64x32xf32>
    %199 = vector.extract_strided_slice %198 {offsets = [0, 0], sizes = [16, 32], strides = [1, 1]} : vector<64x32xf32> to vector<16x32xf32>
    %200 = vector.extract_strided_slice %198 {offsets = [16, 0], sizes = [16, 32], strides = [1, 1]} : vector<64x32xf32> to vector<16x32xf32>
    %201 = vector.extract_strided_slice %198 {offsets = [32, 0], sizes = [32, 32], strides = [1, 1]} : vector<64x32xf32> to vector<32x32xf32>
    %cst_107 = arith.constant dense<0.000000e+00> : vector<2x32xf32>
    %202 = tpu.matmul %197, %201, %cst_107 {dimension_numbers = #tpu.dot_dimension_numbers<[1], [0], [0], [1], [0, 0, 1, 1], [], []>} : vector<2x32xf32>, vector<32x32xf32>, vector<2x32xf32> -> vector<2x32xf32>
    %c0_108 = arith.constant 0 : index
    %c0_109 = arith.constant 0 : index
    %203 = vector.load %arg22[%c0_108, %c0_109] : memref<1x32xf32, #tpu.memory_space<vmem>>, vector<1x32xf32>
    %c0_110 = arith.constant 0 : index
    %c0_111 = arith.constant 0 : index
    %204 = vector.load %arg23[%c0_110, %c0_111] : memref<32x1xf32, #tpu.memory_space<vmem>>, vector<32x1xf32>
    %c0_112 = arith.constant 0 : index
    %c0_113 = arith.constant 0 : index
    %205 = vector.load %arg24[%c0_112, %c0_113] : memref<1x1xf32, #tpu.memory_space<vmem>>, vector<1x1xf32>
    %cst_114 = arith.constant dense<0.000000e+00> : vector<2x32xf32>
    %206 = tpu.matmul %13, %199, %cst_114 {dimension_numbers = #tpu.dot_dimension_numbers<[1], [0], [0], [1], [0, 0, 1, 1], [], []>} : vector<2x16xf32>, vector<16x32xf32>, vector<2x32xf32> -> vector<2x32xf32>
    %cst_115 = arith.constant dense<0.000000e+00> : vector<2x32xf32>
    %207 = tpu.matmul %41, %200, %cst_115 {dimension_numbers = #tpu.dot_dimension_numbers<[1], [0], [0], [1], [0, 0, 1, 1], [], []>} : vector<2x16xf32>, vector<16x32xf32>, vector<2x32xf32> -> vector<2x32xf32>
    %208 = arith.addf %206, %207 : vector<2x32xf32>
    %209 = arith.addf %208, %202 : vector<2x32xf32>
    %210 = vector.broadcast %203 : vector<1x32xf32> to vector<2x32xf32>
    %211 = arith.addf %209, %210 : vector<2x32xf32>
    %cst_116 = arith.constant 0.000000e+00 : f32
    %212 = vector.broadcast %cst_116 : f32 to vector<2x32xf32>
    %213 = arith.maximumf %211, %212 : vector<2x32xf32>
    %cst_117 = arith.constant dense<0.000000e+00> : vector<2x1xf32>
    %214 = tpu.matmul %213, %204, %cst_117 {dimension_numbers = #tpu.dot_dimension_numbers<[1], [0], [0], [1], [0, 0, 1, 1], [], []>} : vector<2x32xf32>, vector<32x1xf32>, vector<2x1xf32> -> vector<2x1xf32>
    %215 = vector.broadcast %205 : vector<1x1xf32> to vector<2x1xf32>
    %216 = arith.addf %214, %215 : vector<2x1xf32>
    %c0_118 = arith.constant 0 : index
    %c0_119 = arith.constant 0 : index
    %217 = vector.load %arg25[%c0_118, %c0_119] : memref<2x2xf32, #tpu.memory_space<vmem>>, vector<2x1xf32>
    tpu.vector_store %arg25[%c0_118, %c0_119], %216 {strides = array<i32>} : memref<2x2xf32, #tpu.memory_space<vmem>>, vector<2x1xf32>,
    %cst_120 = arith.constant dense<0.000000e+00> : vector<2x32xf32>
    %218 = tpu.matmul %34, %199, %cst_120 {dimension_numbers = #tpu.dot_dimension_numbers<[1], [0], [0], [1], [0, 0, 1, 1], [], []>} : vector<2x16xf32>, vector<16x32xf32>, vector<2x32xf32> -> vector<2x32xf32>
    %cst_121 = arith.constant dense<0.000000e+00> : vector<2x32xf32>
    %219 = tpu.matmul %20, %200, %cst_121 {dimension_numbers = #tpu.dot_dimension_numbers<[1], [0], [0], [1], [0, 0, 1, 1], [], []>} : vector<2x16xf32>, vector<16x32xf32>, vector<2x32xf32> -> vector<2x32xf32>
    %220 = arith.addf %218, %219 : vector<2x32xf32>
    %221 = arith.addf %220, %202 : vector<2x32xf32>
    %222 = vector.broadcast %203 : vector<1x32xf32> to vector<2x32xf32>
    %223 = arith.addf %221, %222 : vector<2x32xf32>
    %cst_122 = arith.constant 0.000000e+00 : f32
    %224 = vector.broadcast %cst_122 : f32 to vector<2x32xf32>
    %225 = arith.maximumf %223, %224 : vector<2x32xf32>
    %cst_123 = arith.constant dense<0.000000e+00> : vector<2x1xf32>
    %226 = tpu.matmul %225, %204, %cst_123 {dimension_numbers = #tpu.dot_dimension_numbers<[1], [0], [0], [1], [0, 0, 1, 1], [], []>} : vector<2x32xf32>, vector<32x1xf32>, vector<2x1xf32> -> vector<2x1xf32>
    %227 = vector.broadcast %205 : vector<1x1xf32> to vector<2x1xf32>
    %228 = arith.addf %226, %227 : vector<2x1xf32>
    %c0_124 = arith.constant 0 : index
    %c1_125 = arith.constant 1 : index
    %229 = vector.load %arg25[%c0_124, %c1_125] : memref<2x2xf32, #tpu.memory_space<vmem>>, vector<2x1xf32>
    tpu.vector_store %arg25[%c0_124, %c1_125], %228 {strides = array<i32>} : memref<2x2xf32, #tpu.memory_space<vmem>>, vector<2x1xf32>,
    return
  }
  func.func @transform_0(%arg0: i32) -> (i32, i32) {
    %c0_i32 = arith.constant 0 : i32
    %c0_i32_0 = arith.constant 0 : i32
    %c0_i32_1 = arith.constant 0 : i32
    return %c0_i32, %c0_i32_0 : i32, i32
  }
  func.func @transform_1(%arg0: i32) -> (i32, i32, i32) {
    %c0_i32 = arith.constant 0 : i32
    %c0_i32_0 = arith.constant 0 : i32
    %c0_i32_1 = arith.constant 0 : i32
    %c0_i32_2 = arith.constant 0 : i32
    return %c0_i32, %c0_i32_0, %c0_i32_1 : i32, i32, i32
  }
  func.func @transform_2(%arg0: i32) -> (i32, i32) {
    %c0_i32 = arith.constant 0 : i32
    %c0_i32_0 = arith.constant 0 : i32
    %c0_i32_1 = arith.constant 0 : i32
    return %c0_i32, %c0_i32_0 : i32, i32
  }
  func.func @transform_3(%arg0: i32) -> (i32, i32) {
    %c0_i32 = arith.constant 0 : i32
    %c0_i32_0 = arith.constant 0 : i32
    %c0_i32_1 = arith.constant 0 : i32
    return %c0_i32, %c0_i32_0 : i32, i32
  }
  func.func @transform_4(%arg0: i32) -> (i32, i32) {
    %c0_i32 = arith.constant 0 : i32
    %c0_i32_0 = arith.constant 0 : i32
    %c0_i32_1 = arith.constant 0 : i32
    return %c0_i32, %c0_i32_0 : i32, i32
  }
  func.func @transform_5(%arg0: i32) -> (i32, i32) {
    %c0_i32 = arith.constant 0 : i32
    %c0_i32_0 = arith.constant 0 : i32
    %c0_i32_1 = arith.constant 0 : i32
    return %c0_i32, %c0_i32_0 : i32, i32
  }
  func.func @transform_6(%arg0: i32) -> (i32, i32) {
    %c0_i32 = arith.constant 0 : i32
    %c0_i32_0 = arith.constant 0 : i32
    %c0_i32_1 = arith.constant 0 : i32
    return %c0_i32, %c0_i32_0 : i32, i32
  }
  func.func @transform_7(%arg0: i32) -> (i32, i32) {
    %c0_i32 = arith.constant 0 : i32
    %c0_i32_0 = arith.constant 0 : i32
    %c0_i32_1 = arith.constant 0 : i32
    return %c0_i32, %c0_i32_0 : i32, i32
  }
  func.func @transform_8(%arg0: i32) -> (i32, i32) {
    %c0_i32 = arith.constant 0 : i32
    %c0_i32_0 = arith.constant 0 : i32
    %c0_i32_1 = arith.constant 0 : i32
    return %c0_i32, %c0_i32_0 : i32, i32
  }
  func.func @transform_9(%arg0: i32) -> (i32, i32) {
    %c0_i32 = arith.constant 0 : i32
    %c0_i32_0 = arith.constant 0 : i32
    %c0_i32_1 = arith.constant 0 : i32
    return %c0_i32, %c0_i32_0 : i32, i32
  }
  func.func @transform_10(%arg0: i32) -> (i32, i32) {
    %c0_i32 = arith.constant 0 : i32
    %c0_i32_0 = arith.constant 0 : i32
    %c0_i32_1 = arith.constant 0 : i32
    return %c0_i32, %c0_i32_0 : i32, i32
  }
  func.func @transform_11(%arg0: i32) -> (i32, i32) {
    %c0_i32 = arith.constant 0 : i32
    %c0_i32_0 = arith.constant 0 : i32
    %c0_i32_1 = arith.constant 0 : i32
    return %c0_i32, %c0_i32_0 : i32, i32
  }
  func.func @transform_12(%arg0: i32) -> (i32, i32) {
    %c0_i32 = arith.constant 0 : i32
    %c0_i32_0 = arith.constant 0 : i32
    %c0_i32_1 = arith.constant 0 : i32
    return %c0_i32, %c0_i32_0 : i32, i32
  }
  func.func @transform_13(%arg0: i32) -> (i32, i32) {
    %c0_i32 = arith.constant 0 : i32
    %c0_i32_0 = arith.constant 0 : i32
    %c0_i32_1 = arith.constant 0 : i32
    return %c0_i32, %c0_i32_0 : i32, i32
  }
  func.func @transform_14(%arg0: i32) -> (i32, i32) {
    %c0_i32 = arith.constant 0 : i32
    %c0_i32_0 = arith.constant 0 : i32
    %c0_i32_1 = arith.constant 0 : i32
    return %c0_i32, %c0_i32_0 : i32, i32
  }
  func.func @transform_15(%arg0: i32) -> (i32, i32) {
    %c0_i32 = arith.constant 0 : i32
    %c0_i32_0 = arith.constant 0 : i32
    %c0_i32_1 = arith.constant 0 : i32
    return %c0_i32, %c0_i32_0 : i32, i32
  }
  func.func @transform_16(%arg0: i32) -> (i32, i32) {
    %c0_i32 = arith.constant 0 : i32
    %c0_i32_0 = arith.constant 0 : i32
    %c0_i32_1 = arith.constant 0 : i32
    return %c0_i32, %c0_i32_0 : i32, i32
  }
  func.func @transform_17(%arg0: i32) -> (i32, i32) {
    %c0_i32 = arith.constant 0 : i32
    %c0_i32_0 = arith.constant 0 : i32
    %c0_i32_1 = arith.constant 0 : i32
    return %c0_i32, %c0_i32_0 : i32, i32
  }
  func.func @transform_18(%arg0: i32) -> (i32, i32) {
    %c0_i32 = arith.constant 0 : i32
    %c0_i32_0 = arith.constant 0 : i32
    %c0_i32_1 = arith.constant 0 : i32
    return %c0_i32, %c0_i32_0 : i32, i32
  }
  func.func @transform_19(%arg0: i32) -> (i32, i32) {
    %c0_i32 = arith.constant 0 : i32
    %c0_i32_0 = arith.constant 0 : i32
    %c0_i32_1 = arith.constant 0 : i32
    return %c0_i32, %c0_i32_0 : i32, i32
  }
  func.func @transform_20(%arg0: i32) -> (i32, i32) {
    %c0_i32 = arith.constant 0 : i32
    %c0_i32_0 = arith.constant 0 : i32
    %c0_i32_1 = arith.constant 0 : i32
    return %c0_i32, %c0_i32_0 : i32, i32
  }
  func.func @transform_21(%arg0: i32) -> (i32, i32) {
    %c0_i32 = arith.constant 0 : i32
    %c0_i32_0 = arith.constant 0 : i32
    %c0_i32_1 = arith.constant 0 : i32
    return %c0_i32, %c0_i32_0 : i32, i32
  }
  func.func @transform_22(%arg0: i32) -> (i32, i32) {
    %c0_i32 = arith.constant 0 : i32
    %c0_i32_0 = arith.constant 0 : i32
    %c0_i32_1 = arith.constant 0 : i32
    return %c0_i32, %c0_i32_0 : i32, i32
  }
  func.func @transform_23(%arg0: i32) -> (i32, i32) {
    %c0_i32 = arith.constant 0 : i32
    %c0_i32_0 = arith.constant 0 : i32
    %c0_i32_1 = arith.constant 0 : i32
    return %c0_i32, %c0_i32_0 : i32, i32
  }
  func.func @transform_24(%arg0: i32) -> (i32, i32) {
    %c0_i32 = arith.constant 0 : i32
    %c0_i32_0 = arith.constant 0 : i32
    %c0_i32_1 = arith.constant 0 : i32
    return %c0_i32, %c0_i32_0 : i32, i32
  }
}

</mosaic_0001>

<llo_original>
// kernel: context_aware_listener_forward.1
$region0: #{context_aware_listener_forward.1}
  #allocation0 [shape = 'u32[]', space=smem, size = 0x4, offset = 0x4, fixed_abs, tag = 'smem constant byte address 0x4 - core index']
  #allocation1 [shape = 'u32[144,128]{1,0:T(1,128)}', space=vmem, size = 0x12000, scoped, tag = 'internal scratch']
  #allocation2 [shape = 'f32[1,1]{1,0:T(1,128)S(1)}', space=vmem, size = 0x200, scoped, tag = 'scoped memory for context_aware_listener_forward.1']
  %s0 = inlined_call_operand.vmem [shape: f32[16,32], index: 0, kind: input, shape index: {}]
  %s1 = inlined_call_operand.vmem [shape: f32[2,2,32], index: 1, kind: input, shape index: {}]
  %s2 = inlined_call_operand.vmem [shape: f32[32,64], index: 2, kind: input, shape index: {}]
  %s3 = inlined_call_operand.vmem [shape: f32[1,64], index: 3, kind: input, shape index: {}]
  %s4 = inlined_call_operand.vmem [shape: f32[64,16], index: 4, kind: input, shape index: {}]
  %s5 = inlined_call_operand.vmem [shape: f32[1,16], index: 5, kind: input, shape index: {}]
  %s6 = inlined_call_operand.vmem [shape: f32[16,16], index: 6, kind: input, shape index: {}]
  %s7 = inlined_call_operand.vmem [shape: f32[1,16], index: 7, kind: input, shape index: {}]
  %s8 = inlined_call_operand.vmem [shape: f32[32,96], index: 8, kind: input, shape index: {}]
  %s9 = inlined_call_operand.vmem [shape: f32[1,96], index: 9, kind: input, shape index: {}]
  %s10 = inlined_call_operand.vmem [shape: f32[32,32], index: 10, kind: input, shape index: {}]
  %s11 = inlined_call_operand.vmem [shape: f32[1,32], index: 11, kind: input, shape index: {}]
  %s12 = inlined_call_operand.vmem [shape: f32[1,32], index: 12, kind: input, shape index: {}]
  %s13 = inlined_call_operand.vmem [shape: f32[1,32], index: 13, kind: input, shape index: {}]
  %s14 = inlined_call_operand.vmem [shape: f32[32,64], index: 14, kind: input, shape index: {}]
  %s15 = inlined_call_operand.vmem [shape: f32[1,64], index: 15, kind: input, shape index: {}]
  %s16 = inlined_call_operand.vmem [shape: f32[64,32], index: 16, kind: input, shape index: {}]
  %s17 = inlined_call_operand.vmem [shape: f32[1,32], index: 17, kind: input, shape index: {}]
  %s18 = inlined_call_operand.vmem [shape: f32[1,32], index: 18, kind: input, shape index: {}]
  %s19 = inlined_call_operand.vmem [shape: f32[1,32], index: 19, kind: input, shape index: {}]
  %s20 = inlined_call_operand.vmem [shape: f32[64,32], index: 20, kind: input, shape index: {}]
  %s21 = inlined_call_operand.vmem [shape: f32[1,32], index: 21, kind: input, shape index: {}]
  %s22 = inlined_call_operand.vmem [shape: f32[32,1], index: 22, kind: input, shape index: {}]
  %s23 = inlined_call_operand.<no memory space> [shape: f32[1,1], index: 23, kind: input, shape index: {}]
  %s24 = inlined_call_operand.hbm [shape: f32[2,2], index: 24, kind: output, shape index: {}]
  %s25 = sld [smem:[#allocation0]]
  $region106: #{context_aware_listener_forward.1} parent=0
    _
  %s27 = ssub.s32 1, %s25
  %s28 = scalar_select 0, %s27, %s25
  %v29 = vstv %s23
  %30 = vst [vmem:[#allocation2] sm:$0x1] %v29
  $region1: #{context_aware_listener_forward.1} parent=0
    #allocation3 [shape = 'u8[1024]{0}', space=vmem, size = 0x400, scoped, tag = 'output window, operand 0, single buffered']
    #allocation4 [shape = 's32[1]{0}', space=sflag, size = 0x4, scoped, tag = 'scoped memory for context_aware_listener_forward.1']
    %31 = vsyncpa [#allocation4], 0
    // Predicated region
    $region2: #{context_aware_listener_forward.1} parent=1 // pred_check
      _
    $region3: #{context_aware_listener_forward.1} parent=1 // pred_check_branch
      %33 = sbr.rel (0) target = $region5
    $region4: #{context_aware_listener_forward.1} parent=1 // pred_region
      _
    $region5: #{context_aware_listener_forward.1} parent=1 // pred_fallthru
      _
    // Predicated region
    $region6: #{context_aware_listener_forward.1} parent=1 // pred_check
      _
    $region7: #{context_aware_listener_forward.1} parent=1 // pred_check_branch
      %35 = sbr.rel (0) target = $region9
    $region8: #{context_aware_listener_forward.1} parent=1 // pred_region
      _
    $region9: #{context_aware_listener_forward.1} parent=1 // pred_fallthru
      _
    // Predicated region
    $region10: #{context_aware_listener_forward.1} parent=1 // pred_check
      _
    $region11: #{context_aware_listener_forward.1} parent=1 // pred_check_branch
      %37 = sbr.rel (0) target = $region13
    $region12: #{context_aware_listener_forward.1} parent=1 // pred_region
      _
    $region13: #{context_aware_listener_forward.1} parent=1 // pred_fallthru
      _
    // Predicated region
    $region14: #{context_aware_listener_forward.1} parent=1 // pred_check
      _
    $region15: #{context_aware_listener_forward.1} parent=1 // pred_check_branch
      %39 = sbr.rel (0) target = $region17
    $region16: #{context_aware_listener_forward.1} parent=1 // pred_region
      _
    $region17: #{context_aware_listener_forward.1} parent=1 // pred_fallthru
      _
    // Predicated region
    $region18: #{context_aware_listener_forward.1} parent=1 // pred_check
      _
    $region19: #{context_aware_listener_forward.1} parent=1 // pred_check_branch
      %41 = sbr.rel (0) target = $region21
    $region20: #{context_aware_listener_forward.1} parent=1 // pred_region
      _
    $region21: #{context_aware_listener_forward.1} parent=1 // pred_fallthru
      _
    // Predicated region
    $region22: #{context_aware_listener_forward.1} parent=1 // pred_check
      _
    $region23: #{context_aware_listener_forward.1} parent=1 // pred_check_branch
      %43 = sbr.rel (0) target = $region25
    $region24: #{context_aware_listener_forward.1} parent=1 // pred_region
      _
    $region25: #{context_aware_listener_forward.1} parent=1 // pred_fallthru
      _
    // Predicated region
    $region26: #{context_aware_listener_forward.1} parent=1 // pred_check
      _
    $region27: #{context_aware_listener_forward.1} parent=1 // pred_check_branch
      %45 = sbr.rel (0) target = $region29
    $region28: #{context_aware_listener_forward.1} parent=1 // pred_region
      _
    $region29: #{context_aware_listener_forward.1} parent=1 // pred_fallthru
      _
    // Predicated region
    $region30: #{context_aware_listener_forward.1} parent=1 // pred_check
      _
    $region31: #{context_aware_listener_forward.1} parent=1 // pred_check_branch
      %47 = sbr.rel (0) target = $region33
    $region32: #{context_aware_listener_forward.1} parent=1 // pred_region
      _
    $region33: #{context_aware_listener_forward.1} parent=1 // pred_fallthru
      _
    // Predicated region
    $region34: #{context_aware_listener_forward.1} parent=1 // pred_check
      _
    $region35: #{context_aware_listener_forward.1} parent=1 // pred_check_branch
      %49 = sbr.rel (0) target = $region37
    $region36: #{context_aware_listener_forward.1} parent=1 // pred_region
      _
    $region37: #{context_aware_listener_forward.1} parent=1 // pred_fallthru
      _
    // Predicated region
    $region38: #{context_aware_listener_forward.1} parent=1 // pred_check
      _
    $region39: #{context_aware_listener_forward.1} parent=1 // pred_check_branch
      %51 = sbr.rel (0) target = $region41
    $region40: #{context_aware_listener_forward.1} parent=1 // pred_region
      _
    $region41: #{context_aware_listener_forward.1} parent=1 // pred_fallthru
      _
    // Predicated region
    $region42: #{context_aware_listener_forward.1} parent=1 // pred_check
      _
    $region43: #{context_aware_listener_forward.1} parent=1 // pred_check_branch
      %53 = sbr.rel (0) target = $region45
    $region44: #{context_aware_listener_forward.1} parent=1 // pred_region
      _
    $region45: #{context_aware_listener_forward.1} parent=1 // pred_fallthru
      _
    // Predicated region
    $region46: #{context_aware_listener_forward.1} parent=1 // pred_check
      _
    $region47: #{context_aware_listener_forward.1} parent=1 // pred_check_branch
      %55 = sbr.rel (0) target = $region49
    $region48: #{context_aware_listener_forward.1} parent=1 // pred_region
      _
    $region49: #{context_aware_listener_forward.1} parent=1 // pred_fallthru
      _
    // Predicated region
    $region50: #{context_aware_listener_forward.1} parent=1 // pred_check
      _
    $region51: #{context_aware_listener_forward.1} parent=1 // pred_check_branch
      %57 = sbr.rel (0) target = $region53
    $region52: #{context_aware_listener_forward.1} parent=1 // pred_region
      _
    $region53: #{context_aware_listener_forward.1} parent=1 // pred_fallthru
      _
    // Predicated region
    $region54: #{context_aware_listener_forward.1} parent=1 // pred_check
      _
    $region55: #{context_aware_listener_forward.1} parent=1 // pred_check_branch
      %59 = sbr.rel (0) target = $region57
    $region56: #{context_aware_listener_forward.1} parent=1 // pred_region
      _
    $region57: #{context_aware_listener_forward.1} parent=1 // pred_fallthru
      _
    // Predicated region
    $region58: #{context_aware_listener_forward.1} parent=1 // pred_check
      _
    $region59: #{context_aware_listener_forward.1} parent=1 // pred_check_branch
      %61 = sbr.rel (0) target = $region61
    $region60: #{context_aware_listener_forward.1} parent=1 // pred_region
      _
    $region61: #{context_aware_listener_forward.1} parent=1 // pred_fallthru
      _
    // Predicated region
    $region62: #{context_aware_listener_forward.1} parent=1 // pred_check
      _
    $region63: #{context_aware_listener_forward.1} parent=1 // pred_check_branch
      %63 = sbr.rel (0) target = $region65
    $region64: #{context_aware_listener_forward.1} parent=1 // pred_region
      _
    $region65: #{context_aware_listener_forward.1} parent=1 // pred_fallthru
      _
    // Predicated region
    $region66: #{context_aware_listener_forward.1} parent=1 // pred_check
      _
    $region67: #{context_aware_listener_forward.1} parent=1 // pred_check_branch
      %65 = sbr.rel (0) target = $region69
    $region68: #{context_aware_listener_forward.1} parent=1 // pred_region
      _
    $region69: #{context_aware_listener_forward.1} parent=1 // pred_fallthru
      _
    // Predicated region
    $region70: #{context_aware_listener_forward.1} parent=1 // pred_check
      _
    $region71: #{context_aware_listener_forward.1} parent=1 // pred_check_branch
      %67 = sbr.rel (0) target = $region73
    $region72: #{context_aware_listener_forward.1} parent=1 // pred_region
      _
    $region73: #{context_aware_listener_forward.1} parent=1 // pred_fallthru
      _
    // Predicated region
    $region74: #{context_aware_listener_forward.1} parent=1 // pred_check
      _
    $region75: #{context_aware_listener_forward.1} parent=1 // pred_check_branch
      %69 = sbr.rel (0) target = $region77
    $region76: #{context_aware_listener_forward.1} parent=1 // pred_region
      _
    $region77: #{context_aware_listener_forward.1} parent=1 // pred_fallthru
      _
    // Predicated region
    $region78: #{context_aware_listener_forward.1} parent=1 // pred_check
      _
    $region79: #{context_aware_listener_forward.1} parent=1 // pred_check_branch
      %71 = sbr.rel (0) target = $region81
    $region80: #{context_aware_listener_forward.1} parent=1 // pred_region
      _
    $region81: #{context_aware_listener_forward.1} parent=1 // pred_fallthru
      _
    // Predicated region
    $region82: #{context_aware_listener_forward.1} parent=1 // pred_check
      _
    $region83: #{context_aware_listener_forward.1} parent=1 // pred_check_branch
      %73 = sbr.rel (0) target = $region85
    $region84: #{context_aware_listener_forward.1} parent=1 // pred_region
      _
    $region85: #{context_aware_listener_forward.1} parent=1 // pred_fallthru
      _
    // Predicated region
    $region86: #{context_aware_listener_forward.1} parent=1 // pred_check
      _
    $region87: #{context_aware_listener_forward.1} parent=1 // pred_check_branch
      %75 = sbr.rel (0) target = $region89
    $region88: #{context_aware_listener_forward.1} parent=1 // pred_region
      _
    $region89: #{context_aware_listener_forward.1} parent=1 // pred_fallthru
      _
    // Predicated region
    $region90: #{context_aware_listener_forward.1} parent=1 // pred_check
      _
    $region91: #{context_aware_listener_forward.1} parent=1 // pred_check_branch
      %77 = sbr.rel (0) target = $region93
    $region92: #{context_aware_listener_forward.1} parent=1 // pred_region
      _
    $region93: #{context_aware_listener_forward.1} parent=1 // pred_fallthru
      _
    // Predicated region
    $region94: #{context_aware_listener_forward.1} parent=1 // pred_check
      _
    $region95: #{context_aware_listener_forward.1} parent=1 // pred_check_branch
      %79 = sbr.rel (0) target = $region97
    $region96: #{context_aware_listener_forward.1} parent=1 // pred_region
      _
    $region97: #{context_aware_listener_forward.1} parent=1 // pred_fallthru
      _
    %v80 = vld [vmem:[%s1] sm:$0x3]
    %v81 = vld [vmem:[%s2] sm:$0xff]
    %v82 = vld [vmem:[%s2 + $0x8] sm:$0xff]
    %v83 = vld [vmem:[%s2 + $0x10] sm:$0xff]
    %v84 = vld [vmem:[%s2 + $0x18] sm:$0xff]
    %v85 = vld [vmem:[%s3] sm:$0x1]
    %v87 = vlaneseq
    %v88 = vshrl.u32 %v87, 7
    %v89 = vsub.s32 0, %v88
    %v90 = vrot.slane %v85, %v89
    %vm92 = vcmask 261120
    %v94 = vsel %vm92, %v80, 0
    %96 = vmatprep.subr.mxu0 0.0
    %97 = vmatpush1.msra.mxu0 0.0
    %98 = vmatprep.subr.mxu0 0.0
    %99 = vmatpush1.msra.mxu0 0.0
    %100 = vmatprep.subr.mxu0 0.0
    %101 = vmatpush1.msra.mxu0 0.0
    %102 = vmatprep.subr.mxu0 0.0
    %103 = vmatpush1.msra.mxu0 0.0
    %104 = vmatprep.subr.mxu0 0.0
    %105 = vmatpush1.msra.mxu0 0.0
    %106 = vmatprep.subr.mxu0 0.0
    %107 = vmatpush1.msra.mxu0 0.0
    %108 = vmatprep.subr.mxu0 0.0
    %109 = vmatpush1.msra.mxu0 0.0
    %110 = vmatprep.subr.mxu0 0.0
    %111 = vmatpush1.msra.mxu0 0.0
    %112 = vmatprep.subr.mxu0 0.0
    %113 = vmatpush1.msra.mxu0 0.0
    %114 = vmatprep.subr.mxu0 0.0
    %115 = vmatpush1.msra.mxu0 0.0
    %116 = vmatprep.subr.mxu0 0.0
    %117 = vmatpush1.msra.mxu0 0.0
    %118 = vmatprep.subr.mxu0 0.0
    %119 = vmatpush1.msra.mxu0 0.0
    %120 = vmatprep.subr.mxu0 0.0
    %121 = vmatpush1.msra.mxu0 %v84
    %122 = vmatprep.subr.mxu0 0.0
    %123 = vmatpush1.msra.mxu0 %v83
    %124 = vmatprep.subr.mxu0 0.0
    %125 = vmatpush1.msra.mxu0 %v82
    %126 = vmatprep.subr.mxu0 0.0
    %127 = vmatpush1.msra.mxu0 %v81
    %128 = vmatprep.subr.mxu0 0.0
    %129 = vmatpush2.msra.mxu0 0.0
    %130 = vmatprep.subr.mxu0 0.0
    %131 = vmatpush2.msra.mxu0 0.0
    %132 = vmatprep.subr.mxu0 0.0
    %133 = vmatpush2.msra.mxu0 0.0
    %134 = vmatprep.subr.mxu0 0.0
    %135 = vmatpush2.msra.mxu0 0.0
    %136 = vmatprep.subr.mxu0 0.0
    %137 = vmatpush2.msra.mxu0 0.0
    %138 = vmatprep.subr.mxu0 0.0
    %139 = vmatpush2.msra.mxu0 0.0
    %140 = vmatprep.subr.mxu0 0.0
    %141 = vmatpush2.msra.mxu0 0.0
    %142 = vmatprep.subr.mxu0 0.0
    %143 = vmatpush2.msra.mxu0 0.0
    %144 = vmatprep.subr.mxu0 0.0
    %145 = vmatpush2.msra.mxu0 0.0
    %146 = vmatprep.subr.mxu0 0.0
    %147 = vmatpush2.msra.mxu0 0.0
    %148 = vmatprep.subr.mxu0 0.0
    %149 = vmatpush2.msra.mxu0 0.0
    %150 = vmatprep.subr.mxu0 0.0
    %151 = vmatpush2.msra.mxu0 0.0
    %152 = vmatprep.subr.mxu0 0.0
    %153 = vmatpush2.msra.mxu0 0.0
    %154 = vmatprep.subr.mxu0 0.0
    %155 = vmatpush2.msra.mxu0 0.0
    %156 = vmatprep.subr.mxu0 0.0
    %157 = vmatpush2.msra.mxu0 0.0
    %158 = vmatprep.subr.mxu0 0.0
    %159 = vmatpush2.msra.mxu0 0.0
    %160 = vmatprep.mubr.f32.mxu0 0.0
    %161 = vmatmul.mubr.f32.gmra.mxu0 %v94
    %v162 = vpop.f32.mrf.mxu0
    %v163 = vadd.f32 %v90, %v162
    %v164 = vpop.f32.mrf.mxu0
    %165 = vdwg.mxu0
    %v166 = vmax.f32 %v163, 0.0
    %v167 = vld [vmem:[%s4] sm:$0xff]
    %v168 = vld [vmem:[%s4 + $0x8] sm:$0xff]
    %v169 = vld [vmem:[%s4 + $0x10] sm:$0xff]
    %v170 = vld [vmem:[%s4 + $0x18] sm:$0xff]
    %v171 = vld [vmem:[%s4 + $0x20] sm:$0xff]
    %v172 = vld [vmem:[%s4 + $0x28] sm:$0xff]
    %v173 = vld [vmem:[%s4 + $0x30] sm:$0xff]
    %v174 = vld [vmem:[%s4 + $0x38] sm:$0xff]
    %v175 = vld [vmem:[%s5] sm:$0x1]
    %v177 = vlaneseq
    %v178 = vshrl.u32 %v177, 7
    %v179 = vsub.s32 0, %v178
    %v180 = vrot.slane %v175, %v179
    %vm182 = vcmask 523264
    %v184 = vsel %vm182, %v166, 0
    %186 = vmatprep.subr.mxu0 0.0
    %187 = vmatpush1.msra.mxu0 0.0
    %188 = vmatprep.subr.mxu0 0.0
    %189 = vmatpush1.msra.mxu0 0.0
    %190 = vmatprep.subr.mxu0 0.0
    %191 = vmatpush1.msra.mxu0 0.0
    %192 = vmatprep.subr.mxu0 0.0
    %193 = vmatpush1.msra.mxu0 0.0
    %194 = vmatprep.subr.mxu0 0.0
    %195 = vmatpush1.msra.mxu0 0.0
    %196 = vmatprep.subr.mxu0 0.0
    %197 = vmatpush1.msra.mxu0 0.0
    %198 = vmatprep.subr.mxu0 0.0
    %199 = vmatpush1.msra.mxu0 0.0
    %200 = vmatprep.subr.mxu0 0.0
    %201 = vmatpush1.msra.mxu0 0.0
    %202 = vmatprep.subr.mxu0 0.0
    %203 = vmatpush1.msra.mxu0 %v174
    %204 = vmatprep.subr.mxu0 0.0
    %205 = vmatpush1.msra.mxu0 %v173
    %206 = vmatprep.subr.mxu0 0.0
    %207 = vmatpush1.msra.mxu0 %v172
    %208 = vmatprep.subr.mxu0 0.0
    %209 = vmatpush1.msra.mxu0 %v171
    %210 = vmatprep.subr.mxu0 0.0
    %211 = vmatpush1.msra.mxu0 %v170
    %212 = vmatprep.subr.mxu0 0.0
    %213 = vmatpush1.msra.mxu0 %v169
    %214 = vmatprep.subr.mxu0 0.0
    %215 = vmatpush1.msra.mxu0 %v168
    %216 = vmatprep.subr.mxu0 0.0
    %217 = vmatpush1.msra.mxu0 %v167
    %218 = vmatprep.subr.mxu0 0.0
    %219 = vmatpush2.msra.mxu0 0.0
    %220 = vmatprep.subr.mxu0 0.0
    %221 = vmatpush2.msra.mxu0 0.0
    %222 = vmatprep.subr.mxu0 0.0
    %223 = vmatpush2.msra.mxu0 0.0
    %224 = vmatprep.subr.mxu0 0.0
    %225 = vmatpush2.msra.mxu0 0.0
    %226 = vmatprep.subr.mxu0 0.0
    %227 = vmatpush2.msra.mxu0 0.0
    %228 = vmatprep.subr.mxu0 0.0
    %229 = vmatpush2.msra.mxu0 0.0
    %230 = vmatprep.subr.mxu0 0.0
    %231 = vmatpush2.msra.mxu0 0.0
    %232 = vmatprep.subr.mxu0 0.0
    %233 = vmatpush2.msra.mxu0 0.0
    %234 = vmatprep.subr.mxu0 0.0
    %235 = vmatpush2.msra.mxu0 0.0
    %236 = vmatprep.subr.mxu0 0.0
    %237 = vmatpush2.msra.mxu0 0.0
    %238 = vmatprep.subr.mxu0 0.0
    %239 = vmatpush2.msra.mxu0 0.0
    %240 = vmatprep.subr.mxu0 0.0
    %241 = vmatpush2.msra.mxu0 0.0
    %242 = vmatprep.subr.mxu0 0.0
    %243 = vmatpush2.msra.mxu0 0.0
    %244 = vmatprep.subr.mxu0 0.0
    %245 = vmatpush2.msra.mxu0 0.0
    %246 = vmatprep.subr.mxu0 0.0
    %247 = vmatpush2.msra.mxu0 0.0
    %248 = vmatprep.subr.mxu0 0.0
    %249 = vmatpush2.msra.mxu0 0.0
    %250 = vmatprep.mubr.f32.mxu0 0.0
    %251 = vmatmul.mubr.f32.gmra.mxu0 %v184
    %v252 = vpop.f32.mrf.mxu0
    %v253 = vadd.f32 %v180, %v252
    %v254 = vpop.f32.mrf.mxu0
    %255 = vdwg.mxu0
    %v256 = vld [vmem:[%s6] sm:$0xff]
    %v257 = vld [vmem:[%s6 + $0x8] sm:$0xff]
    %v258 = vld [vmem:[%s7] sm:$0x1]
    %v260 = vlaneseq
    %v261 = vshrl.u32 %v260, 7
    %v262 = vsub.s32 0, %v261
    %v263 = vrot.slane %v258, %v262
    %vm265 = vcmask 130048
    %v267 = vsel %vm265, %v253, 0
    %269 = vmatprep.subr.mxu0 0.0
    %270 = vmatpush1.msra.mxu0 0.0
    %271 = vmatprep.subr.mxu0 0.0
    %272 = vmatpush1.msra.mxu0 0.0
    %273 = vmatprep.subr.mxu0 0.0
    %274 = vmatpush1.msra.mxu0 0.0
    %275 = vmatprep.subr.mxu0 0.0
    %276 = vmatpush1.msra.mxu0 0.0
    %277 = vmatprep.subr.mxu0 0.0
    %278 = vmatpush1.msra.mxu0 0.0
    %279 = vmatprep.subr.mxu0 0.0
    %280 = vmatpush1.msra.mxu0 0.0
    %281 = vmatprep.subr.mxu0 0.0
    %282 = vmatpush1.msra.mxu0 0.0
    %283 = vmatprep.subr.mxu0 0.0
    %284 = vmatpush1.msra.mxu0 0.0
    %285 = vmatprep.subr.mxu0 0.0
    %286 = vmatpush1.msra.mxu0 0.0
    %287 = vmatprep.subr.mxu0 0.0
    %288 = vmatpush1.msra.mxu0 0.0
    %289 = vmatprep.subr.mxu0 0.0
    %290 = vmatpush1.msra.mxu0 0.0
    %291 = vmatprep.subr.mxu0 0.0
    %292 = vmatpush1.msra.mxu0 0.0
    %293 = vmatprep.subr.mxu0 0.0
    %294 = vmatpush1.msra.mxu0 0.0
    %295 = vmatprep.subr.mxu0 0.0
    %296 = vmatpush1.msra.mxu0 0.0
    %297 = vmatprep.subr.mxu0 0.0
    %298 = vmatpush1.msra.mxu0 %v257
    %299 = vmatprep.subr.mxu0 0.0
    %300 = vmatpush1.msra.mxu0 %v256
    %301 = vmatprep.subr.mxu0 0.0
    %302 = vmatpush2.msra.mxu0 0.0
    %303 = vmatprep.subr.mxu0 0.0
    %304 = vmatpush2.msra.mxu0 0.0
    %305 = vmatprep.subr.mxu0 0.0
    %306 = vmatpush2.msra.mxu0 0.0
    %307 = vmatprep.subr.mxu0 0.0
    %308 = vmatpush2.msra.mxu0 0.0
    %309 = vmatprep.subr.mxu0 0.0
    %310 = vmatpush2.msra.mxu0 0.0
    %311 = vmatprep.subr.mxu0 0.0
    %312 = vmatpush2.msra.mxu0 0.0
    %313 = vmatprep.subr.mxu0 0.0
    %314 = vmatpush2.msra.mxu0 0.0
    %315 = vmatprep.subr.mxu0 0.0
    %316 = vmatpush2.msra.mxu0 0.0
    %317 = vmatprep.subr.mxu0 0.0
    %318 = vmatpush2.msra.mxu0 0.0
    %319 = vmatprep.subr.mxu0 0.0
    %320 = vmatpush2.msra.mxu0 0.0
    %321 = vmatprep.subr.mxu0 0.0
    %322 = vmatpush2.msra.mxu0 0.0
    %323 = vmatprep.subr.mxu0 0.0
    %324 = vmatpush2.msra.mxu0 0.0
    %325 = vmatprep.subr.mxu0 0.0
    %326 = vmatpush2.msra.mxu0 0.0
    %327 = vmatprep.subr.mxu0 0.0
    %328 = vmatpush2.msra.mxu0 0.0
    %329 = vmatprep.subr.mxu0 0.0
    %330 = vmatpush2.msra.mxu0 0.0
    %331 = vmatprep.subr.mxu0 0.0
    %332 = vmatpush2.msra.mxu0 0.0
    %333 = vmatprep.mubr.f32.mxu0 0.0
    %334 = vmatmul.mubr.f32.gmra.mxu0 %v267
    %v335 = vpop.f32.mrf.mxu0
    %v336 = vadd.f32 %v263, %v335
    %v337 = vpop.f32.mrf.mxu0
    %338 = vdwg.mxu0
    %v339 = vmax.f32 %v336, 0.0
    %s340 = scalar_lea.vmem %s1, 2
    %v341 = vld [vmem:[%s340] sm:$0x3]
    %v343 = vsel %vm92, %v341, 0
    %345 = vmatprep.subr.mxu0 0.0
    %346 = vmatpush1.msra.mxu0 0.0
    %347 = vmatprep.subr.mxu0 0.0
    %348 = vmatpush1.msra.mxu0 0.0
    %349 = vmatprep.subr.mxu0 0.0
    %350 = vmatpush1.msra.mxu0 0.0
    %351 = vmatprep.subr.mxu0 0.0
    %352 = vmatpush1.msra.mxu0 0.0
    %353 = vmatprep.subr.mxu0 0.0
    %354 = vmatpush1.msra.mxu0 0.0
    %355 = vmatprep.subr.mxu0 0.0
    %356 = vmatpush1.msra.mxu0 0.0
    %357 = vmatprep.subr.mxu0 0.0
    %358 = vmatpush1.msra.mxu0 0.0
    %359 = vmatprep.subr.mxu0 0.0
    %360 = vmatpush1.msra.mxu0 0.0
    %361 = vmatprep.subr.mxu0 0.0
    %362 = vmatpush1.msra.mxu0 0.0
    %363 = vmatprep.subr.mxu0 0.0
    %364 = vmatpush1.msra.mxu0 0.0
    %365 = vmatprep.subr.mxu0 0.0
    %366 = vmatpush1.msra.mxu0 0.0
    %367 = vmatprep.subr.mxu0 0.0
    %368 = vmatpush1.msra.mxu0 0.0
    %369 = vmatprep.subr.mxu0 0.0
    %370 = vmatpush1.msra.mxu0 %v84
    %371 = vmatprep.subr.mxu0 0.0
    %372 = vmatpush1.msra.mxu0 %v83
    %373 = vmatprep.subr.mxu0 0.0
    %374 = vmatpush1.msra.mxu0 %v82
    %375 = vmatprep.subr.mxu0 0.0
    %376 = vmatpush1.msra.mxu0 %v81
    %377 = vmatprep.subr.mxu0 0.0
    %378 = vmatpush2.msra.mxu0 0.0
    %379 = vmatprep.subr.mxu0 0.0
    %380 = vmatpush2.msra.mxu0 0.0
    %381 = vmatprep.subr.mxu0 0.0
    %382 = vmatpush2.msra.mxu0 0.0
    %383 = vmatprep.subr.mxu0 0.0
    %384 = vmatpush2.msra.mxu0 0.0
    %385 = vmatprep.subr.mxu0 0.0
    %386 = vmatpush2.msra.mxu0 0.0
    %387 = vmatprep.subr.mxu0 0.0
    %388 = vmatpush2.msra.mxu0 0.0
    %389 = vmatprep.subr.mxu0 0.0
    %390 = vmatpush2.msra.mxu0 0.0
    %391 = vmatprep.subr.mxu0 0.0
    %392 = vmatpush2.msra.mxu0 0.0
    %393 = vmatprep.subr.mxu0 0.0
    %394 = vmatpush2.msra.mxu0 0.0
    %395 = vmatprep.subr.mxu0 0.0
    %396 = vmatpush2.msra.mxu0 0.0
    %397 = vmatprep.subr.mxu0 0.0
    %398 = vmatpush2.msra.mxu0 0.0
    %399 = vmatprep.subr.mxu0 0.0
    %400 = vmatpush2.msra.mxu0 0.0
    %401 = vmatprep.subr.mxu0 0.0
    %402 = vmatpush2.msra.mxu0 0.0
    %403 = vmatprep.subr.mxu0 0.0
    %404 = vmatpush2.msra.mxu0 0.0
    %405 = vmatprep.subr.mxu0 0.0
    %406 = vmatpush2.msra.mxu0 0.0
    %407 = vmatprep.subr.mxu0 0.0
    %408 = vmatpush2.msra.mxu0 0.0
    %409 = vmatprep.mubr.f32.mxu0 0.0
    %410 = vmatmul.mubr.f32.gmra.mxu0 %v343
    %v411 = vpop.f32.mrf.mxu0
    %v412 = vadd.f32 %v90, %v411
    %v413 = vpop.f32.mrf.mxu0
    %414 = vdwg.mxu0
    %v415 = vmax.f32 %v412, 0.0
    %v417 = vsel %vm182, %v415, 0
    %419 = vmatprep.subr.mxu0 0.0
    %420 = vmatpush1.msra.mxu0 0.0
    %421 = vmatprep.subr.mxu0 0.0
    %422 = vmatpush1.msra.mxu0 0.0
    %423 = vmatprep.subr.mxu0 0.0
    %424 = vmatpush1.msra.mxu0 0.0
    %425 = vmatprep.subr.mxu0 0.0
    %426 = vmatpush1.msra.mxu0 0.0
    %427 = vmatprep.subr.mxu0 0.0
    %428 = vmatpush1.msra.mxu0 0.0
    %429 = vmatprep.subr.mxu0 0.0
    %430 = vmatpush1.msra.mxu0 0.0
    %431 = vmatprep.subr.mxu0 0.0
    %432 = vmatpush1.msra.mxu0 0.0
    %433 = vmatprep.subr.mxu0 0.0
    %434 = vmatpush1.msra.mxu0 0.0
    %435 = vmatprep.subr.mxu0 0.0
    %436 = vmatpush1.msra.mxu0 %v174
    %437 = vmatprep.subr.mxu0 0.0
    %438 = vmatpush1.msra.mxu0 %v173
    %439 = vmatprep.subr.mxu0 0.0
    %440 = vmatpush1.msra.mxu0 %v172
    %441 = vmatprep.subr.mxu0 0.0
    %442 = vmatpush1.msra.mxu0 %v171
    %443 = vmatprep.subr.mxu0 0.0
    %444 = vmatpush1.msra.mxu0 %v170
    %445 = vmatprep.subr.mxu0 0.0
    %446 = vmatpush1.msra.mxu0 %v169
    %447 = vmatprep.subr.mxu0 0.0
    %448 = vmatpush1.msra.mxu0 %v168
    %449 = vmatprep.subr.mxu0 0.0
    %450 = vmatpush1.msra.mxu0 %v167
    %451 = vmatprep.subr.mxu0 0.0
    %452 = vmatpush2.msra.mxu0 0.0
    %453 = vmatprep.subr.mxu0 0.0
    %454 = vmatpush2.msra.mxu0 0.0
    %455 = vmatprep.subr.mxu0 0.0
    %456 = vmatpush2.msra.mxu0 0.0
    %457 = vmatprep.subr.mxu0 0.0
    %458 = vmatpush2.msra.mxu0 0.0
    %459 = vmatprep.subr.mxu0 0.0
    %460 = vmatpush2.msra.mxu0 0.0
    %461 = vmatprep.subr.mxu0 0.0
    %462 = vmatpush2.msra.mxu0 0.0
    %463 = vmatprep.subr.mxu0 0.0
    %464 = vmatpush2.msra.mxu0 0.0
    %465 = vmatprep.subr.mxu0 0.0
    %466 = vmatpush2.msra.mxu0 0.0
    %467 = vmatprep.subr.mxu0 0.0
    %468 = vmatpush2.msra.mxu0 0.0
    %469 = vmatprep.subr.mxu0 0.0
    %470 = vmatpush2.msra.mxu0 0.0
    %471 = vmatprep.subr.mxu0 0.0
    %472 = vmatpush2.msra.mxu0 0.0
    %473 = vmatprep.subr.mxu0 0.0
    %474 = vmatpush2.msra.mxu0 0.0
    %475 = vmatprep.subr.mxu0 0.0
    %476 = vmatpush2.msra.mxu0 0.0
    %477 = vmatprep.subr.mxu0 0.0
    %478 = vmatpush2.msra.mxu0 0.0
    %479 = vmatprep.subr.mxu0 0.0
    %480 = vmatpush2.msra.mxu0 0.0
    %481 = vmatprep.subr.mxu0 0.0
    %482 = vmatpush2.msra.mxu0 0.0
    %483 = vmatprep.mubr.f32.mxu0 0.0
    %484 = vmatmul.mubr.f32.gmra.mxu0 %v417
    %v485 = vpop.f32.mrf.mxu0
    %v486 = vadd.f32 %v180, %v485
    %v487 = vpop.f32.mrf.mxu0
    %488 = vdwg.mxu0
    %v490 = vsel %vm265, %v486, 0
    %492 = vmatprep.subr.mxu0 0.0
    %493 = vmatpush1.msra.mxu0 0.0
    %494 = vmatprep.subr.mxu0 0.0
    %495 = vmatpush1.msra.mxu0 0.0
    %496 = vmatprep.subr.mxu0 0.0
    %497 = vmatpush1.msra.mxu0 0.0
    %498 = vmatprep.subr.mxu0 0.0
    %499 = vmatpush1.msra.mxu0 0.0
    %500 = vmatprep.subr.mxu0 0.0
    %501 = vmatpush1.msra.mxu0 0.0
    %502 = vmatprep.subr.mxu0 0.0
    %503 = vmatpush1.msra.mxu0 0.0
    %504 = vmatprep.subr.mxu0 0.0
    %505 = vmatpush1.msra.mxu0 0.0
    %506 = vmatprep.subr.mxu0 0.0
    %507 = vmatpush1.msra.mxu0 0.0
    %508 = vmatprep.subr.mxu0 0.0
    %509 = vmatpush1.msra.mxu0 0.0
    %510 = vmatprep.subr.mxu0 0.0
    %511 = vmatpush1.msra.mxu0 0.0
    %512 = vmatprep.subr.mxu0 0.0
    %513 = vmatpush1.msra.mxu0 0.0
    %514 = vmatprep.subr.mxu0 0.0
    %515 = vmatpush1.msra.mxu0 0.0
    %516 = vmatprep.subr.mxu0 0.0
    %517 = vmatpush1.msra.mxu0 0.0
    %518 = vmatprep.subr.mxu0 0.0
    %519 = vmatpush1.msra.mxu0 0.0
    %520 = vmatprep.subr.mxu0 0.0
    %521 = vmatpush1.msra.mxu0 %v257
    %522 = vmatprep.subr.mxu0 0.0
    %523 = vmatpush1.msra.mxu0 %v256
    %524 = vmatprep.subr.mxu0 0.0
    %525 = vmatpush2.msra.mxu0 0.0
    %526 = vmatprep.subr.mxu0 0.0
    %527 = vmatpush2.msra.mxu0 0.0
    %528 = vmatprep.subr.mxu0 0.0
    %529 = vmatpush2.msra.mxu0 0.0
    %530 = vmatprep.subr.mxu0 0.0
    %531 = vmatpush2.msra.mxu0 0.0
    %532 = vmatprep.subr.mxu0 0.0
    %533 = vmatpush2.msra.mxu0 0.0
    %534 = vmatprep.subr.mxu0 0.0
    %535 = vmatpush2.msra.mxu0 0.0
    %536 = vmatprep.subr.mxu0 0.0
    %537 = vmatpush2.msra.mxu0 0.0
    %538 = vmatprep.subr.mxu0 0.0
    %539 = vmatpush2.msra.mxu0 0.0
    %540 = vmatprep.subr.mxu0 0.0
    %541 = vmatpush2.msra.mxu0 0.0
    %542 = vmatprep.subr.mxu0 0.0
    %543 = vmatpush2.msra.mxu0 0.0
    %544 = vmatprep.subr.mxu0 0.0
    %545 = vmatpush2.msra.mxu0 0.0
    %546 = vmatprep.subr.mxu0 0.0
    %547 = vmatpush2.msra.mxu0 0.0
    %548 = vmatprep.subr.mxu0 0.0
    %549 = vmatpush2.msra.mxu0 0.0
    %550 = vmatprep.subr.mxu0 0.0
    %551 = vmatpush2.msra.mxu0 0.0
    %552 = vmatprep.subr.mxu0 0.0
    %553 = vmatpush2.msra.mxu0 0.0
    %554 = vmatprep.subr.mxu0 0.0
    %555 = vmatpush2.msra.mxu0 0.0
    %556 = vmatprep.mubr.f32.mxu0 0.0
    %557 = vmatmul.mubr.f32.gmra.mxu0 %v490
    %v558 = vpop.f32.mrf.mxu0
    %v559 = vadd.f32 %v263, %v558
    %v560 = vpop.f32.mrf.mxu0
    %561 = vdwg.mxu0
    %v562 = vmax.f32 %v559, 0.0
    %v563 = vld [vmem:[%s0] sm:$0xff]
    %v564 = vld [vmem:[%s0 + $0x8] sm:$0xff]
    %v565 = vld [vmem:[%s8] sm:$0xff]
    %v566 = vld [vmem:[%s8 + $0x8] sm:$0xff]
    %v567 = vld [vmem:[%s8 + $0x10] sm:$0xff]
    %v568 = vld [vmem:[%s8 + $0x18] sm:$0xff]
    %v569 = vld [vmem:[%s9] sm:$0x1]
    %v571 = vlaneseq
    %v572 = vshrl.u32 %v571, 7
    %v573 = vsub.s32 0, %v572
    %v574 = vrot.slane %v569, %v573
    %v577 = vsel %vm92, %v563, 0
    %v580 = vsel %vm92, %v564, 0
    %582 = vmatprep.subr.mxu0 0.0
    %583 = vmatpush1.msra.mxu0 0.0
    %584 = vmatprep.subr.mxu0 0.0
    %585 = vmatpush1.msra.mxu0 0.0
    %586 = vmatprep.subr.mxu0 0.0
    %587 = vmatpush1.msra.mxu0 0.0
    %588 = vmatprep.subr.mxu0 0.0
    %589 = vmatpush1.msra.mxu0 0.0
    %590 = vmatprep.subr.mxu0 0.0
    %591 = vmatpush1.msra.mxu0 0.0
    %592 = vmatprep.subr.mxu0 0.0
    %593 = vmatpush1.msra.mxu0 0.0
    %594 = vmatprep.subr.mxu0 0.0
    %595 = vmatpush1.msra.mxu0 0.0
    %596 = vmatprep.subr.mxu0 0.0
    %597 = vmatpush1.msra.mxu0 0.0
    %598 = vmatprep.subr.mxu0 0.0
    %599 = vmatpush1.msra.mxu0 0.0
    %600 = vmatprep.subr.mxu0 0.0
    %601 = vmatpush1.msra.mxu0 0.0
    %602 = vmatprep.subr.mxu0 0.0
    %603 = vmatpush1.msra.mxu0 0.0
    %604 = vmatprep.subr.mxu0 0.0
    %605 = vmatpush1.msra.mxu0 0.0
    %606 = vmatprep.subr.mxu0 0.0
    %607 = vmatpush1.msra.mxu0 %v568
    %608 = vmatprep.subr.mxu0 0.0
    %609 = vmatpush1.msra.mxu0 %v567
    %610 = vmatprep.subr.mxu0 0.0
    %611 = vmatpush1.msra.mxu0 %v566
    %612 = vmatprep.subr.mxu0 0.0
    %613 = vmatpush1.msra.mxu0 %v565
    %614 = vmatprep.subr.mxu0 0.0
    %615 = vmatpush2.msra.mxu0 0.0
    %616 = vmatprep.subr.mxu0 0.0
    %617 = vmatpush2.msra.mxu0 0.0
    %618 = vmatprep.subr.mxu0 0.0
    %619 = vmatpush2.msra.mxu0 0.0
    %620 = vmatprep.subr.mxu0 0.0
    %621 = vmatpush2.msra.mxu0 0.0
    %622 = vmatprep.subr.mxu0 0.0
    %623 = vmatpush2.msra.mxu0 0.0
    %624 = vmatprep.subr.mxu0 0.0
    %625 = vmatpush2.msra.mxu0 0.0
    %626 = vmatprep.subr.mxu0 0.0
    %627 = vmatpush2.msra.mxu0 0.0
    %628 = vmatprep.subr.mxu0 0.0
    %629 = vmatpush2.msra.mxu0 0.0
    %630 = vmatprep.subr.mxu0 0.0
    %631 = vmatpush2.msra.mxu0 0.0
    %632 = vmatprep.subr.mxu0 0.0
    %633 = vmatpush2.msra.mxu0 0.0
    %634 = vmatprep.subr.mxu0 0.0
    %635 = vmatpush2.msra.mxu0 0.0
    %636 = vmatprep.subr.mxu0 0.0
    %637 = vmatpush2.msra.mxu0 0.0
    %638 = vmatprep.subr.mxu0 0.0
    %639 = vmatpush2.msra.mxu0 0.0
    %640 = vmatprep.subr.mxu0 0.0
    %641 = vmatpush2.msra.mxu0 0.0
    %642 = vmatprep.subr.mxu0 0.0
    %643 = vmatpush2.msra.mxu0 0.0
    %644 = vmatprep.subr.mxu0 0.0
    %645 = vmatpush2.msra.mxu0 0.0
    %646 = vmatprep.mubr.f32.mxu0 0.0
    %647 = vmatmul.mubr.f32.gmra.mxu0 %v577
    %v648 = vpop.f32.mrf.mxu0
    %v649 = vadd.f32 %v574, %v648
    %v650 = vpop.f32.mrf.mxu0
    %651 = vmatprep.mubr.f32.mxu0 0.0
    %652 = vmatmul.mubr.f32.gmra.mxu0 %v580
    %v653 = vpop.f32.mrf.mxu0
    %v654 = vadd.f32 %v574, %v653
    %v655 = vpop.f32.mrf.mxu0
    %656 = vdwg.mxu0
    %v657 = vld [vmem:[%s10] sm:$0xff]
    %v658 = vld [vmem:[%s10 + $0x8] sm:$0xff]
    %v659 = vld [vmem:[%s10 + $0x10] sm:$0xff]
    %v660 = vld [vmem:[%s10 + $0x18] sm:$0xff]
    %662 = vrot.lane.b32.xlu0 %v649, 96
    %v663 = vpop.permute.xlu0 %662
    %v664 = vsel %vm265, %v649, 0
    %v666 = vsel %vm265, %v663, 0
    %668 = vmatprep.subr.mxu0 0.0
    %669 = vmatpush1.xpose.msra.mxu0 0.0
    %670 = vmatprep.subr.mxu0 0.0
    %671 = vmatpush1.xpose.msra.mxu0 0.0
    %672 = vmatprep.subr.mxu0 0.0
    %673 = vmatpush1.xpose.msra.mxu0 0.0
    %674 = vmatprep.subr.mxu0 0.0
    %675 = vmatpush1.xpose.msra.mxu0 0.0
    %676 = vmatprep.subr.mxu0 0.0
    %677 = vmatpush1.xpose.msra.mxu0 0.0
    %678 = vmatprep.subr.mxu0 0.0
    %679 = vmatpush1.xpose.msra.mxu0 0.0
    %680 = vmatprep.subr.mxu0 0.0
    %681 = vmatpush1.xpose.msra.mxu0 0.0
    %682 = vmatprep.subr.mxu0 0.0
    %683 = vmatpush1.xpose.msra.mxu0 0.0
    %684 = vmatprep.subr.mxu0 0.0
    %685 = vmatpush1.xpose.msra.mxu0 0.0
    %686 = vmatprep.subr.mxu0 0.0
    %687 = vmatpush1.xpose.msra.mxu0 0.0
    %688 = vmatprep.subr.mxu0 0.0
    %689 = vmatpush1.xpose.msra.mxu0 0.0
    %690 = vmatprep.subr.mxu0 0.0
    %691 = vmatpush1.xpose.msra.mxu0 0.0
    %692 = vmatprep.subr.mxu0 0.0
    %693 = vmatpush1.xpose.msra.mxu0 0.0
    %694 = vmatprep.subr.mxu0 0.0
    %695 = vmatpush1.xpose.msra.mxu0 0.0
    %696 = vmatprep.subr.mxu0 0.0
    %697 = vmatpush1.xpose.msra.mxu0 0.0
    %698 = vmatprep.subr.mxu0 0.0
    %699 = vmatpush1.xpose.msra.mxu0 %v666
    %700 = vmatprep.subr.mxu0 0.0
    %701 = vmatpush2.xpose.msra.mxu0 0.0
    %702 = vmatprep.subr.mxu0 0.0
    %703 = vmatpush2.xpose.msra.mxu0 0.0
    %704 = vmatprep.subr.mxu0 0.0
    %705 = vmatpush2.xpose.msra.mxu0 0.0
    %706 = vmatprep.subr.mxu0 0.0
    %707 = vmatpush2.xpose.msra.mxu0 0.0
    %708 = vmatprep.subr.mxu0 0.0
    %709 = vmatpush2.xpose.msra.mxu0 0.0
    %710 = vmatprep.subr.mxu0 0.0
    %711 = vmatpush2.xpose.msra.mxu0 0.0
    %712 = vmatprep.subr.mxu0 0.0
    %713 = vmatpush2.xpose.msra.mxu0 0.0
    %714 = vmatprep.subr.mxu0 0.0
    %715 = vmatpush2.xpose.msra.mxu0 0.0
    %716 = vmatprep.subr.mxu0 0.0
    %717 = vmatpush2.xpose.msra.mxu0 0.0
    %718 = vmatprep.subr.mxu0 0.0
    %719 = vmatpush2.xpose.msra.mxu0 0.0
    %720 = vmatprep.subr.mxu0 0.0
    %721 = vmatpush2.xpose.msra.mxu0 0.0
    %722 = vmatprep.subr.mxu0 0.0
    %723 = vmatpush2.xpose.msra.mxu0 0.0
    %724 = vmatprep.subr.mxu0 0.0
    %725 = vmatpush2.xpose.msra.mxu0 0.0
    %726 = vmatprep.subr.mxu0 0.0
    %727 = vmatpush2.xpose.msra.mxu0 0.0
    %728 = vmatprep.subr.mxu0 0.0
    %729 = vmatpush2.xpose.msra.mxu0 0.0
    %730 = vmatprep.subr.mxu0 0.0
    %731 = vmatpush2.xpose.msra.mxu0 0.0
    %732 = vmatprep.mubr.f32.mxu0 0.0
    %733 = vmatmul.mubr.f32.gmra.mxu0 %v664
    %v734 = vpop.f32.mrf.mxu0
    %v735 = vadd.f32 0.0, %v734
    %v736 = vpop.f32.mrf.mxu0
    %737 = vdwg.mxu0
    %v738 = vmul.f32 %v735, 0.25
    %vm739 = vcmask 64512
    %v740 = vsel %vm739, %v738, -inf
    %741 = vmax.xlane.f32.xlu0 %v740
    %v742 = vpop.xlane.xlu0 %741
    %v743 = vsub.f32 %v738, %v742
    %v744 = vmul.f32 %v743, 1.442695
    %v745 = vpow.pop %v744
    %v746 = vsel %vm739, %v745, 0.0
    %747 = vadd.xlane.f32.xlu0 %v746
    %v748 = vpop.xlane.xlu0 %747
    %v749 = vrcp.pop %v748
    %v750 = vmul.f32 %v745, %v749
    %751 = vrot.lane.b32.xlu0 %v649, 64
    %v752 = vpop.permute.xlu0 %751
    %v755 = vsel %vm739, %v750, 0
    %757 = vmatprep.subr.mxu0 0.0
    %758 = vmatpush1.msra.mxu0 0.0
    %759 = vmatprep.subr.mxu0 0.0
    %760 = vmatpush1.msra.mxu0 0.0
    %761 = vmatprep.subr.mxu0 0.0
    %762 = vmatpush1.msra.mxu0 0.0
    %763 = vmatprep.subr.mxu0 0.0
    %764 = vmatpush1.msra.mxu0 0.0
    %765 = vmatprep.subr.mxu0 0.0
    %766 = vmatpush1.msra.mxu0 0.0
    %767 = vmatprep.subr.mxu0 0.0
    %768 = vmatpush1.msra.mxu0 0.0
    %769 = vmatprep.subr.mxu0 0.0
    %770 = vmatpush1.msra.mxu0 0.0
    %771 = vmatprep.subr.mxu0 0.0
    %772 = vmatpush1.msra.mxu0 0.0
    %773 = vmatprep.subr.mxu0 0.0
    %774 = vmatpush1.msra.mxu0 0.0
    %775 = vmatprep.subr.mxu0 0.0
    %776 = vmatpush1.msra.mxu0 0.0
    %777 = vmatprep.subr.mxu0 0.0
    %778 = vmatpush1.msra.mxu0 0.0
    %779 = vmatprep.subr.mxu0 0.0
    %780 = vmatpush1.msra.mxu0 0.0
    %781 = vmatprep.subr.mxu0 0.0
    %782 = vmatpush1.msra.mxu0 0.0
    %783 = vmatprep.subr.mxu0 0.0
    %784 = vmatpush1.msra.mxu0 0.0
    %785 = vmatprep.subr.mxu0 0.0
    %786 = vmatpush1.msra.mxu0 0.0
    %787 = vmatprep.subr.mxu0 0.0
    %788 = vmatpush1.msra.mxu0 %v752
    %789 = vmatprep.subr.mxu0 0.0
    %790 = vmatpush2.msra.mxu0 0.0
    %791 = vmatprep.subr.mxu0 0.0
    %792 = vmatpush2.msra.mxu0 0.0
    %793 = vmatprep.subr.mxu0 0.0
    %794 = vmatpush2.msra.mxu0 0.0
    %795 = vmatprep.subr.mxu0 0.0
    %796 = vmatpush2.msra.mxu0 0.0
    %797 = vmatprep.subr.mxu0 0.0
    %798 = vmatpush2.msra.mxu0 0.0
    %799 = vmatprep.subr.mxu0 0.0
    %800 = vmatpush2.msra.mxu0 0.0
    %801 = vmatprep.subr.mxu0 0.0
    %802 = vmatpush2.msra.mxu0 0.0
    %803 = vmatprep.subr.mxu0 0.0
    %804 = vmatpush2.msra.mxu0 0.0
    %805 = vmatprep.subr.mxu0 0.0
    %806 = vmatpush2.msra.mxu0 0.0
    %807 = vmatprep.subr.mxu0 0.0
    %808 = vmatpush2.msra.mxu0 0.0
    %809 = vmatprep.subr.mxu0 0.0
    %810 = vmatpush2.msra.mxu0 0.0
    %811 = vmatprep.subr.mxu0 0.0
    %812 = vmatpush2.msra.mxu0 0.0
    %813 = vmatprep.subr.mxu0 0.0
    %814 = vmatpush2.msra.mxu0 0.0
    %815 = vmatprep.subr.mxu0 0.0
    %816 = vmatpush2.msra.mxu0 0.0
    %817 = vmatprep.subr.mxu0 0.0
    %818 = vmatpush2.msra.mxu0 0.0
    %819 = vmatprep.subr.mxu0 0.0
    %820 = vmatpush2.msra.mxu0 0.0
    %821 = vmatprep.mubr.f32.mxu0 0.0
    %822 = vmatmul.mubr.f32.gmra.mxu0 %v755
    %v823 = vpop.f32.mrf.mxu0
    %v824 = vadd.f32 0.0, %v823
    %v825 = vpop.f32.mrf.mxu0
    %826 = vdwg.mxu0
    %827 = vrot.lane.b32.xlu0 %v649, 112
    %v828 = vpop.permute.xlu0 %827
    %829 = vrot.lane.b32.xlu0 %v649, 80
    %v830 = vpop.permute.xlu0 %829
    %v831 = vsel %vm265, %v828, 0
    %v833 = vsel %vm265, %v830, 0
    %835 = vmatprep.subr.mxu0 0.0
    %836 = vmatpush1.xpose.msra.mxu0 0.0
    %837 = vmatprep.subr.mxu0 0.0
    %838 = vmatpush1.xpose.msra.mxu0 0.0
    %839 = vmatprep.subr.mxu0 0.0
    %840 = vmatpush1.xpose.msra.mxu0 0.0
    %841 = vmatprep.subr.mxu0 0.0
    %842 = vmatpush1.xpose.msra.mxu0 0.0
    %843 = vmatprep.subr.mxu0 0.0
    %844 = vmatpush1.xpose.msra.mxu0 0.0
    %845 = vmatprep.subr.mxu0 0.0
    %846 = vmatpush1.xpose.msra.mxu0 0.0
    %847 = vmatprep.subr.mxu0 0.0
    %848 = vmatpush1.xpose.msra.mxu0 0.0
    %849 = vmatprep.subr.mxu0 0.0
    %850 = vmatpush1.xpose.msra.mxu0 0.0
    %851 = vmatprep.subr.mxu0 0.0
    %852 = vmatpush1.xpose.msra.mxu0 0.0
    %853 = vmatprep.subr.mxu0 0.0
    %854 = vmatpush1.xpose.msra.mxu0 0.0
    %855 = vmatprep.subr.mxu0 0.0
    %856 = vmatpush1.xpose.msra.mxu0 0.0
    %857 = vmatprep.subr.mxu0 0.0
    %858 = vmatpush1.xpose.msra.mxu0 0.0
    %859 = vmatprep.subr.mxu0 0.0
    %860 = vmatpush1.xpose.msra.mxu0 0.0
    %861 = vmatprep.subr.mxu0 0.0
    %862 = vmatpush1.xpose.msra.mxu0 0.0
    %863 = vmatprep.subr.mxu0 0.0
    %864 = vmatpush1.xpose.msra.mxu0 0.0
    %865 = vmatprep.subr.mxu0 0.0
    %866 = vmatpush1.xpose.msra.mxu0 %v833
    %867 = vmatprep.subr.mxu0 0.0
    %868 = vmatpush2.xpose.msra.mxu0 0.0
    %869 = vmatprep.subr.mxu0 0.0
    %870 = vmatpush2.xpose.msra.mxu0 0.0
    %871 = vmatprep.subr.mxu0 0.0
    %872 = vmatpush2.xpose.msra.mxu0 0.0
    %873 = vmatprep.subr.mxu0 0.0
    %874 = vmatpush2.xpose.msra.mxu0 0.0
    %875 = vmatprep.subr.mxu0 0.0
    %876 = vmatpush2.xpose.msra.mxu0 0.0
    %877 = vmatprep.subr.mxu0 0.0
    %878 = vmatpush2.xpose.msra.mxu0 0.0
    %879 = vmatprep.subr.mxu0 0.0
    %880 = vmatpush2.xpose.msra.mxu0 0.0
    %881 = vmatprep.subr.mxu0 0.0
    %882 = vmatpush2.xpose.msra.mxu0 0.0
    %883 = vmatprep.subr.mxu0 0.0
    %884 = vmatpush2.xpose.msra.mxu0 0.0
    %885 = vmatprep.subr.mxu0 0.0
    %886 = vmatpush2.xpose.msra.mxu0 0.0
    %887 = vmatprep.subr.mxu0 0.0
    %888 = vmatpush2.xpose.msra.mxu0 0.0
    %889 = vmatprep.subr.mxu0 0.0
    %890 = vmatpush2.xpose.msra.mxu0 0.0
    %891 = vmatprep.subr.mxu0 0.0
    %892 = vmatpush2.xpose.msra.mxu0 0.0
    %893 = vmatprep.subr.mxu0 0.0
    %894 = vmatpush2.xpose.msra.mxu0 0.0
    %895 = vmatprep.subr.mxu0 0.0
    %896 = vmatpush2.xpose.msra.mxu0 0.0
    %897 = vmatprep.subr.mxu0 0.0
    %898 = vmatpush2.xpose.msra.mxu0 0.0
    %899 = vmatprep.mubr.f32.mxu0 0.0
    %900 = vmatmul.mubr.f32.gmra.mxu0 %v831
    %v901 = vpop.f32.mrf.mxu0
    %v902 = vadd.f32 0.0, %v901
    %v903 = vpop.f32.mrf.mxu0
    %904 = vdwg.mxu0
    %v905 = vmul.f32 %v902, 0.25
    %v906 = vsel %vm739, %v905, -inf
    %907 = vmax.xlane.f32.xlu0 %v906
    %v908 = vpop.xlane.xlu0 %907
    %v909 = vsub.f32 %v905, %v908
    %v910 = vmul.f32 %v909, 1.442695
    %v911 = vpow.pop %v910
    %v912 = vsel %vm739, %v911, 0.0
    %913 = vadd.xlane.f32.xlu0 %v912
    %v914 = vpop.xlane.xlu0 %913
    %v915 = vrcp.pop %v914
    %v916 = vmul.f32 %v911, %v915
    %917 = vrot.lane.b32.xlu0 %v649, 48
    %v918 = vpop.permute.xlu0 %917
    %v921 = vsel %vm739, %v916, 0
    %923 = vmatprep.subr.mxu0 0.0
    %924 = vmatpush1.msra.mxu0 0.0
    %925 = vmatprep.subr.mxu0 0.0
    %926 = vmatpush1.msra.mxu0 0.0
    %927 = vmatprep.subr.mxu0 0.0
    %928 = vmatpush1.msra.mxu0 0.0
    %929 = vmatprep.subr.mxu0 0.0
    %930 = vmatpush1.msra.mxu0 0.0
    %931 = vmatprep.subr.mxu0 0.0
    %932 = vmatpush1.msra.mxu0 0.0
    %933 = vmatprep.subr.mxu0 0.0
    %934 = vmatpush1.msra.mxu0 0.0
    %935 = vmatprep.subr.mxu0 0.0
    %936 = vmatpush1.msra.mxu0 0.0
    %937 = vmatprep.subr.mxu0 0.0
    %938 = vmatpush1.msra.mxu0 0.0
    %939 = vmatprep.subr.mxu0 0.0
    %940 = vmatpush1.msra.mxu0 0.0
    %941 = vmatprep.subr.mxu0 0.0
    %942 = vmatpush1.msra.mxu0 0.0
    %943 = vmatprep.subr.mxu0 0.0
    %944 = vmatpush1.msra.mxu0 0.0
    %945 = vmatprep.subr.mxu0 0.0
    %946 = vmatpush1.msra.mxu0 0.0
    %947 = vmatprep.subr.mxu0 0.0
    %948 = vmatpush1.msra.mxu0 0.0
    %949 = vmatprep.subr.mxu0 0.0
    %950 = vmatpush1.msra.mxu0 0.0
    %951 = vmatprep.subr.mxu0 0.0
    %952 = vmatpush1.msra.mxu0 0.0
    %953 = vmatprep.subr.mxu0 0.0
    %954 = vmatpush1.msra.mxu0 %v918
    %955 = vmatprep.subr.mxu0 0.0
    %956 = vmatpush2.msra.mxu0 0.0
    %957 = vmatprep.subr.mxu0 0.0
    %958 = vmatpush2.msra.mxu0 0.0
    %959 = vmatprep.subr.mxu0 0.0
    %960 = vmatpush2.msra.mxu0 0.0
    %961 = vmatprep.subr.mxu0 0.0
    %962 = vmatpush2.msra.mxu0 0.0
    %963 = vmatprep.subr.mxu0 0.0
    %964 = vmatpush2.msra.mxu0 0.0
    %965 = vmatprep.subr.mxu0 0.0
    %966 = vmatpush2.msra.mxu0 0.0
    %967 = vmatprep.subr.mxu0 0.0
    %968 = vmatpush2.msra.mxu0 0.0
    %969 = vmatprep.subr.mxu0 0.0
    %970 = vmatpush2.msra.mxu0 0.0
    %971 = vmatprep.subr.mxu0 0.0
    %972 = vmatpush2.msra.mxu0 0.0
    %973 = vmatprep.subr.mxu0 0.0
    %974 = vmatpush2.msra.mxu0 0.0
    %975 = vmatprep.subr.mxu0 0.0
    %976 = vmatpush2.msra.mxu0 0.0
    %977 = vmatprep.subr.mxu0 0.0
    %978 = vmatpush2.msra.mxu0 0.0
    %979 = vmatprep.subr.mxu0 0.0
    %980 = vmatpush2.msra.mxu0 0.0
    %981 = vmatprep.subr.mxu0 0.0
    %982 = vmatpush2.msra.mxu0 0.0
    %983 = vmatprep.subr.mxu0 0.0
    %984 = vmatpush2.msra.mxu0 0.0
    %985 = vmatprep.subr.mxu0 0.0
    %986 = vmatpush2.msra.mxu0 0.0
    %987 = vmatprep.mubr.f32.mxu0 0.0
    %988 = vmatmul.mubr.f32.gmra.mxu0 %v921
    %v989 = vpop.f32.mrf.mxu0
    %v990 = vadd.f32 0.0, %v989
    %v991 = vpop.f32.mrf.mxu0
    %992 = vdwg.mxu0
    %v994 = vsel %vm265, %v990, 0
    %996 = vmatprep.subr.mxu0 0.0
    %997 = vmatpush1.msra.mxu0 0.0
    %998 = vmatprep.subr.mxu0 0.0
    %999 = vmatpush1.msra.mxu0 0.0
    %1000 = vmatprep.subr.mxu0 0.0
    %1001 = vmatpush1.msra.mxu0 0.0
    %1002 = vmatprep.subr.mxu0 0.0
    %1003 = vmatpush1.msra.mxu0 0.0
    %1004 = vmatprep.subr.mxu0 0.0
    %1005 = vmatpush1.msra.mxu0 0.0
    %1006 = vmatprep.subr.mxu0 0.0
    %1007 = vmatpush1.msra.mxu0 0.0
    %1008 = vmatprep.subr.mxu0 0.0
    %1009 = vmatpush1.msra.mxu0 0.0
    %1010 = vmatprep.subr.mxu0 0.0
    %1011 = vmatpush1.msra.mxu0 0.0
    %1012 = vmatprep.subr.mxu0 0.0
    %1013 = vmatpush1.msra.mxu0 0.0
    %1014 = vmatprep.subr.mxu0 0.0
    %1015 = vmatpush1.msra.mxu0 0.0
    %1016 = vmatprep.subr.mxu0 0.0
    %1017 = vmatpush1.msra.mxu0 0.0
    %1018 = vmatprep.subr.mxu0 0.0
    %1019 = vmatpush1.msra.mxu0 0.0
    %1020 = vmatprep.subr.mxu0 0.0
    %1021 = vmatpush1.msra.mxu0 0.0
    %1022 = vmatprep.subr.mxu0 0.0
    %1023 = vmatpush1.msra.mxu0 0.0
    %1024 = vmatprep.subr.mxu0 0.0
    %1025 = vmatpush1.msra.mxu0 %v660
    %1026 = vmatprep.subr.mxu0 0.0
    %1027 = vmatpush1.msra.mxu0 %v659
    %1028 = vmatprep.subr.mxu0 0.0
    %1029 = vmatpush2.msra.mxu0 0.0
    %1030 = vmatprep.subr.mxu0 0.0
    %1031 = vmatpush2.msra.mxu0 0.0
    %1032 = vmatprep.subr.mxu0 0.0
    %1033 = vmatpush2.msra.mxu0 0.0
    %1034 = vmatprep.subr.mxu0 0.0
    %1035 = vmatpush2.msra.mxu0 0.0
    %1036 = vmatprep.subr.mxu0 0.0
    %1037 = vmatpush2.msra.mxu0 0.0
    %1038 = vmatprep.subr.mxu0 0.0
    %1039 = vmatpush2.msra.mxu0 0.0
    %1040 = vmatprep.subr.mxu0 0.0
    %1041 = vmatpush2.msra.mxu0 0.0
    %1042 = vmatprep.subr.mxu0 0.0
    %1043 = vmatpush2.msra.mxu0 0.0
    %1044 = vmatprep.subr.mxu0 0.0
    %1045 = vmatpush2.msra.mxu0 0.0
    %1046 = vmatprep.subr.mxu0 0.0
    %1047 = vmatpush2.msra.mxu0 0.0
    %1048 = vmatprep.subr.mxu0 0.0
    %1049 = vmatpush2.msra.mxu0 0.0
    %1050 = vmatprep.subr.mxu0 0.0
    %1051 = vmatpush2.msra.mxu0 0.0
    %1052 = vmatprep.subr.mxu0 0.0
    %1053 = vmatpush2.msra.mxu0 0.0
    %1054 = vmatprep.subr.mxu0 0.0
    %1055 = vmatpush2.msra.mxu0 0.0
    %1056 = vmatprep.subr.mxu0 0.0
    %1057 = vmatpush2.msra.mxu0 0.0
    %1058 = vmatprep.subr.mxu0 0.0
    %1059 = vmatpush2.msra.mxu0 0.0
    %1060 = vmatprep.mubr.f32.mxu0 0.0
    %1061 = vmatmul.mubr.f32.gmra.mxu0 %v994
    %v1062 = vpop.f32.mrf.mxu0
    %v1063 = vadd.f32 0.0, %v1062
    %v1064 = vpop.f32.mrf.mxu0
    %1065 = vdwg.mxu0
    %v1067 = vsel %vm265, %v824, 0
    %1069 = vmatprep.subr.mxu0 0.0
    %1070 = vmatpush1.msra.mxu0 0.0
    %1071 = vmatprep.subr.mxu0 0.0
    %1072 = vmatpush1.msra.mxu0 0.0
    %1073 = vmatprep.subr.mxu0 0.0
    %1074 = vmatpush1.msra.mxu0 0.0
    %1075 = vmatprep.subr.mxu0 0.0
    %1076 = vmatpush1.msra.mxu0 0.0
    %1077 = vmatprep.subr.mxu0 0.0
    %1078 = vmatpush1.msra.mxu0 0.0
    %1079 = vmatprep.subr.mxu0 0.0
    %1080 = vmatpush1.msra.mxu0 0.0
    %1081 = vmatprep.subr.mxu0 0.0
    %1082 = vmatpush1.msra.mxu0 0.0
    %1083 = vmatprep.subr.mxu0 0.0
    %1084 = vmatpush1.msra.mxu0 0.0
    %1085 = vmatprep.subr.mxu0 0.0
    %1086 = vmatpush1.msra.mxu0 0.0
    %1087 = vmatprep.subr.mxu0 0.0
    %1088 = vmatpush1.msra.mxu0 0.0
    %1089 = vmatprep.subr.mxu0 0.0
    %1090 = vmatpush1.msra.mxu0 0.0
    %1091 = vmatprep.subr.mxu0 0.0
    %1092 = vmatpush1.msra.mxu0 0.0
    %1093 = vmatprep.subr.mxu0 0.0
    %1094 = vmatpush1.msra.mxu0 0.0
    %1095 = vmatprep.subr.mxu0 0.0
    %1096 = vmatpush1.msra.mxu0 0.0
    %1097 = vmatprep.subr.mxu0 0.0
    %1098 = vmatpush1.msra.mxu0 %v658
    %1099 = vmatprep.subr.mxu0 0.0
    %1100 = vmatpush1.msra.mxu0 %v657
    %1101 = vmatprep.subr.mxu0 0.0
    %1102 = vmatpush2.msra.mxu0 0.0
    %1103 = vmatprep.subr.mxu0 0.0
    %1104 = vmatpush2.msra.mxu0 0.0
    %1105 = vmatprep.subr.mxu0 0.0
    %1106 = vmatpush2.msra.mxu0 0.0
    %1107 = vmatprep.subr.mxu0 0.0
    %1108 = vmatpush2.msra.mxu0 0.0
    %1109 = vmatprep.subr.mxu0 0.0
    %1110 = vmatpush2.msra.mxu0 0.0
    %1111 = vmatprep.subr.mxu0 0.0
    %1112 = vmatpush2.msra.mxu0 0.0
    %1113 = vmatprep.subr.mxu0 0.0
    %1114 = vmatpush2.msra.mxu0 0.0
    %1115 = vmatprep.subr.mxu0 0.0
    %1116 = vmatpush2.msra.mxu0 0.0
    %1117 = vmatprep.subr.mxu0 0.0
    %1118 = vmatpush2.msra.mxu0 0.0
    %1119 = vmatprep.subr.mxu0 0.0
    %1120 = vmatpush2.msra.mxu0 0.0
    %1121 = vmatprep.subr.mxu0 0.0
    %1122 = vmatpush2.msra.mxu0 0.0
    %1123 = vmatprep.subr.mxu0 0.0
    %1124 = vmatpush2.msra.mxu0 0.0
    %1125 = vmatprep.subr.mxu0 0.0
    %1126 = vmatpush2.msra.mxu0 0.0
    %1127 = vmatprep.subr.mxu0 0.0
    %1128 = vmatpush2.msra.mxu0 0.0
    %1129 = vmatprep.subr.mxu0 0.0
    %1130 = vmatpush2.msra.mxu0 0.0
    %1131 = vmatprep.subr.mxu0 0.0
    %1132 = vmatpush2.msra.mxu0 0.0
    %1133 = vmatprep.mubr.f32.mxu0 0.0
    %1134 = vmatmul.mubr.f32.gmra.mxu0 %v1067
    %v1135 = vpop.f32.mrf.mxu0
    %v1136 = vadd.f32 %v1063, %v1135
    %v1137 = vpop.f32.mrf.mxu0
    %1138 = vdwg.mxu0
    %1140 = vrot.lane.b32.xlu0 %v654, 96
    %v1141 = vpop.permute.xlu0 %1140
    %v1142 = vsel %vm265, %v654, 0
    %v1144 = vsel %vm265, %v1141, 0
    %1146 = vmatprep.subr.mxu0 0.0
    %1147 = vmatpush1.xpose.msra.mxu0 0.0
    %1148 = vmatprep.subr.mxu0 0.0
    %1149 = vmatpush1.xpose.msra.mxu0 0.0
    %1150 = vmatprep.subr.mxu0 0.0
    %1151 = vmatpush1.xpose.msra.mxu0 0.0
    %1152 = vmatprep.subr.mxu0 0.0
    %1153 = vmatpush1.xpose.msra.mxu0 0.0
    %1154 = vmatprep.subr.mxu0 0.0
    %1155 = vmatpush1.xpose.msra.mxu0 0.0
    %1156 = vmatprep.subr.mxu0 0.0
    %1157 = vmatpush1.xpose.msra.mxu0 0.0
    %1158 = vmatprep.subr.mxu0 0.0
    %1159 = vmatpush1.xpose.msra.mxu0 0.0
    %1160 = vmatprep.subr.mxu0 0.0
    %1161 = vmatpush1.xpose.msra.mxu0 0.0
    %1162 = vmatprep.subr.mxu0 0.0
    %1163 = vmatpush1.xpose.msra.mxu0 0.0
    %1164 = vmatprep.subr.mxu0 0.0
    %1165 = vmatpush1.xpose.msra.mxu0 0.0
    %1166 = vmatprep.subr.mxu0 0.0
    %1167 = vmatpush1.xpose.msra.mxu0 0.0
    %1168 = vmatprep.subr.mxu0 0.0
    %1169 = vmatpush1.xpose.msra.mxu0 0.0
    %1170 = vmatprep.subr.mxu0 0.0
    %1171 = vmatpush1.xpose.msra.mxu0 0.0
    %1172 = vmatprep.subr.mxu0 0.0
    %1173 = vmatpush1.xpose.msra.mxu0 0.0
    %1174 = vmatprep.subr.mxu0 0.0
    %1175 = vmatpush1.xpose.msra.mxu0 0.0
    %1176 = vmatprep.subr.mxu0 0.0
    %1177 = vmatpush1.xpose.msra.mxu0 %v1144
    %1178 = vmatprep.subr.mxu0 0.0
    %1179 = vmatpush2.xpose.msra.mxu0 0.0
    %1180 = vmatprep.subr.mxu0 0.0
    %1181 = vmatpush2.xpose.msra.mxu0 0.0
    %1182 = vmatprep.subr.mxu0 0.0
    %1183 = vmatpush2.xpose.msra.mxu0 0.0
    %1184 = vmatprep.subr.mxu0 0.0
    %1185 = vmatpush2.xpose.msra.mxu0 0.0
    %1186 = vmatprep.subr.mxu0 0.0
    %1187 = vmatpush2.xpose.msra.mxu0 0.0
    %1188 = vmatprep.subr.mxu0 0.0
    %1189 = vmatpush2.xpose.msra.mxu0 0.0
    %1190 = vmatprep.subr.mxu0 0.0
    %1191 = vmatpush2.xpose.msra.mxu0 0.0
    %1192 = vmatprep.subr.mxu0 0.0
    %1193 = vmatpush2.xpose.msra.mxu0 0.0
    %1194 = vmatprep.subr.mxu0 0.0
    %1195 = vmatpush2.xpose.msra.mxu0 0.0
    %1196 = vmatprep.subr.mxu0 0.0
    %1197 = vmatpush2.xpose.msra.mxu0 0.0
    %1198 = vmatprep.subr.mxu0 0.0
    %1199 = vmatpush2.xpose.msra.mxu0 0.0
    %1200 = vmatprep.subr.mxu0 0.0
    %1201 = vmatpush2.xpose.msra.mxu0 0.0
    %1202 = vmatprep.subr.mxu0 0.0
    %1203 = vmatpush2.xpose.msra.mxu0 0.0
    %1204 = vmatprep.subr.mxu0 0.0
    %1205 = vmatpush2.xpose.msra.mxu0 0.0
    %1206 = vmatprep.subr.mxu0 0.0
    %1207 = vmatpush2.xpose.msra.mxu0 0.0
    %1208 = vmatprep.subr.mxu0 0.0
    %1209 = vmatpush2.xpose.msra.mxu0 0.0
    %1210 = vmatprep.mubr.f32.mxu0 0.0
    %1211 = vmatmul.mubr.f32.gmra.mxu0 %v1142
    %v1212 = vpop.f32.mrf.mxu0
    %v1213 = vadd.f32 0.0, %v1212
    %v1214 = vpop.f32.mrf.mxu0
    %1215 = vdwg.mxu0
    %v1216 = vmul.f32 %v1213, 0.25
    %v1217 = vsel %vm739, %v1216, -inf
    %1218 = vmax.xlane.f32.xlu0 %v1217
    %v1219 = vpop.xlane.xlu0 %1218
    %v1220 = vsub.f32 %v1216, %v1219
    %v1221 = vmul.f32 %v1220, 1.442695
    %v1222 = vpow.pop %v1221
    %v1223 = vsel %vm739, %v1222, 0.0
    %1224 = vadd.xlane.f32.xlu0 %v1223
    %v1225 = vpop.xlane.xlu0 %1224
    %v1226 = vrcp.pop %v1225
    %v1227 = vmul.f32 %v1222, %v1226
    %1228 = vrot.lane.b32.xlu0 %v654, 64
    %v1229 = vpop.permute.xlu0 %1228
    %v1232 = vsel %vm739, %v1227, 0
    %1234 = vmatprep.subr.mxu0 0.0
    %1235 = vmatpush1.msra.mxu0 0.0
    %1236 = vmatprep.subr.mxu0 0.0
    %1237 = vmatpush1.msra.mxu0 0.0
    %1238 = vmatprep.subr.mxu0 0.0
    %1239 = vmatpush1.msra.mxu0 0.0
    %1240 = vmatprep.subr.mxu0 0.0
    %1241 = vmatpush1.msra.mxu0 0.0
    %1242 = vmatprep.subr.mxu0 0.0
    %1243 = vmatpush1.msra.mxu0 0.0
    %1244 = vmatprep.subr.mxu0 0.0
    %1245 = vmatpush1.msra.mxu0 0.0
    %1246 = vmatprep.subr.mxu0 0.0
    %1247 = vmatpush1.msra.mxu0 0.0
    %1248 = vmatprep.subr.mxu0 0.0
    %1249 = vmatpush1.msra.mxu0 0.0
    %1250 = vmatprep.subr.mxu0 0.0
    %1251 = vmatpush1.msra.mxu0 0.0
    %1252 = vmatprep.subr.mxu0 0.0
    %1253 = vmatpush1.msra.mxu0 0.0
    %1254 = vmatprep.subr.mxu0 0.0
    %1255 = vmatpush1.msra.mxu0 0.0
    %1256 = vmatprep.subr.mxu0 0.0
    %1257 = vmatpush1.msra.mxu0 0.0
    %1258 = vmatprep.subr.mxu0 0.0
    %1259 = vmatpush1.msra.mxu0 0.0
    %1260 = vmatprep.subr.mxu0 0.0
    %1261 = vmatpush1.msra.mxu0 0.0
    %1262 = vmatprep.subr.mxu0 0.0
    %1263 = vmatpush1.msra.mxu0 0.0
    %1264 = vmatprep.subr.mxu0 0.0
    %1265 = vmatpush1.msra.mxu0 %v1229
    %1266 = vmatprep.subr.mxu0 0.0
    %1267 = vmatpush2.msra.mxu0 0.0
    %1268 = vmatprep.subr.mxu0 0.0
    %1269 = vmatpush2.msra.mxu0 0.0
    %1270 = vmatprep.subr.mxu0 0.0
    %1271 = vmatpush2.msra.mxu0 0.0
    %1272 = vmatprep.subr.mxu0 0.0
    %1273 = vmatpush2.msra.mxu0 0.0
    %1274 = vmatprep.subr.mxu0 0.0
    %1275 = vmatpush2.msra.mxu0 0.0
    %1276 = vmatprep.subr.mxu0 0.0
    %1277 = vmatpush2.msra.mxu0 0.0
    %1278 = vmatprep.subr.mxu0 0.0
    %1279 = vmatpush2.msra.mxu0 0.0
    %1280 = vmatprep.subr.mxu0 0.0
    %1281 = vmatpush2.msra.mxu0 0.0
    %1282 = vmatprep.subr.mxu0 0.0
    %1283 = vmatpush2.msra.mxu0 0.0
    %1284 = vmatprep.subr.mxu0 0.0
    %1285 = vmatpush2.msra.mxu0 0.0
    %1286 = vmatprep.subr.mxu0 0.0
    %1287 = vmatpush2.msra.mxu0 0.0
    %1288 = vmatprep.subr.mxu0 0.0
    %1289 = vmatpush2.msra.mxu0 0.0
    %1290 = vmatprep.subr.mxu0 0.0
    %1291 = vmatpush2.msra.mxu0 0.0
    %1292 = vmatprep.subr.mxu0 0.0
    %1293 = vmatpush2.msra.mxu0 0.0
    %1294 = vmatprep.subr.mxu0 0.0
    %1295 = vmatpush2.msra.mxu0 0.0
    %1296 = vmatprep.subr.mxu0 0.0
    %1297 = vmatpush2.msra.mxu0 0.0
    %1298 = vmatprep.mubr.f32.mxu0 0.0
    %1299 = vmatmul.mubr.f32.gmra.mxu0 %v1232
    %v1300 = vpop.f32.mrf.mxu0
    %v1301 = vadd.f32 0.0, %v1300
    %v1302 = vpop.f32.mrf.mxu0
    %1303 = vdwg.mxu0
    %1304 = vrot.lane.b32.xlu0 %v654, 112
    %v1305 = vpop.permute.xlu0 %1304
    %1306 = vrot.lane.b32.xlu0 %v654, 80
    %v1307 = vpop.permute.xlu0 %1306
    %v1308 = vsel %vm265, %v1305, 0
    %v1310 = vsel %vm265, %v1307, 0
    %1312 = vmatprep.subr.mxu0 0.0
    %1313 = vmatpush1.xpose.msra.mxu0 0.0
    %1314 = vmatprep.subr.mxu0 0.0
    %1315 = vmatpush1.xpose.msra.mxu0 0.0
    %1316 = vmatprep.subr.mxu0 0.0
    %1317 = vmatpush1.xpose.msra.mxu0 0.0
    %1318 = vmatprep.subr.mxu0 0.0
    %1319 = vmatpush1.xpose.msra.mxu0 0.0
    %1320 = vmatprep.subr.mxu0 0.0
    %1321 = vmatpush1.xpose.msra.mxu0 0.0
    %1322 = vmatprep.subr.mxu0 0.0
    %1323 = vmatpush1.xpose.msra.mxu0 0.0
    %1324 = vmatprep.subr.mxu0 0.0
    %1325 = vmatpush1.xpose.msra.mxu0 0.0
    %1326 = vmatprep.subr.mxu0 0.0
    %1327 = vmatpush1.xpose.msra.mxu0 0.0
    %1328 = vmatprep.subr.mxu0 0.0
    %1329 = vmatpush1.xpose.msra.mxu0 0.0
    %1330 = vmatprep.subr.mxu0 0.0
    %1331 = vmatpush1.xpose.msra.mxu0 0.0
    %1332 = vmatprep.subr.mxu0 0.0
    %1333 = vmatpush1.xpose.msra.mxu0 0.0
    %1334 = vmatprep.subr.mxu0 0.0
    %1335 = vmatpush1.xpose.msra.mxu0 0.0
    %1336 = vmatprep.subr.mxu0 0.0
    %1337 = vmatpush1.xpose.msra.mxu0 0.0
    %1338 = vmatprep.subr.mxu0 0.0
    %1339 = vmatpush1.xpose.msra.mxu0 0.0
    %1340 = vmatprep.subr.mxu0 0.0
    %1341 = vmatpush1.xpose.msra.mxu0 0.0
    %1342 = vmatprep.subr.mxu0 0.0
    %1343 = vmatpush1.xpose.msra.mxu0 %v1310
    %1344 = vmatprep.subr.mxu0 0.0
    %1345 = vmatpush2.xpose.msra.mxu0 0.0
    %1346 = vmatprep.subr.mxu0 0.0
    %1347 = vmatpush2.xpose.msra.mxu0 0.0
    %1348 = vmatprep.subr.mxu0 0.0
    %1349 = vmatpush2.xpose.msra.mxu0 0.0
    %1350 = vmatprep.subr.mxu0 0.0
    %1351 = vmatpush2.xpose.msra.mxu0 0.0
    %1352 = vmatprep.subr.mxu0 0.0
    %1353 = vmatpush2.xpose.msra.mxu0 0.0
    %1354 = vmatprep.subr.mxu0 0.0
    %1355 = vmatpush2.xpose.msra.mxu0 0.0
    %1356 = vmatprep.subr.mxu0 0.0
    %1357 = vmatpush2.xpose.msra.mxu0 0.0
    %1358 = vmatprep.subr.mxu0 0.0
    %1359 = vmatpush2.xpose.msra.mxu0 0.0
    %1360 = vmatprep.subr.mxu0 0.0
    %1361 = vmatpush2.xpose.msra.mxu0 0.0
    %1362 = vmatprep.subr.mxu0 0.0
    %1363 = vmatpush2.xpose.msra.mxu0 0.0
    %1364 = vmatprep.subr.mxu0 0.0
    %1365 = vmatpush2.xpose.msra.mxu0 0.0
    %1366 = vmatprep.subr.mxu0 0.0
    %1367 = vmatpush2.xpose.msra.mxu0 0.0
    %1368 = vmatprep.subr.mxu0 0.0
    %1369 = vmatpush2.xpose.msra.mxu0 0.0
    %1370 = vmatprep.subr.mxu0 0.0
    %1371 = vmatpush2.xpose.msra.mxu0 0.0
    %1372 = vmatprep.subr.mxu0 0.0
    %1373 = vmatpush2.xpose.msra.mxu0 0.0
    %1374 = vmatprep.subr.mxu0 0.0
    %1375 = vmatpush2.xpose.msra.mxu0 0.0
    %1376 = vmatprep.mubr.f32.mxu0 0.0
    %1377 = vmatmul.mubr.f32.gmra.mxu0 %v1308
    %v1378 = vpop.f32.mrf.mxu0
    %v1379 = vadd.f32 0.0, %v1378
    %v1380 = vpop.f32.mrf.mxu0
    %1381 = vdwg.mxu0
    %v1382 = vmul.f32 %v1379, 0.25
    %v1383 = vsel %vm739, %v1382, -inf
    %1384 = vmax.xlane.f32.xlu0 %v1383
    %v1385 = vpop.xlane.xlu0 %1384
    %v1386 = vsub.f32 %v1382, %v1385
    %v1387 = vmul.f32 %v1386, 1.442695
    %v1388 = vpow.pop %v1387
    %v1389 = vsel %vm739, %v1388, 0.0
    %1390 = vadd.xlane.f32.xlu0 %v1389
    %v1391 = vpop.xlane.xlu0 %1390
    %v1392 = vrcp.pop %v1391
    %v1393 = vmul.f32 %v1388, %v1392
    %1394 = vrot.lane.b32.xlu0 %v654, 48
    %v1395 = vpop.permute.xlu0 %1394
    %v1398 = vsel %vm739, %v1393, 0
    %1400 = vmatprep.subr.mxu0 0.0
    %1401 = vmatpush1.msra.mxu0 0.0
    %1402 = vmatprep.subr.mxu0 0.0
    %1403 = vmatpush1.msra.mxu0 0.0
    %1404 = vmatprep.subr.mxu0 0.0
    %1405 = vmatpush1.msra.mxu0 0.0
    %1406 = vmatprep.subr.mxu0 0.0
    %1407 = vmatpush1.msra.mxu0 0.0
    %1408 = vmatprep.subr.mxu0 0.0
    %1409 = vmatpush1.msra.mxu0 0.0
    %1410 = vmatprep.subr.mxu0 0.0
    %1411 = vmatpush1.msra.mxu0 0.0
    %1412 = vmatprep.subr.mxu0 0.0
    %1413 = vmatpush1.msra.mxu0 0.0
    %1414 = vmatprep.subr.mxu0 0.0
    %1415 = vmatpush1.msra.mxu0 0.0
    %1416 = vmatprep.subr.mxu0 0.0
    %1417 = vmatpush1.msra.mxu0 0.0
    %1418 = vmatprep.subr.mxu0 0.0
    %1419 = vmatpush1.msra.mxu0 0.0
    %1420 = vmatprep.subr.mxu0 0.0
    %1421 = vmatpush1.msra.mxu0 0.0
    %1422 = vmatprep.subr.mxu0 0.0
    %1423 = vmatpush1.msra.mxu0 0.0
    %1424 = vmatprep.subr.mxu0 0.0
    %1425 = vmatpush1.msra.mxu0 0.0
    %1426 = vmatprep.subr.mxu0 0.0
    %1427 = vmatpush1.msra.mxu0 0.0
    %1428 = vmatprep.subr.mxu0 0.0
    %1429 = vmatpush1.msra.mxu0 0.0
    %1430 = vmatprep.subr.mxu0 0.0
    %1431 = vmatpush1.msra.mxu0 %v1395
    %1432 = vmatprep.subr.mxu0 0.0
    %1433 = vmatpush2.msra.mxu0 0.0
    %1434 = vmatprep.subr.mxu0 0.0
    %1435 = vmatpush2.msra.mxu0 0.0
    %1436 = vmatprep.subr.mxu0 0.0
    %1437 = vmatpush2.msra.mxu0 0.0
    %1438 = vmatprep.subr.mxu0 0.0
    %1439 = vmatpush2.msra.mxu0 0.0
    %1440 = vmatprep.subr.mxu0 0.0
    %1441 = vmatpush2.msra.mxu0 0.0
    %1442 = vmatprep.subr.mxu0 0.0
    %1443 = vmatpush2.msra.mxu0 0.0
    %1444 = vmatprep.subr.mxu0 0.0
    %1445 = vmatpush2.msra.mxu0 0.0
    %1446 = vmatprep.subr.mxu0 0.0
    %1447 = vmatpush2.msra.mxu0 0.0
    %1448 = vmatprep.subr.mxu0 0.0
    %1449 = vmatpush2.msra.mxu0 0.0
    %1450 = vmatprep.subr.mxu0 0.0
    %1451 = vmatpush2.msra.mxu0 0.0
    %1452 = vmatprep.subr.mxu0 0.0
    %1453 = vmatpush2.msra.mxu0 0.0
    %1454 = vmatprep.subr.mxu0 0.0
    %1455 = vmatpush2.msra.mxu0 0.0
    %1456 = vmatprep.subr.mxu0 0.0
    %1457 = vmatpush2.msra.mxu0 0.0
    %1458 = vmatprep.subr.mxu0 0.0
    %1459 = vmatpush2.msra.mxu0 0.0
    %1460 = vmatprep.subr.mxu0 0.0
    %1461 = vmatpush2.msra.mxu0 0.0
    %1462 = vmatprep.subr.mxu0 0.0
    %1463 = vmatpush2.msra.mxu0 0.0
    %1464 = vmatprep.mubr.f32.mxu0 0.0
    %1465 = vmatmul.mubr.f32.gmra.mxu0 %v1398
    %v1466 = vpop.f32.mrf.mxu0
    %v1467 = vadd.f32 0.0, %v1466
    %v1468 = vpop.f32.mrf.mxu0
    %1469 = vdwg.mxu0
    %v1471 = vsel %vm265, %v1467, 0
    %1473 = vmatprep.subr.mxu0 0.0
    %1474 = vmatpush1.msra.mxu0 0.0
    %1475 = vmatprep.subr.mxu0 0.0
    %1476 = vmatpush1.msra.mxu0 0.0
    %1477 = vmatprep.subr.mxu0 0.0
    %1478 = vmatpush1.msra.mxu0 0.0
    %1479 = vmatprep.subr.mxu0 0.0
    %1480 = vmatpush1.msra.mxu0 0.0
    %1481 = vmatprep.subr.mxu0 0.0
    %1482 = vmatpush1.msra.mxu0 0.0
    %1483 = vmatprep.subr.mxu0 0.0
    %1484 = vmatpush1.msra.mxu0 0.0
    %1485 = vmatprep.subr.mxu0 0.0
    %1486 = vmatpush1.msra.mxu0 0.0
    %1487 = vmatprep.subr.mxu0 0.0
    %1488 = vmatpush1.msra.mxu0 0.0
    %1489 = vmatprep.subr.mxu0 0.0
    %1490 = vmatpush1.msra.mxu0 0.0
    %1491 = vmatprep.subr.mxu0 0.0
    %1492 = vmatpush1.msra.mxu0 0.0
    %1493 = vmatprep.subr.mxu0 0.0
    %1494 = vmatpush1.msra.mxu0 0.0
    %1495 = vmatprep.subr.mxu0 0.0
    %1496 = vmatpush1.msra.mxu0 0.0
    %1497 = vmatprep.subr.mxu0 0.0
    %1498 = vmatpush1.msra.mxu0 0.0
    %1499 = vmatprep.subr.mxu0 0.0
    %1500 = vmatpush1.msra.mxu0 0.0
    %1501 = vmatprep.subr.mxu0 0.0
    %1502 = vmatpush1.msra.mxu0 %v660
    %1503 = vmatprep.subr.mxu0 0.0
    %1504 = vmatpush1.msra.mxu0 %v659
    %1505 = vmatprep.subr.mxu0 0.0
    %1506 = vmatpush2.msra.mxu0 0.0
    %1507 = vmatprep.subr.mxu0 0.0
    %1508 = vmatpush2.msra.mxu0 0.0
    %1509 = vmatprep.subr.mxu0 0.0
    %1510 = vmatpush2.msra.mxu0 0.0
    %1511 = vmatprep.subr.mxu0 0.0
    %1512 = vmatpush2.msra.mxu0 0.0
    %1513 = vmatprep.subr.mxu0 0.0
    %1514 = vmatpush2.msra.mxu0 0.0
    %1515 = vmatprep.subr.mxu0 0.0
    %1516 = vmatpush2.msra.mxu0 0.0
    %1517 = vmatprep.subr.mxu0 0.0
    %1518 = vmatpush2.msra.mxu0 0.0
    %1519 = vmatprep.subr.mxu0 0.0
    %1520 = vmatpush2.msra.mxu0 0.0
    %1521 = vmatprep.subr.mxu0 0.0
    %1522 = vmatpush2.msra.mxu0 0.0
    %1523 = vmatprep.subr.mxu0 0.0
    %1524 = vmatpush2.msra.mxu0 0.0
    %1525 = vmatprep.subr.mxu0 0.0
    %1526 = vmatpush2.msra.mxu0 0.0
    %1527 = vmatprep.subr.mxu0 0.0
    %1528 = vmatpush2.msra.mxu0 0.0
    %1529 = vmatprep.subr.mxu0 0.0
    %1530 = vmatpush2.msra.mxu0 0.0
    %1531 = vmatprep.subr.mxu0 0.0
    %1532 = vmatpush2.msra.mxu0 0.0
    %1533 = vmatprep.subr.mxu0 0.0
    %1534 = vmatpush2.msra.mxu0 0.0
    %1535 = vmatprep.subr.mxu0 0.0
    %1536 = vmatpush2.msra.mxu0 0.0
    %1537 = vmatprep.mubr.f32.mxu0 0.0
    %1538 = vmatmul.mubr.f32.gmra.mxu0 %v1471
    %v1539 = vpop.f32.mrf.mxu0
    %v1540 = vadd.f32 0.0, %v1539
    %v1541 = vpop.f32.mrf.mxu0
    %1542 = vdwg.mxu0
    %v1544 = vsel %vm265, %v1301, 0
    %1546 = vmatprep.subr.mxu0 0.0
    %1547 = vmatpush1.msra.mxu0 0.0
    %1548 = vmatprep.subr.mxu0 0.0
    %1549 = vmatpush1.msra.mxu0 0.0
    %1550 = vmatprep.subr.mxu0 0.0
    %1551 = vmatpush1.msra.mxu0 0.0
    %1552 = vmatprep.subr.mxu0 0.0
    %1553 = vmatpush1.msra.mxu0 0.0
    %1554 = vmatprep.subr.mxu0 0.0
    %1555 = vmatpush1.msra.mxu0 0.0
    %1556 = vmatprep.subr.mxu0 0.0
    %1557 = vmatpush1.msra.mxu0 0.0
    %1558 = vmatprep.subr.mxu0 0.0
    %1559 = vmatpush1.msra.mxu0 0.0
    %1560 = vmatprep.subr.mxu0 0.0
    %1561 = vmatpush1.msra.mxu0 0.0
    %1562 = vmatprep.subr.mxu0 0.0
    %1563 = vmatpush1.msra.mxu0 0.0
    %1564 = vmatprep.subr.mxu0 0.0
    %1565 = vmatpush1.msra.mxu0 0.0
    %1566 = vmatprep.subr.mxu0 0.0
    %1567 = vmatpush1.msra.mxu0 0.0
    %1568 = vmatprep.subr.mxu0 0.0
    %1569 = vmatpush1.msra.mxu0 0.0
    %1570 = vmatprep.subr.mxu0 0.0
    %1571 = vmatpush1.msra.mxu0 0.0
    %1572 = vmatprep.subr.mxu0 0.0
    %1573 = vmatpush1.msra.mxu0 0.0
    %1574 = vmatprep.subr.mxu0 0.0
    %1575 = vmatpush1.msra.mxu0 %v658
    %1576 = vmatprep.subr.mxu0 0.0
    %1577 = vmatpush1.msra.mxu0 %v657
    %1578 = vmatprep.subr.mxu0 0.0
    %1579 = vmatpush2.msra.mxu0 0.0
    %1580 = vmatprep.subr.mxu0 0.0
    %1581 = vmatpush2.msra.mxu0 0.0
    %1582 = vmatprep.subr.mxu0 0.0
    %1583 = vmatpush2.msra.mxu0 0.0
    %1584 = vmatprep.subr.mxu0 0.0
    %1585 = vmatpush2.msra.mxu0 0.0
    %1586 = vmatprep.subr.mxu0 0.0
    %1587 = vmatpush2.msra.mxu0 0.0
    %1588 = vmatprep.subr.mxu0 0.0
    %1589 = vmatpush2.msra.mxu0 0.0
    %1590 = vmatprep.subr.mxu0 0.0
    %1591 = vmatpush2.msra.mxu0 0.0
    %1592 = vmatprep.subr.mxu0 0.0
    %1593 = vmatpush2.msra.mxu0 0.0
    %1594 = vmatprep.subr.mxu0 0.0
    %1595 = vmatpush2.msra.mxu0 0.0
    %1596 = vmatprep.subr.mxu0 0.0
    %1597 = vmatpush2.msra.mxu0 0.0
    %1598 = vmatprep.subr.mxu0 0.0
    %1599 = vmatpush2.msra.mxu0 0.0
    %1600 = vmatprep.subr.mxu0 0.0
    %1601 = vmatpush2.msra.mxu0 0.0
    %1602 = vmatprep.subr.mxu0 0.0
    %1603 = vmatpush2.msra.mxu0 0.0
    %1604 = vmatprep.subr.mxu0 0.0
    %1605 = vmatpush2.msra.mxu0 0.0
    %1606 = vmatprep.subr.mxu0 0.0
    %1607 = vmatpush2.msra.mxu0 0.0
    %1608 = vmatprep.subr.mxu0 0.0
    %1609 = vmatpush2.msra.mxu0 0.0
    %1610 = vmatprep.mubr.f32.mxu0 0.0
    %1611 = vmatmul.mubr.f32.gmra.mxu0 %v1544
    %v1612 = vpop.f32.mrf.mxu0
    %v1613 = vadd.f32 %v1540, %v1612
    %v1614 = vpop.f32.mrf.mxu0
    %1615 = vdwg.mxu0
    %v1616 = vld [vmem:[%s11] sm:$0x1]
    %v1618 = vlaneseq
    %v1619 = vshrl.u32 %v1618, 7
    %v1620 = vsub.s32 0, %v1619
    %v1621 = vrot.slane %v1616, %v1620
    %v1623 = vadd.f32 %v1136, %v1621
    %v1624 = vadd.f32 %v1613, %v1621
    %v1625 = vadd.f32 %v563, %v1623
    %v1626 = vadd.f32 %v564, %v1624
    %v1627 = vld [vmem:[%s12] sm:$0x1]
    %v1628 = vld [vmem:[%s13] sm:$0x1]
    %v1629 = vsel %vm92, %v1625, 0.0
    %1630 = vadd.xlane.f32.xlu0 %v1629
    %v1631 = vpop.xlane.xlu0 %1630
    %v1632 = vsel %vm92, %v1626, 0.0
    %1633 = vadd.xlane.f32.xlu0 %v1632
    %v1634 = vpop.xlane.xlu0 %1633
    %v1635 = vrcp.pop 32.0
    %v1636 = vmul.f32 %v1631, %v1635
    %v1637 = vmul.f32 %v1634, %v1635
    %v1638 = vsub.f32 %v1625, %v1636
    %v1639 = vsub.f32 %v1626, %v1637
    %v1640 = vmul.f32 %v1638, %v1638
    %v1641 = vmul.f32 %v1639, %v1639
    %v1642 = vsel %vm92, %v1640, 0.0
    %1643 = vadd.xlane.f32.xlu0 %v1642
    %v1644 = vpop.xlane.xlu0 %1643
    %v1645 = vsel %vm92, %v1641, 0.0
    %1646 = vadd.xlane.f32.xlu0 %v1645
    %v1647 = vpop.xlane.xlu0 %1646
    %v1648 = vmul.f32 %v1644, %v1635
    %v1649 = vmul.f32 %v1647, %v1635
    %v1650 = vadd.f32 %v1648, 1e-05
    %v1651 = vadd.f32 %v1649, 1e-05
    %v1652 = vrsqrt.pop %v1650
    %v1653 = vrsqrt.pop %v1651
    %v1654 = vmul.f32 %v1638, %v1652
    %v1655 = vmul.f32 %v1639, %v1653
    %v1657 = vlaneseq
    %v1658 = vshrl.u32 %v1657, 7
    %v1659 = vsub.s32 0, %v1658
    %v1660 = vrot.slane %v1627, %v1659
    %v1662 = vmul.f32 %v1654, %v1660
    %v1663 = vmul.f32 %v1655, %v1660
    %v1665 = vlaneseq
    %v1666 = vshrl.u32 %v1665, 7
    %v1667 = vsub.s32 0, %v1666
    %v1668 = vrot.slane %v1628, %v1667
    %v1670 = vadd.f32 %v1662, %v1668
    %v1671 = vadd.f32 %v1663, %v1668
    %v1672 = vld [vmem:[%s14] sm:$0xff]
    %v1673 = vld [vmem:[%s14 + $0x8] sm:$0xff]
    %v1674 = vld [vmem:[%s14 + $0x10] sm:$0xff]
    %v1675 = vld [vmem:[%s14 + $0x18] sm:$0xff]
    %v1676 = vld [vmem:[%s15] sm:$0x1]
    %v1678 = vlaneseq
    %v1679 = vshrl.u32 %v1678, 7
    %v1680 = vsub.s32 0, %v1679
    %v1681 = vrot.slane %v1676, %v1680
    %v1684 = vsel %vm92, %v1670, 0
    %v1687 = vsel %vm92, %v1671, 0
    %1689 = vmatprep.subr.mxu0 0.0
    %1690 = vmatpush1.msra.mxu0 0.0
    %1691 = vmatprep.subr.mxu0 0.0
    %1692 = vmatpush1.msra.mxu0 0.0
    %1693 = vmatprep.subr.mxu0 0.0
    %1694 = vmatpush1.msra.mxu0 0.0
    %1695 = vmatprep.subr.mxu0 0.0
    %1696 = vmatpush1.msra.mxu0 0.0
    %1697 = vmatprep.subr.mxu0 0.0
    %1698 = vmatpush1.msra.mxu0 0.0
    %1699 = vmatprep.subr.mxu0 0.0
    %1700 = vmatpush1.msra.mxu0 0.0
    %1701 = vmatprep.subr.mxu0 0.0
    %1702 = vmatpush1.msra.mxu0 0.0
    %1703 = vmatprep.subr.mxu0 0.0
    %1704 = vmatpush1.msra.mxu0 0.0
    %1705 = vmatprep.subr.mxu0 0.0
    %1706 = vmatpush1.msra.mxu0 0.0
    %1707 = vmatprep.subr.mxu0 0.0
    %1708 = vmatpush1.msra.mxu0 0.0
    %1709 = vmatprep.subr.mxu0 0.0
    %1710 = vmatpush1.msra.mxu0 0.0
    %1711 = vmatprep.subr.mxu0 0.0
    %1712 = vmatpush1.msra.mxu0 0.0
    %1713 = vmatprep.subr.mxu0 0.0
    %1714 = vmatpush1.msra.mxu0 %v1675
    %1715 = vmatprep.subr.mxu0 0.0
    %1716 = vmatpush1.msra.mxu0 %v1674
    %1717 = vmatprep.subr.mxu0 0.0
    %1718 = vmatpush1.msra.mxu0 %v1673
    %1719 = vmatprep.subr.mxu0 0.0
    %1720 = vmatpush1.msra.mxu0 %v1672
    %1721 = vmatprep.subr.mxu0 0.0
    %1722 = vmatpush2.msra.mxu0 0.0
    %1723 = vmatprep.subr.mxu0 0.0
    %1724 = vmatpush2.msra.mxu0 0.0
    %1725 = vmatprep.subr.mxu0 0.0
    %1726 = vmatpush2.msra.mxu0 0.0
    %1727 = vmatprep.subr.mxu0 0.0
    %1728 = vmatpush2.msra.mxu0 0.0
    %1729 = vmatprep.subr.mxu0 0.0
    %1730 = vmatpush2.msra.mxu0 0.0
    %1731 = vmatprep.subr.mxu0 0.0
    %1732 = vmatpush2.msra.mxu0 0.0
    %1733 = vmatprep.subr.mxu0 0.0
    %1734 = vmatpush2.msra.mxu0 0.0
    %1735 = vmatprep.subr.mxu0 0.0
    %1736 = vmatpush2.msra.mxu0 0.0
    %1737 = vmatprep.subr.mxu0 0.0
    %1738 = vmatpush2.msra.mxu0 0.0
    %1739 = vmatprep.subr.mxu0 0.0
    %1740 = vmatpush2.msra.mxu0 0.0
    %1741 = vmatprep.subr.mxu0 0.0
    %1742 = vmatpush2.msra.mxu0 0.0
    %1743 = vmatprep.subr.mxu0 0.0
    %1744 = vmatpush2.msra.mxu0 0.0
    %1745 = vmatprep.subr.mxu0 0.0
    %1746 = vmatpush2.msra.mxu0 0.0
    %1747 = vmatprep.subr.mxu0 0.0
    %1748 = vmatpush2.msra.mxu0 0.0
    %1749 = vmatprep.subr.mxu0 0.0
    %1750 = vmatpush2.msra.mxu0 0.0
    %1751 = vmatprep.subr.mxu0 0.0
    %1752 = vmatpush2.msra.mxu0 0.0
    %1753 = vmatprep.mubr.f32.mxu0 0.0
    %1754 = vmatmul.mubr.f32.gmra.mxu0 %v1684
    %v1755 = vpop.f32.mrf.mxu0
    %v1756 = vadd.f32 %v1681, %v1755
    %v1757 = vpop.f32.mrf.mxu0
    %1758 = vmatprep.mubr.f32.mxu0 0.0
    %1759 = vmatmul.mubr.f32.gmra.mxu0 %v1687
    %v1760 = vpop.f32.mrf.mxu0
    %v1761 = vadd.f32 %v1681, %v1760
    %v1762 = vpop.f32.mrf.mxu0
    %1763 = vdwg.mxu0
    %v1764 = vmax.f32 %v1756, 0.0
    %v1765 = vmax.f32 %v1761, 0.0
    %v1766 = vld [vmem:[%s16] sm:$0xff]
    %v1767 = vld [vmem:[%s16 + $0x8] sm:$0xff]
    %v1768 = vld [vmem:[%s16 + $0x10] sm:$0xff]
    %v1769 = vld [vmem:[%s16 + $0x18] sm:$0xff]
    %v1770 = vld [vmem:[%s16 + $0x20] sm:$0xff]
    %v1771 = vld [vmem:[%s16 + $0x28] sm:$0xff]
    %v1772 = vld [vmem:[%s16 + $0x30] sm:$0xff]
    %v1773 = vld [vmem:[%s16 + $0x38] sm:$0xff]
    %v1774 = vld [vmem:[%s17] sm:$0x1]
    %v1776 = vlaneseq
    %v1777 = vshrl.u32 %v1776, 7
    %v1778 = vsub.s32 0, %v1777
    %v1779 = vrot.slane %v1774, %v1778
    %v1782 = vsel %vm182, %v1764, 0
    %v1785 = vsel %vm182, %v1765, 0
    %1787 = vmatprep.subr.mxu0 0.0
    %1788 = vmatpush1.msra.mxu0 0.0
    %1789 = vmatprep.subr.mxu0 0.0
    %1790 = vmatpush1.msra.mxu0 0.0
    %1791 = vmatprep.subr.mxu0 0.0
    %1792 = vmatpush1.msra.mxu0 0.0
    %1793 = vmatprep.subr.mxu0 0.0
    %1794 = vmatpush1.msra.mxu0 0.0
    %1795 = vmatprep.subr.mxu0 0.0
    %1796 = vmatpush1.msra.mxu0 0.0
    %1797 = vmatprep.subr.mxu0 0.0
    %1798 = vmatpush1.msra.mxu0 0.0
    %1799 = vmatprep.subr.mxu0 0.0
    %1800 = vmatpush1.msra.mxu0 0.0
    %1801 = vmatprep.subr.mxu0 0.0
    %1802 = vmatpush1.msra.mxu0 0.0
    %1803 = vmatprep.subr.mxu0 0.0
    %1804 = vmatpush1.msra.mxu0 %v1773
    %1805 = vmatprep.subr.mxu0 0.0
    %1806 = vmatpush1.msra.mxu0 %v1772
    %1807 = vmatprep.subr.mxu0 0.0
    %1808 = vmatpush1.msra.mxu0 %v1771
    %1809 = vmatprep.subr.mxu0 0.0
    %1810 = vmatpush1.msra.mxu0 %v1770
    %1811 = vmatprep.subr.mxu0 0.0
    %1812 = vmatpush1.msra.mxu0 %v1769
    %1813 = vmatprep.subr.mxu0 0.0
    %1814 = vmatpush1.msra.mxu0 %v1768
    %1815 = vmatprep.subr.mxu0 0.0
    %1816 = vmatpush1.msra.mxu0 %v1767
    %1817 = vmatprep.subr.mxu0 0.0
    %1818 = vmatpush1.msra.mxu0 %v1766
    %1819 = vmatprep.subr.mxu0 0.0
    %1820 = vmatpush2.msra.mxu0 0.0
    %1821 = vmatprep.subr.mxu0 0.0
    %1822 = vmatpush2.msra.mxu0 0.0
    %1823 = vmatprep.subr.mxu0 0.0
    %1824 = vmatpush2.msra.mxu0 0.0
    %1825 = vmatprep.subr.mxu0 0.0
    %1826 = vmatpush2.msra.mxu0 0.0
    %1827 = vmatprep.subr.mxu0 0.0
    %1828 = vmatpush2.msra.mxu0 0.0
    %1829 = vmatprep.subr.mxu0 0.0
    %1830 = vmatpush2.msra.mxu0 0.0
    %1831 = vmatprep.subr.mxu0 0.0
    %1832 = vmatpush2.msra.mxu0 0.0
    %1833 = vmatprep.subr.mxu0 0.0
    %1834 = vmatpush2.msra.mxu0 0.0
    %1835 = vmatprep.subr.mxu0 0.0
    %1836 = vmatpush2.msra.mxu0 0.0
    %1837 = vmatprep.subr.mxu0 0.0
    %1838 = vmatpush2.msra.mxu0 0.0
    %1839 = vmatprep.subr.mxu0 0.0
    %1840 = vmatpush2.msra.mxu0 0.0
    %1841 = vmatprep.subr.mxu0 0.0
    %1842 = vmatpush2.msra.mxu0 0.0
    %1843 = vmatprep.subr.mxu0 0.0
    %1844 = vmatpush2.msra.mxu0 0.0
    %1845 = vmatprep.subr.mxu0 0.0
    %1846 = vmatpush2.msra.mxu0 0.0
    %1847 = vmatprep.subr.mxu0 0.0
    %1848 = vmatpush2.msra.mxu0 0.0
    %1849 = vmatprep.subr.mxu0 0.0
    %1850 = vmatpush2.msra.mxu0 0.0
    %1851 = vmatprep.mubr.f32.mxu0 0.0
    %1852 = vmatmul.mubr.f32.gmra.mxu0 %v1782
    %v1853 = vpop.f32.mrf.mxu0
    %v1854 = vadd.f32 %v1779, %v1853
    %v1855 = vpop.f32.mrf.mxu0
    %1856 = vmatprep.mubr.f32.mxu0 0.0
    %1857 = vmatmul.mubr.f32.gmra.mxu0 %v1785
    %v1858 = vpop.f32.mrf.mxu0
    %v1859 = vadd.f32 %v1779, %v1858
    %v1860 = vpop.f32.mrf.mxu0
    %1861 = vdwg.mxu0
    %v1862 = vadd.f32 %v1670, %v1854
    %v1863 = vadd.f32 %v1671, %v1859
    %v1864 = vld [vmem:[%s18] sm:$0x1]
    %v1865 = vld [vmem:[%s19] sm:$0x1]
    %v1866 = vsel %vm92, %v1862, 0.0
    %1867 = vadd.xlane.f32.xlu0 %v1866
    %v1868 = vpop.xlane.xlu0 %1867
    %v1869 = vsel %vm92, %v1863, 0.0
    %1870 = vadd.xlane.f32.xlu0 %v1869
    %v1871 = vpop.xlane.xlu0 %1870
    %v1872 = vmul.f32 %v1868, %v1635
    %v1873 = vmul.f32 %v1871, %v1635
    %v1874 = vsub.f32 %v1862, %v1872
    %v1875 = vsub.f32 %v1863, %v1873
    %v1876 = vmul.f32 %v1874, %v1874
    %v1877 = vmul.f32 %v1875, %v1875
    %v1878 = vsel %vm92, %v1876, 0.0
    %1879 = vadd.xlane.f32.xlu0 %v1878
    %v1880 = vpop.xlane.xlu0 %1879
    %v1881 = vsel %vm92, %v1877, 0.0
    %1882 = vadd.xlane.f32.xlu0 %v1881
    %v1883 = vpop.xlane.xlu0 %1882
    %v1884 = vmul.f32 %v1880, %v1635
    %v1885 = vmul.f32 %v1883, %v1635
    %v1886 = vadd.f32 %v1884, 1e-05
    %v1887 = vadd.f32 %v1885, 1e-05
    %v1888 = vrsqrt.pop %v1886
    %v1889 = vrsqrt.pop %v1887
    %v1890 = vmul.f32 %v1874, %v1888
    %v1891 = vmul.f32 %v1875, %v1889
    %v1893 = vlaneseq
    %v1894 = vshrl.u32 %v1893, 7
    %v1895 = vsub.s32 0, %v1894
    %v1896 = vrot.slane %v1864, %v1895
    %v1898 = vmul.f32 %v1890, %v1896
    %v1899 = vmul.f32 %v1891, %v1896
    %v1901 = vlaneseq
    %v1902 = vshrl.u32 %v1901, 7
    %v1903 = vsub.s32 0, %v1902
    %v1904 = vrot.slane %v1865, %v1903
    %v1906 = vadd.f32 %v1898, %v1904
    %v1907 = vadd.f32 %v1899, %v1904
    %v1908 = vsel %vm92, %v1906, -inf
    %v1909 = vrot.slane %v1908, 4
    %v1910 = vmax.f32 %v1908, %v1909
    %v1911 = vrot.slane %v1910, 2
    %v1912 = vmax.f32 %v1910, %v1911
    %v1913 = vrot.slane %v1912, 1
    %v1914 = vmax.f32 %v1912, %v1913
    %v1915 = vsel %vm92, %v1907, -inf
    %v1916 = vrot.slane %v1915, 4
    %v1917 = vmax.f32 %v1915, %v1916
    %v1918 = vrot.slane %v1917, 2
    %v1919 = vmax.f32 %v1917, %v1918
    %v1920 = vrot.slane %v1919, 1
    %v1921 = vmax.f32 %v1919, %v1920
    %vm1922 = vcmask 1040384
    %v1923 = vsel %vm1922, %v1914, %v1921
    %v1924 = vld [vmem:[%s20] sm:$0xff]
    %v1925 = vld [vmem:[%s20 + $0x8] sm:$0xff]
    %v1926 = vld [vmem:[%s20 + $0x10] sm:$0xff]
    %v1927 = vld [vmem:[%s20 + $0x18] sm:$0xff]
    %v1928 = vld [vmem:[%s20 + $0x20] sm:$0xff]
    %v1929 = vld [vmem:[%s20 + $0x28] sm:$0xff]
    %v1930 = vld [vmem:[%s20 + $0x30] sm:$0xff]
    %v1931 = vld [vmem:[%s20 + $0x38] sm:$0xff]
    %v1933 = vsel %vm92, %v1923, 0
    %1935 = vmatprep.subr.mxu0 0.0
    %1936 = vmatpush1.msra.mxu0 0.0
    %1937 = vmatprep.subr.mxu0 0.0
    %1938 = vmatpush1.msra.mxu0 0.0
    %1939 = vmatprep.subr.mxu0 0.0
    %1940 = vmatpush1.msra.mxu0 0.0
    %1941 = vmatprep.subr.mxu0 0.0
    %1942 = vmatpush1.msra.mxu0 0.0
    %1943 = vmatprep.subr.mxu0 0.0
    %1944 = vmatpush1.msra.mxu0 0.0
    %1945 = vmatprep.subr.mxu0 0.0
    %1946 = vmatpush1.msra.mxu0 0.0
    %1947 = vmatprep.subr.mxu0 0.0
    %1948 = vmatpush1.msra.mxu0 0.0
    %1949 = vmatprep.subr.mxu0 0.0
    %1950 = vmatpush1.msra.mxu0 0.0
    %1951 = vmatprep.subr.mxu0 0.0
    %1952 = vmatpush1.msra.mxu0 0.0
    %1953 = vmatprep.subr.mxu0 0.0
    %1954 = vmatpush1.msra.mxu0 0.0
    %1955 = vmatprep.subr.mxu0 0.0
    %1956 = vmatpush1.msra.mxu0 0.0
    %1957 = vmatprep.subr.mxu0 0.0
    %1958 = vmatpush1.msra.mxu0 0.0
    %1959 = vmatprep.subr.mxu0 0.0
    %1960 = vmatpush1.msra.mxu0 %v1931
    %1961 = vmatprep.subr.mxu0 0.0
    %1962 = vmatpush1.msra.mxu0 %v1930
    %1963 = vmatprep.subr.mxu0 0.0
    %1964 = vmatpush1.msra.mxu0 %v1929
    %1965 = vmatprep.subr.mxu0 0.0
    %1966 = vmatpush1.msra.mxu0 %v1928
    %1967 = vmatprep.subr.mxu0 0.0
    %1968 = vmatpush2.msra.mxu0 0.0
    %1969 = vmatprep.subr.mxu0 0.0
    %1970 = vmatpush2.msra.mxu0 0.0
    %1971 = vmatprep.subr.mxu0 0.0
    %1972 = vmatpush2.msra.mxu0 0.0
    %1973 = vmatprep.subr.mxu0 0.0
    %1974 = vmatpush2.msra.mxu0 0.0
    %1975 = vmatprep.subr.mxu0 0.0
    %1976 = vmatpush2.msra.mxu0 0.0
    %1977 = vmatprep.subr.mxu0 0.0
    %1978 = vmatpush2.msra.mxu0 0.0
    %1979 = vmatprep.subr.mxu0 0.0
    %1980 = vmatpush2.msra.mxu0 0.0
    %1981 = vmatprep.subr.mxu0 0.0
    %1982 = vmatpush2.msra.mxu0 0.0
    %1983 = vmatprep.subr.mxu0 0.0
    %1984 = vmatpush2.msra.mxu0 0.0
    %1985 = vmatprep.subr.mxu0 0.0
    %1986 = vmatpush2.msra.mxu0 0.0
    %1987 = vmatprep.subr.mxu0 0.0
    %1988 = vmatpush2.msra.mxu0 0.0
    %1989 = vmatprep.subr.mxu0 0.0
    %1990 = vmatpush2.msra.mxu0 0.0
    %1991 = vmatprep.subr.mxu0 0.0
    %1992 = vmatpush2.msra.mxu0 0.0
    %1993 = vmatprep.subr.mxu0 0.0
    %1994 = vmatpush2.msra.mxu0 0.0
    %1995 = vmatprep.subr.mxu0 0.0
    %1996 = vmatpush2.msra.mxu0 0.0
    %1997 = vmatprep.subr.mxu0 0.0
    %1998 = vmatpush2.msra.mxu0 0.0
    %1999 = vmatprep.mubr.f32.mxu0 0.0
    %2000 = vmatmul.mubr.f32.gmra.mxu0 %v1933
    %v2001 = vpop.f32.mrf.mxu0
    %v2002 = vadd.f32 0.0, %v2001
    %v2003 = vpop.f32.mrf.mxu0
    %2004 = vdwg.mxu0
    %v2005 = vld [vmem:[%s21] sm:$0x1]
    %v2006 = vld [vmem:[%s22] sm:$0xff]
    %v2007 = vld [vmem:[%s22 + $0x8] sm:$0xff]
    %v2008 = vld [vmem:[%s22 + $0x10] sm:$0xff]
    %v2009 = vld [vmem:[%s22 + $0x18] sm:$0xff]
    %v2010 = vld [vmem:[#allocation2] sm:$0x1]
    %v2012 = vsel %vm265, %v562, 0
    %2014 = vmatprep.subr.mxu0 0.0
    %2015 = vmatpush1.msra.mxu0 0.0
    %2016 = vmatprep.subr.mxu0 0.0
    %2017 = vmatpush1.msra.mxu0 0.0
    %2018 = vmatprep.subr.mxu0 0.0
    %2019 = vmatpush1.msra.mxu0 0.0
    %2020 = vmatprep.subr.mxu0 0.0
    %2021 = vmatpush1.msra.mxu0 0.0
    %2022 = vmatprep.subr.mxu0 0.0
    %2023 = vmatpush1.msra.mxu0 0.0
    %2024 = vmatprep.subr.mxu0 0.0
    %2025 = vmatpush1.msra.mxu0 0.0
    %2026 = vmatprep.subr.mxu0 0.0
    %2027 = vmatpush1.msra.mxu0 0.0
    %2028 = vmatprep.subr.mxu0 0.0
    %2029 = vmatpush1.msra.mxu0 0.0
    %2030 = vmatprep.subr.mxu0 0.0
    %2031 = vmatpush1.msra.mxu0 0.0
    %2032 = vmatprep.subr.mxu0 0.0
    %2033 = vmatpush1.msra.mxu0 0.0
    %2034 = vmatprep.subr.mxu0 0.0
    %2035 = vmatpush1.msra.mxu0 0.0
    %2036 = vmatprep.subr.mxu0 0.0
    %2037 = vmatpush1.msra.mxu0 0.0
    %2038 = vmatprep.subr.mxu0 0.0
    %2039 = vmatpush1.msra.mxu0 0.0
    %2040 = vmatprep.subr.mxu0 0.0
    %2041 = vmatpush1.msra.mxu0 0.0
    %2042 = vmatprep.subr.mxu0 0.0
    %2043 = vmatpush1.msra.mxu0 %v1927
    %2044 = vmatprep.subr.mxu0 0.0
    %2045 = vmatpush1.msra.mxu0 %v1926
    %2046 = vmatprep.subr.mxu0 0.0
    %2047 = vmatpush2.msra.mxu0 0.0
    %2048 = vmatprep.subr.mxu0 0.0
    %2049 = vmatpush2.msra.mxu0 0.0
    %2050 = vmatprep.subr.mxu0 0.0
    %2051 = vmatpush2.msra.mxu0 0.0
    %2052 = vmatprep.subr.mxu0 0.0
    %2053 = vmatpush2.msra.mxu0 0.0
    %2054 = vmatprep.subr.mxu0 0.0
    %2055 = vmatpush2.msra.mxu0 0.0
    %2056 = vmatprep.subr.mxu0 0.0
    %2057 = vmatpush2.msra.mxu0 0.0
    %2058 = vmatprep.subr.mxu0 0.0
    %2059 = vmatpush2.msra.mxu0 0.0
    %2060 = vmatprep.subr.mxu0 0.0
    %2061 = vmatpush2.msra.mxu0 0.0
    %2062 = vmatprep.subr.mxu0 0.0
    %2063 = vmatpush2.msra.mxu0 0.0
    %2064 = vmatprep.subr.mxu0 0.0
    %2065 = vmatpush2.msra.mxu0 0.0
    %2066 = vmatprep.subr.mxu0 0.0
    %2067 = vmatpush2.msra.mxu0 0.0
    %2068 = vmatprep.subr.mxu0 0.0
    %2069 = vmatpush2.msra.mxu0 0.0
    %2070 = vmatprep.subr.mxu0 0.0
    %2071 = vmatpush2.msra.mxu0 0.0
    %2072 = vmatprep.subr.mxu0 0.0
    %2073 = vmatpush2.msra.mxu0 0.0
    %2074 = vmatprep.subr.mxu0 0.0
    %2075 = vmatpush2.msra.mxu0 0.0
    %2076 = vmatprep.subr.mxu0 0.0
    %2077 = vmatpush2.msra.mxu0 0.0
    %2078 = vmatprep.mubr.f32.mxu0 0.0
    %2079 = vmatmul.mubr.f32.gmra.mxu0 %v2012
    %v2080 = vpop.f32.mrf.mxu0
    %v2081 = vadd.f32 0.0, %v2080
    %v2082 = vpop.f32.mrf.mxu0
    %2083 = vdwg.mxu0
    %2084 = vmatprep.subr.mxu0 0.0
    %2085 = vmatpush1.msra.mxu0 0.0
    %2086 = vmatprep.subr.mxu0 0.0
    %2087 = vmatpush1.msra.mxu0 0.0
    %2088 = vmatprep.subr.mxu0 0.0
    %2089 = vmatpush1.msra.mxu0 0.0
    %2090 = vmatprep.subr.mxu0 0.0
    %2091 = vmatpush1.msra.mxu0 0.0
    %2092 = vmatprep.subr.mxu0 0.0
    %2093 = vmatpush1.msra.mxu0 0.0
    %2094 = vmatprep.subr.mxu0 0.0
    %2095 = vmatpush1.msra.mxu0 0.0
    %2096 = vmatprep.subr.mxu0 0.0
    %2097 = vmatpush1.msra.mxu0 0.0
    %2098 = vmatprep.subr.mxu0 0.0
    %2099 = vmatpush1.msra.mxu0 0.0
    %2100 = vmatprep.subr.mxu0 0.0
    %2101 = vmatpush1.msra.mxu0 0.0
    %2102 = vmatprep.subr.mxu0 0.0
    %2103 = vmatpush1.msra.mxu0 0.0
    %2104 = vmatprep.subr.mxu0 0.0
    %2105 = vmatpush1.msra.mxu0 0.0
    %2106 = vmatprep.subr.mxu0 0.0
    %2107 = vmatpush1.msra.mxu0 0.0
    %2108 = vmatprep.subr.mxu0 0.0
    %2109 = vmatpush1.msra.mxu0 0.0
    %2110 = vmatprep.subr.mxu0 0.0
    %2111 = vmatpush1.msra.mxu0 0.0
    %2112 = vmatprep.subr.mxu0 0.0
    %2113 = vmatpush1.msra.mxu0 %v1925
    %2114 = vmatprep.subr.mxu0 0.0
    %2115 = vmatpush1.msra.mxu0 %v1924
    %2116 = vmatprep.subr.mxu0 0.0
    %2117 = vmatpush2.msra.mxu0 0.0
    %2118 = vmatprep.subr.mxu0 0.0
    %2119 = vmatpush2.msra.mxu0 0.0
    %2120 = vmatprep.subr.mxu0 0.0
    %2121 = vmatpush2.msra.mxu0 0.0
    %2122 = vmatprep.subr.mxu0 0.0
    %2123 = vmatpush2.msra.mxu0 0.0
    %2124 = vmatprep.subr.mxu0 0.0
    %2125 = vmatpush2.msra.mxu0 0.0
    %2126 = vmatprep.subr.mxu0 0.0
    %2127 = vmatpush2.msra.mxu0 0.0
    %2128 = vmatprep.subr.mxu0 0.0
    %2129 = vmatpush2.msra.mxu0 0.0
    %2130 = vmatprep.subr.mxu0 0.0
    %2131 = vmatpush2.msra.mxu0 0.0
    %2132 = vmatprep.subr.mxu0 0.0
    %2133 = vmatpush2.msra.mxu0 0.0
    %2134 = vmatprep.subr.mxu0 0.0
    %2135 = vmatpush2.msra.mxu0 0.0
    %2136 = vmatprep.subr.mxu0 0.0
    %2137 = vmatpush2.msra.mxu0 0.0
    %2138 = vmatprep.subr.mxu0 0.0
    %2139 = vmatpush2.msra.mxu0 0.0
    %2140 = vmatprep.subr.mxu0 0.0
    %2141 = vmatpush2.msra.mxu0 0.0
    %2142 = vmatprep.subr.mxu0 0.0
    %2143 = vmatpush2.msra.mxu0 0.0
    %2144 = vmatprep.subr.mxu0 0.0
    %2145 = vmatpush2.msra.mxu0 0.0
    %2146 = vmatprep.subr.mxu0 0.0
    %2147 = vmatpush2.msra.mxu0 0.0
    %2148 = vmatprep.mubr.f32.mxu0 0.0
    %2149 = vmatmul.mubr.f32.gmra.mxu0 %v267
    %v2150 = vpop.f32.mrf.mxu0
    %v2151 = vadd.f32 %v2081, %v2150
    %v2152 = vpop.f32.mrf.mxu0
    %2153 = vdwg.mxu0
    %v2154 = vadd.f32 %v2151, %v2002
    %v2156 = vlaneseq
    %v2157 = vshrl.u32 %v2156, 7
    %v2158 = vsub.s32 0, %v2157
    %v2159 = vrot.slane %v2005, %v2158
    %v2161 = vadd.f32 %v2154, %v2159
    %v2162 = vmax.f32 %v2161, 0.0
    %v2164 = vlaneseq
    %v2165 = vshrl.u32 %v2164, 7
    %v2166 = vsub.s32 0, %v2165
    %v2167 = vrot.slane %v2010, %v2166
    %v2170 = vsel %vm92, %v2162, 0
    %2172 = vmatprep.subr.mxu0 0.0
    %2173 = vmatpush1.msra.mxu0 0.0
    %2174 = vmatprep.subr.mxu0 0.0
    %2175 = vmatpush1.msra.mxu0 0.0
    %2176 = vmatprep.subr.mxu0 0.0
    %2177 = vmatpush1.msra.mxu0 0.0
    %2178 = vmatprep.subr.mxu0 0.0
    %2179 = vmatpush1.msra.mxu0 0.0
    %2180 = vmatprep.subr.mxu0 0.0
    %2181 = vmatpush1.msra.mxu0 0.0
    %2182 = vmatprep.subr.mxu0 0.0
    %2183 = vmatpush1.msra.mxu0 0.0
    %2184 = vmatprep.subr.mxu0 0.0
    %2185 = vmatpush1.msra.mxu0 0.0
    %2186 = vmatprep.subr.mxu0 0.0
    %2187 = vmatpush1.msra.mxu0 0.0
    %2188 = vmatprep.subr.mxu0 0.0
    %2189 = vmatpush1.msra.mxu0 0.0
    %2190 = vmatprep.subr.mxu0 0.0
    %2191 = vmatpush1.msra.mxu0 0.0
    %2192 = vmatprep.subr.mxu0 0.0
    %2193 = vmatpush1.msra.mxu0 0.0
    %2194 = vmatprep.subr.mxu0 0.0
    %2195 = vmatpush1.msra.mxu0 0.0
    %2196 = vmatprep.subr.mxu0 0.0
    %2197 = vmatpush1.msra.mxu0 %v2009
    %2198 = vmatprep.subr.mxu0 0.0
    %2199 = vmatpush1.msra.mxu0 %v2008
    %2200 = vmatprep.subr.mxu0 0.0
    %2201 = vmatpush1.msra.mxu0 %v2007
    %2202 = vmatprep.subr.mxu0 0.0
    %2203 = vmatpush1.msra.mxu0 %v2006
    %2204 = vmatprep.subr.mxu0 0.0
    %2205 = vmatpush2.msra.mxu0 0.0
    %2206 = vmatprep.subr.mxu0 0.0
    %2207 = vmatpush2.msra.mxu0 0.0
    %2208 = vmatprep.subr.mxu0 0.0
    %2209 = vmatpush2.msra.mxu0 0.0
    %2210 = vmatprep.subr.mxu0 0.0
    %2211 = vmatpush2.msra.mxu0 0.0
    %2212 = vmatprep.subr.mxu0 0.0
    %2213 = vmatpush2.msra.mxu0 0.0
    %2214 = vmatprep.subr.mxu0 0.0
    %2215 = vmatpush2.msra.mxu0 0.0
    %2216 = vmatprep.subr.mxu0 0.0
    %2217 = vmatpush2.msra.mxu0 0.0
    %2218 = vmatprep.subr.mxu0 0.0
    %2219 = vmatpush2.msra.mxu0 0.0
    %2220 = vmatprep.subr.mxu0 0.0
    %2221 = vmatpush2.msra.mxu0 0.0
    %2222 = vmatprep.subr.mxu0 0.0
    %2223 = vmatpush2.msra.mxu0 0.0
    %2224 = vmatprep.subr.mxu0 0.0
    %2225 = vmatpush2.msra.mxu0 0.0
    %2226 = vmatprep.subr.mxu0 0.0
    %2227 = vmatpush2.msra.mxu0 0.0
    %2228 = vmatprep.subr.mxu0 0.0
    %2229 = vmatpush2.msra.mxu0 0.0
    %2230 = vmatprep.subr.mxu0 0.0
    %2231 = vmatpush2.msra.mxu0 0.0
    %2232 = vmatprep.subr.mxu0 0.0
    %2233 = vmatpush2.msra.mxu0 0.0
    %2234 = vmatprep.subr.mxu0 0.0
    %2235 = vmatpush2.msra.mxu0 0.0
    %2236 = vmatprep.mubr.f32.mxu0 0.0
    %2237 = vmatmul.mubr.f32.gmra.mxu0 %v2170
    %v2238 = vpop.f32.mrf.mxu0
    %v2239 = vadd.f32 %v2167, %v2238
    %v2240 = vpop.f32.mrf.mxu0
    %2241 = vdwg.mxu0
    %vm2242 = vcmask 1024
    %2243 = vst.msk [vmem:[#allocation3] sm:$0x3] %vm2242, %v2239
    %v2245 = vsel %vm265, %v339, 0
    %2247 = vmatprep.subr.mxu0 0.0
    %2248 = vmatpush1.msra.mxu0 0.0
    %2249 = vmatprep.subr.mxu0 0.0
    %2250 = vmatpush1.msra.mxu0 0.0
    %2251 = vmatprep.subr.mxu0 0.0
    %2252 = vmatpush1.msra.mxu0 0.0
    %2253 = vmatprep.subr.mxu0 0.0
    %2254 = vmatpush1.msra.mxu0 0.0
    %2255 = vmatprep.subr.mxu0 0.0
    %2256 = vmatpush1.msra.mxu0 0.0
    %2257 = vmatprep.subr.mxu0 0.0
    %2258 = vmatpush1.msra.mxu0 0.0
    %2259 = vmatprep.subr.mxu0 0.0
    %2260 = vmatpush1.msra.mxu0 0.0
    %2261 = vmatprep.subr.mxu0 0.0
    %2262 = vmatpush1.msra.mxu0 0.0
    %2263 = vmatprep.subr.mxu0 0.0
    %2264 = vmatpush1.msra.mxu0 0.0
    %2265 = vmatprep.subr.mxu0 0.0
    %2266 = vmatpush1.msra.mxu0 0.0
    %2267 = vmatprep.subr.mxu0 0.0
    %2268 = vmatpush1.msra.mxu0 0.0
    %2269 = vmatprep.subr.mxu0 0.0
    %2270 = vmatpush1.msra.mxu0 0.0
    %2271 = vmatprep.subr.mxu0 0.0
    %2272 = vmatpush1.msra.mxu0 0.0
    %2273 = vmatprep.subr.mxu0 0.0
    %2274 = vmatpush1.msra.mxu0 0.0
    %2275 = vmatprep.subr.mxu0 0.0
    %2276 = vmatpush1.msra.mxu0 %v1927
    %2277 = vmatprep.subr.mxu0 0.0
    %2278 = vmatpush1.msra.mxu0 %v1926
    %2279 = vmatprep.subr.mxu0 0.0
    %2280 = vmatpush2.msra.mxu0 0.0
    %2281 = vmatprep.subr.mxu0 0.0
    %2282 = vmatpush2.msra.mxu0 0.0
    %2283 = vmatprep.subr.mxu0 0.0
    %2284 = vmatpush2.msra.mxu0 0.0
    %2285 = vmatprep.subr.mxu0 0.0
    %2286 = vmatpush2.msra.mxu0 0.0
    %2287 = vmatprep.subr.mxu0 0.0
    %2288 = vmatpush2.msra.mxu0 0.0
    %2289 = vmatprep.subr.mxu0 0.0
    %2290 = vmatpush2.msra.mxu0 0.0
    %2291 = vmatprep.subr.mxu0 0.0
    %2292 = vmatpush2.msra.mxu0 0.0
    %2293 = vmatprep.subr.mxu0 0.0
    %2294 = vmatpush2.msra.mxu0 0.0
    %2295 = vmatprep.subr.mxu0 0.0
    %2296 = vmatpush2.msra.mxu0 0.0
    %2297 = vmatprep.subr.mxu0 0.0
    %2298 = vmatpush2.msra.mxu0 0.0
    %2299 = vmatprep.subr.mxu0 0.0
    %2300 = vmatpush2.msra.mxu0 0.0
    %2301 = vmatprep.subr.mxu0 0.0
    %2302 = vmatpush2.msra.mxu0 0.0
    %2303 = vmatprep.subr.mxu0 0.0
    %2304 = vmatpush2.msra.mxu0 0.0
    %2305 = vmatprep.subr.mxu0 0.0
    %2306 = vmatpush2.msra.mxu0 0.0
    %2307 = vmatprep.subr.mxu0 0.0
    %2308 = vmatpush2.msra.mxu0 0.0
    %2309 = vmatprep.subr.mxu0 0.0
    %2310 = vmatpush2.msra.mxu0 0.0
    %2311 = vmatprep.mubr.f32.mxu0 0.0
    %2312 = vmatmul.mubr.f32.gmra.mxu0 %v2245
    %v2313 = vpop.f32.mrf.mxu0
    %v2314 = vadd.f32 0.0, %v2313
    %v2315 = vpop.f32.mrf.mxu0
    %2316 = vdwg.mxu0
    %2317 = vmatprep.subr.mxu0 0.0
    %2318 = vmatpush1.msra.mxu0 0.0
    %2319 = vmatprep.subr.mxu0 0.0
    %2320 = vmatpush1.msra.mxu0 0.0
    %2321 = vmatprep.subr.mxu0 0.0
    %2322 = vmatpush1.msra.mxu0 0.0
    %2323 = vmatprep.subr.mxu0 0.0
    %2324 = vmatpush1.msra.mxu0 0.0
    %2325 = vmatprep.subr.mxu0 0.0
    %2326 = vmatpush1.msra.mxu0 0.0
    %2327 = vmatprep.subr.mxu0 0.0
    %2328 = vmatpush1.msra.mxu0 0.0
    %2329 = vmatprep.subr.mxu0 0.0
    %2330 = vmatpush1.msra.mxu0 0.0
    %2331 = vmatprep.subr.mxu0 0.0
    %2332 = vmatpush1.msra.mxu0 0.0
    %2333 = vmatprep.subr.mxu0 0.0
    %2334 = vmatpush1.msra.mxu0 0.0
    %2335 = vmatprep.subr.mxu0 0.0
    %2336 = vmatpush1.msra.mxu0 0.0
    %2337 = vmatprep.subr.mxu0 0.0
    %2338 = vmatpush1.msra.mxu0 0.0
    %2339 = vmatprep.subr.mxu0 0.0
    %2340 = vmatpush1.msra.mxu0 0.0
    %2341 = vmatprep.subr.mxu0 0.0
    %2342 = vmatpush1.msra.mxu0 0.0
    %2343 = vmatprep.subr.mxu0 0.0
    %2344 = vmatpush1.msra.mxu0 0.0
    %2345 = vmatprep.subr.mxu0 0.0
    %2346 = vmatpush1.msra.mxu0 %v1925
    %2347 = vmatprep.subr.mxu0 0.0
    %2348 = vmatpush1.msra.mxu0 %v1924
    %2349 = vmatprep.subr.mxu0 0.0
    %2350 = vmatpush2.msra.mxu0 0.0
    %2351 = vmatprep.subr.mxu0 0.0
    %2352 = vmatpush2.msra.mxu0 0.0
    %2353 = vmatprep.subr.mxu0 0.0
    %2354 = vmatpush2.msra.mxu0 0.0
    %2355 = vmatprep.subr.mxu0 0.0
    %2356 = vmatpush2.msra.mxu0 0.0
    %2357 = vmatprep.subr.mxu0 0.0
    %2358 = vmatpush2.msra.mxu0 0.0
    %2359 = vmatprep.subr.mxu0 0.0
    %2360 = vmatpush2.msra.mxu0 0.0
    %2361 = vmatprep.subr.mxu0 0.0
    %2362 = vmatpush2.msra.mxu0 0.0
    %2363 = vmatprep.subr.mxu0 0.0
    %2364 = vmatpush2.msra.mxu0 0.0
    %2365 = vmatprep.subr.mxu0 0.0
    %2366 = vmatpush2.msra.mxu0 0.0
    %2367 = vmatprep.subr.mxu0 0.0
    %2368 = vmatpush2.msra.mxu0 0.0
    %2369 = vmatprep.subr.mxu0 0.0
    %2370 = vmatpush2.msra.mxu0 0.0
    %2371 = vmatprep.subr.mxu0 0.0
    %2372 = vmatpush2.msra.mxu0 0.0
    %2373 = vmatprep.subr.mxu0 0.0
    %2374 = vmatpush2.msra.mxu0 0.0
    %2375 = vmatprep.subr.mxu0 0.0
    %2376 = vmatpush2.msra.mxu0 0.0
    %2377 = vmatprep.subr.mxu0 0.0
    %2378 = vmatpush2.msra.mxu0 0.0
    %2379 = vmatprep.subr.mxu0 0.0
    %2380 = vmatpush2.msra.mxu0 0.0
    %2381 = vmatprep.mubr.f32.mxu0 0.0
    %2382 = vmatmul.mubr.f32.gmra.mxu0 %v490
    %v2383 = vpop.f32.mrf.mxu0
    %v2384 = vadd.f32 %v2314, %v2383
    %v2385 = vpop.f32.mrf.mxu0
    %2386 = vdwg.mxu0
    %v2387 = vadd.f32 %v2384, %v2002
    %v2388 = vadd.f32 %v2387, %v2159
    %v2389 = vmax.f32 %v2388, 0.0
    %v2391 = vsel %vm92, %v2389, 0
    %2393 = vmatprep.subr.mxu0 0.0
    %2394 = vmatpush1.msra.mxu0 0.0
    %2395 = vmatprep.subr.mxu0 0.0
    %2396 = vmatpush1.msra.mxu0 0.0
    %2397 = vmatprep.subr.mxu0 0.0
    %2398 = vmatpush1.msra.mxu0 0.0
    %2399 = vmatprep.subr.mxu0 0.0
    %2400 = vmatpush1.msra.mxu0 0.0
    %2401 = vmatprep.subr.mxu0 0.0
    %2402 = vmatpush1.msra.mxu0 0.0
    %2403 = vmatprep.subr.mxu0 0.0
    %2404 = vmatpush1.msra.mxu0 0.0
    %2405 = vmatprep.subr.mxu0 0.0
    %2406 = vmatpush1.msra.mxu0 0.0
    %2407 = vmatprep.subr.mxu0 0.0
    %2408 = vmatpush1.msra.mxu0 0.0
    %2409 = vmatprep.subr.mxu0 0.0
    %2410 = vmatpush1.msra.mxu0 0.0
    %2411 = vmatprep.subr.mxu0 0.0
    %2412 = vmatpush1.msra.mxu0 0.0
    %2413 = vmatprep.subr.mxu0 0.0
    %2414 = vmatpush1.msra.mxu0 0.0
    %2415 = vmatprep.subr.mxu0 0.0
    %2416 = vmatpush1.msra.mxu0 0.0
    %2417 = vmatprep.subr.mxu0 0.0
    %2418 = vmatpush1.msra.mxu0 %v2009
    %2419 = vmatprep.subr.mxu0 0.0
    %2420 = vmatpush1.msra.mxu0 %v2008
    %2421 = vmatprep.subr.mxu0 0.0
    %2422 = vmatpush1.msra.mxu0 %v2007
    %2423 = vmatprep.subr.mxu0 0.0
    %2424 = vmatpush1.msra.mxu0 %v2006
    %2425 = vmatprep.subr.mxu0 0.0
    %2426 = vmatpush2.msra.mxu0 0.0
    %2427 = vmatprep.subr.mxu0 0.0
    %2428 = vmatpush2.msra.mxu0 0.0
    %2429 = vmatprep.subr.mxu0 0.0
    %2430 = vmatpush2.msra.mxu0 0.0
    %2431 = vmatprep.subr.mxu0 0.0
    %2432 = vmatpush2.msra.mxu0 0.0
    %2433 = vmatprep.subr.mxu0 0.0
    %2434 = vmatpush2.msra.mxu0 0.0
    %2435 = vmatprep.subr.mxu0 0.0
    %2436 = vmatpush2.msra.mxu0 0.0
    %2437 = vmatprep.subr.mxu0 0.0
    %2438 = vmatpush2.msra.mxu0 0.0
    %2439 = vmatprep.subr.mxu0 0.0
    %2440 = vmatpush2.msra.mxu0 0.0
    %2441 = vmatprep.subr.mxu0 0.0
    %2442 = vmatpush2.msra.mxu0 0.0
    %2443 = vmatprep.subr.mxu0 0.0
    %2444 = vmatpush2.msra.mxu0 0.0
    %2445 = vmatprep.subr.mxu0 0.0
    %2446 = vmatpush2.msra.mxu0 0.0
    %2447 = vmatprep.subr.mxu0 0.0
    %2448 = vmatpush2.msra.mxu0 0.0
    %2449 = vmatprep.subr.mxu0 0.0
    %2450 = vmatpush2.msra.mxu0 0.0
    %2451 = vmatprep.subr.mxu0 0.0
    %2452 = vmatpush2.msra.mxu0 0.0
    %2453 = vmatprep.subr.mxu0 0.0
    %2454 = vmatpush2.msra.mxu0 0.0
    %2455 = vmatprep.subr.mxu0 0.0
    %2456 = vmatpush2.msra.mxu0 0.0
    %2457 = vmatprep.mubr.f32.mxu0 0.0
    %2458 = vmatmul.mubr.f32.gmra.mxu0 %v2391
    %v2459 = vpop.f32.mrf.mxu0
    %v2460 = vadd.f32 %v2167, %v2459
    %v2461 = vpop.f32.mrf.mxu0
    %2462 = vdwg.mxu0
    %2464 = vrot.lane.b32.xlu0 %v2460, 1
    %v2465 = vpop.permute.xlu0 %2464
    %vm2467 = vcmask 9224
    %2468 = vst.msk [vmem:[#allocation3] sm:$0x3] %vm2467, %v2465
    // Predicated region
    $region98: #{context_aware_listener_forward.1} parent=1 // pred_check
      _
    $region99: #{context_aware_listener_forward.1} parent=1 // pred_check_branch
      %2470 = sbr.rel (0) target = $region101
    $region100: #{context_aware_listener_forward.1} parent=1 // pred_region
      %s2472 = ssub.s32 32, 32
      %2473 = vsyncadd [#allocation4], %s2472
      %s2475 = sshll.u32 [#allocation3], 4
      %s2476 = int_to_ptr.vmem [resolvable:$true] %s2475
      %2478 = dma.vmem_to_hbm [thread:$0]  %s2476, 32, %s24, [#allocation4]
    $region101: #{context_aware_listener_forward.1} parent=1 // pred_fallthru
      _
    // Predicated region
    $region102: #{context_aware_listener_forward.1} parent=1 // pred_check
      _
    $region103: #{context_aware_listener_forward.1} parent=1 // pred_check_branch
      %2480 = sbr.rel (0) target = $region105
    $region104: #{context_aware_listener_forward.1} parent=1 // pred_region
      %2481 = dma.done [#allocation4], 32
    $region105: #{context_aware_listener_forward.1} parent=1 // pred_fallthru
      _
    %2482 = vsyncpa [#allocation4], 1

</llo_original>
